<compile_context>
chip_gen: v7x
topology: tpu7x:2x2x1
jax: 0.10.0
libtpu: 0.0.40
codegen_flags: <defaults>
</compile_context>

<pallas_src>
import functools

import jax
import jax.numpy as jnp
from jax.experimental import pallas as pl
from jax.experimental.pallas import tpu as pltpu

# ---- small synthetic CLIP vision config ----
IMAGE_SIZE = 16
PATCH = 8
CHANNELS = 3
HIDDEN = 32
HEADS = 4
HEAD_DIM = HIDDEN // HEADS
LAYERS = 3
INTERMEDIATE = 64
LN_EPS = 1e-5
SELECT_LAYER = -2          # args.mm_vision_select_layer
SELECT_FEATURE = "patch"   # drop CLS token
NUM_PATCHES = (IMAGE_SIZE // PATCH) ** 2
SEQ = NUM_PATCHES + 1


# ----------------------- fused tower kernel -----------------------

def _tower_kernel(patches_ref, patch_w_ref, cls_ref, pos_cls_ref, pos_patch_ref,
                  pre_g_ref, pre_b_ref,
                  ln1g_ref, ln1b_ref, wq_ref, bq_ref, wk_ref, bk_ref, wv_ref, bv_ref,
                  wo_ref, bo_ref, ln2g_ref, ln2b_ref, w1_ref, b1_ref, w2_ref, b2_ref,
                  o_ref, x_scr, *, heads, head_dim):
    l = pl.program_id(1)
    n_layers = pl.num_programs(1)

    def ln(v, g, b):
        mu = jnp.mean(v, axis=-1, keepdims=True)
        var = jnp.mean(jnp.square(v - mu), axis=-1, keepdims=True)
        return (v - mu) * jax.lax.rsqrt(var + LN_EPS) * g + b

    # ---- layer 0: patch embedding + position + pre_layernorm into scratch ----
    @pl.when(l == 0)
    def _embed():
        proj = jnp.dot(patches_ref[0], patch_w_ref[...],
                       preferred_element_type=jnp.float32)              # (N, D)
        emb = jnp.concatenate(
            [cls_ref[...] + pos_cls_ref[...], proj + pos_patch_ref[...]],
            axis=0)                                                      # (S, D)
        x_scr[0] = ln(emb, pre_g_ref[...], pre_b_ref[...])

    # ---- encoder layer l (residual stream lives in VMEM scratch) ----
    x = x_scr[0]                                                         # (S, D)
    h = ln(x, ln1g_ref[0], ln1b_ref[0])

    scale = head_dim ** -0.5
    attn = jnp.zeros_like(x)
    for hh in range(heads):                    # static unrolled loop over heads
        qh = (jnp.dot(h, wq_ref[0, hh], preferred_element_type=jnp.float32)
              + bq_ref[0, hh]) * scale                                   # (S, hd)
        kh = jnp.dot(h, wk_ref[0, hh], preferred_element_type=jnp.float32) + bk_ref[0, hh]
        vh = jnp.dot(h, wv_ref[0, hh], preferred_element_type=jnp.float32) + bv_ref[0, hh]
        s = jax.lax.dot_general(qh, kh, (((1,), (1,)), ((), ())),
                                preferred_element_type=jnp.float32)      # (S, S)
        s = s - jnp.max(s, axis=-1, keepdims=True)
        p = jnp.exp(s)
        p = p * pl.reciprocal(jnp.sum(p, axis=-1, keepdims=True), approx=True)
        ctx = jnp.dot(p, vh, preferred_element_type=jnp.float32)         # (S, hd)
        # accumulate through the per-head slice of the output projection
        attn = attn + jnp.dot(ctx, wo_ref[0, hh], preferred_element_type=jnp.float32)
    x = x + attn + bo_ref[0]

    # ---- MLP (CLIP quick_gelu) ----
    h2 = ln(x, ln2g_ref[0], ln2b_ref[0])
    m = jnp.dot(h2, w1_ref[0], preferred_element_type=jnp.float32) + b1_ref[0]
    m = m * jax.nn.sigmoid(1.702 * m)
    m = jnp.dot(m, w2_ref[0], preferred_element_type=jnp.float32) + b2_ref[0]
    x = x + m

    x_scr[0] = x

    @pl.when(l == n_layers - 1)
    def _finalize():
        o_ref[0] = x


# ----------------------- CLIPVisionTower.forward -----------------------

def clip_vision_tower_forward(images, params, text=None):
    """Default (no-compression) path: returns image_features [B, num_patches, D]."""
    del text  # unused in the default path
    B, C, H, W = images.shape
    P = PATCH
    D, Hh, hd, F = HIDDEN, HEADS, HEAD_DIM, INTERMEDIATE
    N = (H // P) * (W // P)
    S = N + 1
    CPP = C * P * P

    # Conv2d(patch_embed, stride=P, no bias) expressed as patch-flatten + matmul.
    x = images.astype(jnp.float32)
    x = x.reshape(B, C, H // P, P, W // P, P)
    patches = x.transpose(0, 2, 4, 1, 3, 5).reshape(B, N, CPP)

    # Only compute the encoder layers hidden_states[SELECT_LAYER] depends on.
    sel_idx = SELECT_LAYER if SELECT_LAYER >= 0 else LAYERS + 1 + SELECT_LAYER
    n_compute = sel_idx                     # hidden_states[sel] = after `sel` layers
    assert 1 <= n_compute <= LAYERS
    layers = params["layers"][:n_compute]

    def stk(f):
        return jnp.stack([lp[f] for lp in layers], axis=0)

    # Stack + pre-reshape weights so the kernel never slices the lane axis.
    wq = stk("wq").reshape(n_compute, D, Hh, hd).transpose(0, 2, 1, 3)   # (L,H,D,hd)
    wk = stk("wk").reshape(n_compute, D, Hh, hd).transpose(0, 2, 1, 3)
    wv = stk("wv").reshape(n_compute, D, Hh, hd).transpose(0, 2, 1, 3)
    wo = stk("wo").reshape(n_compute, Hh, hd, D)                          # (L,H,hd,D)
    bq = stk("bq").reshape(n_compute, 1, Hh, hd).transpose(0, 2, 1, 3)    # (L,H,1,hd)
    bk = stk("bk").reshape(n_compute, 1, Hh, hd).transpose(0, 2, 1, 3)
    bv = stk("bv").reshape(n_compute, 1, Hh, hd).transpose(0, 2, 1, 3)
    bo = stk("bo")                                                        # (L,1,D)
    ln1g, ln1b = stk("ln1_g"), stk("ln1_b")                               # (L,1,D)
    ln2g, ln2b = stk("ln2_g"), stk("ln2_b")
    w1, b1 = stk("w1"), stk("b1")                                         # (L,D,F),(L,1,F)
    w2, b2 = stk("w2"), stk("b2")                                         # (L,F,D),(L,1,D)

    pos_cls = params["pos"][:1]                                           # (1, D)
    pos_patch = params["pos"][1:]                                         # (N, D)

    def _const(shape):
        r = len(shape)
        return pl.BlockSpec(shape, lambda b, l, _r=r: (0,) * _r)

    def _per_layer(shape):
        r = len(shape)
        return pl.BlockSpec((1,) + shape, lambda b, l, _r=r: (l,) + (0,) * _r)

    kernel = functools.partial(_tower_kernel, heads=Hh, head_dim=hd)

    out = pl.pallas_call(
        kernel,
        out_shape=jax.ShapeDtypeStruct((B, S, D), jnp.float32),
        grid=(B, n_compute),
        in_specs=[
            pl.BlockSpec((1, N, CPP), lambda b, l: (b, 0, 0)),   # patches
            _const((CPP, D)),                                    # patch_w
            _const((1, D)),                                      # cls
            _const((1, D)),                                      # pos (CLS row)
            _const((N, D)),                                      # pos (patch rows)
            _const((1, D)), _const((1, D)),                      # pre-LN g,b
            _per_layer((1, D)), _per_layer((1, D)),              # ln1 g,b
            _per_layer((Hh, D, hd)), _per_layer((Hh, 1, hd)),    # wq,bq
            _per_layer((Hh, D, hd)), _per_layer((Hh, 1, hd)),    # wk,bk
            _per_layer((Hh, D, hd)), _per_layer((Hh, 1, hd)),    # wv,bv
            _per_layer((Hh, hd, D)), _per_layer((1, D)),         # wo,bo
            _per_layer((1, D)), _per_layer((1, D)),              # ln2 g,b
            _per_layer((D, F)), _per_layer((1, F)),              # fc1
            _per_layer((F, D)), _per_layer((1, D)),              # fc2
        ],
        out_specs=pl.BlockSpec((1, S, D), lambda b, l: (b, 0, 0)),
        scratch_shapes=[pltpu.VMEM((1, S, D), jnp.float32)],
        compiler_params=pltpu.CompilerParams(
            dimension_semantics=("parallel", "arbitrary")),
    )(patches, params["patch_w"], params["cls"], pos_cls, pos_patch,
      params["pre_ln_g"], params["pre_ln_b"],
      ln1g, ln1b, wq, bq, wk, bk, wv, bv, wo, bo, ln2g, ln2b, w1, b1, w2, b2)

    if SELECT_FEATURE == "patch":
        feats = out[:, 1:]                    # drop CLS token
    elif SELECT_FEATURE == "cls_patch":
        feats = out
    else:
        raise ValueError(f"Unexpected select feature: {SELECT_FEATURE}")
    return feats.astype(images.dtype)


# ----------------------- deterministic parameter init -----------------------

def init_params(key):
    def nrm(k, shape, scale=0.02):
        return scale * jax.random.normal(k, shape, dtype=jnp.float32)

    keys = jax.random.split(key, 3 + LAYERS)
    params = {
        "patch_w": nrm(keys[0], (CHANNELS * PATCH * PATCH, HIDDEN)),
        "cls": nrm(keys[1], (1, HIDDEN)),
        "pos": nrm(keys[2], (SEQ, HIDDEN)),
        "pre_ln_g": jnp.ones((1, HIDDEN), jnp.float32),
        "pre_ln_b": jnp.zeros((1, HIDDEN), jnp.float32),
        "layers": [],
    }
    for i in range(LAYERS):
        lk = jax.random.split(keys[3 + i], 6)
        params["layers"].append({
            "ln1_g": jnp.ones((1, HIDDEN), jnp.float32),
            "ln1_b": jnp.zeros((1, HIDDEN), jnp.float32),
            "wq": nrm(lk[0], (HIDDEN, HIDDEN)), "bq": jnp.zeros((1, HIDDEN), jnp.float32),
            "wk": nrm(lk[1], (HIDDEN, HIDDEN)), "bk": jnp.zeros((1, HIDDEN), jnp.float32),
            "wv": nrm(lk[2], (HIDDEN, HIDDEN)), "bv": jnp.zeros((1, HIDDEN), jnp.float32),
            "wo": nrm(lk[3], (HIDDEN, HIDDEN)), "bo": jnp.zeros((1, HIDDEN), jnp.float32),
            "ln2_g": jnp.ones((1, HIDDEN), jnp.float32),
            "ln2_b": jnp.zeros((1, HIDDEN), jnp.float32),
            "w1": nrm(lk[4], (HIDDEN, INTERMEDIATE)),
            "b1": jnp.zeros((1, INTERMEDIATE), jnp.float32),
            "w2": nrm(lk[5], (INTERMEDIATE, HIDDEN)),
            "b2": jnp.zeros((1, HIDDEN), jnp.float32),
        })
    return params


# ----------------------- pure-JAX reference -----------------------

def _ref_forward(images, params):
    B, C, H, W = images.shape
    P = PATCH
    x = images.reshape(B, C, H // P, P, W // P, P).transpose(0, 2, 4, 1, 3, 5)
    x = x.reshape(B, NUM_PATCHES, C * P * P)
    proj = x @ params["patch_w"]
    cls = jnp.broadcast_to(params["cls"][None], (B, 1, HIDDEN))
    h = jnp.concatenate([cls, proj], axis=1) + params["pos"][None]

    def ln(v, g, b):
        mu = v.mean(-1, keepdims=True)
        var = ((v - mu) ** 2).mean(-1, keepdims=True)
        return (v - mu) / jnp.sqrt(var + LN_EPS) * g + b

    h = ln(h, params["pre_ln_g"], params["pre_ln_b"])
    hs = [h]
    for p in params["layers"]:
        r = h
        t = ln(h, p["ln1_g"], p["ln1_b"])
        q = t @ p["wq"] + p["bq"]
        k = t @ p["wk"] + p["bk"]
        v = t @ p["wv"] + p["bv"]
        qh = q.reshape(B, SEQ, HEADS, HEAD_DIM).transpose(0, 2, 1, 3) * HEAD_DIM ** -0.5
        kh = k.reshape(B, SEQ, HEADS, HEAD_DIM).transpose(0, 2, 1, 3)
        vh = v.reshape(B, SEQ, HEADS, HEAD_DIM).transpose(0, 2, 1, 3)
        s = jnp.einsum("bhqd,bhkd->bhqk", qh, kh)
        a = jax.nn.softmax(s, axis=-1)
        ctx = jnp.einsum("bhqk,bhkd->bhqd", a, vh).transpose(0, 2, 1, 3).reshape(B, SEQ, HIDDEN)
        h = r + (ctx @ p["wo"] + p["bo"])
        r = h
        t = ln(h, p["ln2_g"], p["ln2_b"])
        m = t @ p["w1"] + p["b1"]
        m = m * jax.nn.sigmoid(1.702 * m)
        h = r + (m @ p["w2"] + p["b2"])
        hs.append(h)
    f = hs[SELECT_LAYER]
    return f[:, 1:].astype(images.dtype)


if __name__ == "__main__":
    key = jax.random.PRNGKey(0)
    pkey, ikey = jax.random.split(key)
    params = init_params(pkey)
    images = jax.random.normal(ikey, (2, CHANNELS, IMAGE_SIZE, IMAGE_SIZE), dtype=jnp.float32)

    out = clip_vision_tower_forward(images, params)
    out = jax.block_until_ready(out)

    assert out.shape == (2, NUM_PATCHES, HIDDEN), out.shape
    ref = _ref_forward(images, params)
    max_err = float(jnp.max(jnp.abs(out - ref)))
    assert jnp.allclose(out, ref, atol=2e-2, rtol=2e-2), f"max_err={max_err}"

    print("KERNEL_OK")
</pallas_src>

<mosaic_0001>
module attributes {stable_mosaic.version = 11 : i64} {
  func.func @_tower_kernel(%arg0: i32, %arg1: i32, %arg2: memref<1x4x192xf32, #tpu.memory_space<vmem>>, %arg3: memref<192x32xf32, #tpu.memory_space<vmem>>, %arg4: memref<1x32xf32, #tpu.memory_space<vmem>>, %arg5: memref<1x32xf32, #tpu.memory_space<vmem>>, %arg6: memref<4x32xf32, #tpu.memory_space<vmem>>, %arg7: memref<1x32xf32, #tpu.memory_space<vmem>>, %arg8: memref<1x32xf32, #tpu.memory_space<vmem>>, %arg9: memref<1x1x32xf32, #tpu.memory_space<vmem>>, %arg10: memref<1x1x32xf32, #tpu.memory_space<vmem>>, %arg11: memref<1x4x32x8xf32, #tpu.memory_space<vmem>>, %arg12: memref<1x4x1x8xf32, #tpu.memory_space<vmem>>, %arg13: memref<1x4x32x8xf32, #tpu.memory_space<vmem>>, %arg14: memref<1x4x1x8xf32, #tpu.memory_space<vmem>>, %arg15: memref<1x4x32x8xf32, #tpu.memory_space<vmem>>, %arg16: memref<1x4x1x8xf32, #tpu.memory_space<vmem>>, %arg17: memref<1x4x8x32xf32, #tpu.memory_space<vmem>>, %arg18: memref<1x1x32xf32, #tpu.memory_space<vmem>>, %arg19: memref<1x1x32xf32, #tpu.memory_space<vmem>>, %arg20: memref<1x1x32xf32, #tpu.memory_space<vmem>>, %arg21: memref<1x32x64xf32, #tpu.memory_space<vmem>>, %arg22: memref<1x1x64xf32, #tpu.memory_space<vmem>>, %arg23: memref<1x64x32xf32, #tpu.memory_space<vmem>>, %arg24: memref<1x1x32xf32, #tpu.memory_space<vmem>>, %arg25: memref<1x5x32xf32, #tpu.memory_space<vmem>>, %arg26: memref<1x5x32xf32, #tpu.memory_space<vmem>>) attributes {dimension_semantics = [#tpu.dimension_semantics<parallel>, #tpu.dimension_semantics<arbitrary>], iteration_bounds = array<i64: 2, 2>, scalar_prefetch = 0 : i64, scratch_operands = 1 : i64, tpu.core_type = #tpu.core_type<tc>, window_params = [{transform_indices = @transform_0, window_bounds = array<i64: 1, 4, 192>}, {pipeline_mode = #tpu.pipeline_mode<synchronous>, transform_indices = @transform_1, window_bounds = array<i64: 192, 32>}, {pipeline_mode = #tpu.pipeline_mode<synchronous>, transform_indices = @transform_2, window_bounds = array<i64: 1, 32>}, {pipeline_mode = #tpu.pipeline_mode<synchronous>, transform_indices = @transform_3, window_bounds = array<i64: 1, 32>}, {pipeline_mode = #tpu.pipeline_mode<synchronous>, transform_indices = @transform_4, window_bounds = array<i64: 4, 32>}, {pipeline_mode = #tpu.pipeline_mode<synchronous>, transform_indices = @transform_5, window_bounds = array<i64: 1, 32>}, {pipeline_mode = #tpu.pipeline_mode<synchronous>, transform_indices = @transform_6, window_bounds = array<i64: 1, 32>}, {transform_indices = @transform_7, window_bounds = array<i64: 1, 1, 32>}, {transform_indices = @transform_8, window_bounds = array<i64: 1, 1, 32>}, {transform_indices = @transform_9, window_bounds = array<i64: 1, 4, 32, 8>}, {transform_indices = @transform_10, window_bounds = array<i64: 1, 4, 1, 8>}, {transform_indices = @transform_11, window_bounds = array<i64: 1, 4, 32, 8>}, {transform_indices = @transform_12, window_bounds = array<i64: 1, 4, 1, 8>}, {transform_indices = @transform_13, window_bounds = array<i64: 1, 4, 32, 8>}, {transform_indices = @transform_14, window_bounds = array<i64: 1, 4, 1, 8>}, {transform_indices = @transform_15, window_bounds = array<i64: 1, 4, 8, 32>}, {transform_indices = @transform_16, window_bounds = array<i64: 1, 1, 32>}, {transform_indices = @transform_17, window_bounds = array<i64: 1, 1, 32>}, {transform_indices = @transform_18, window_bounds = array<i64: 1, 1, 32>}, {transform_indices = @transform_19, window_bounds = array<i64: 1, 32, 64>}, {transform_indices = @transform_20, window_bounds = array<i64: 1, 1, 64>}, {transform_indices = @transform_21, window_bounds = array<i64: 1, 64, 32>}, {transform_indices = @transform_22, window_bounds = array<i64: 1, 1, 32>}, {transform_indices = @transform_23, window_bounds = array<i64: 1, 5, 32>}]} {
    %c0_i32 = arith.constant 0 : i32
    %0 = arith.cmpi eq, %arg1, %c0_i32 : i32
    %1 = arith.extui %0 : i1 to i32
    %c0_i32_0 = arith.constant 0 : i32
    %2 = arith.cmpi ne, %1, %c0_i32_0 : i32
    scf.if %2 {
      %c0_193 = arith.constant 0 : index
      %c0_194 = arith.constant 0 : index
      %c0_195 = arith.constant 0 : index
      %248 = vector.load %arg2[%c0_193, %c0_194, %c0_195] : memref<1x4x192xf32, #tpu.memory_space<vmem>>, vector<1x4x192xf32>
      %249 = vector.shape_cast %248 : vector<1x4x192xf32> to vector<4x192xf32>
      %c0_196 = arith.constant 0 : index
      %c0_197 = arith.constant 0 : index
      %250 = vector.load %arg3[%c0_196, %c0_197] : memref<192x32xf32, #tpu.memory_space<vmem>>, vector<192x32xf32>
      %cst_198 = arith.constant dense<0.000000e+00> : vector<4x32xf32>
      %251 = tpu.matmul %249, %250, %cst_198 {dimension_numbers = #tpu.dot_dimension_numbers<[1], [0], [0], [1], [0, 0, 1, 1], [], []>} : vector<4x192xf32>, vector<192x32xf32>, vector<4x32xf32> -> vector<4x32xf32>
      %c0_199 = arith.constant 0 : index
      %c0_200 = arith.constant 0 : index
      %252 = vector.load %arg4[%c0_199, %c0_200] : memref<1x32xf32, #tpu.memory_space<vmem>>, vector<1x32xf32>
      %c0_201 = arith.constant 0 : index
      %c0_202 = arith.constant 0 : index
      %253 = vector.load %arg5[%c0_201, %c0_202] : memref<1x32xf32, #tpu.memory_space<vmem>>, vector<1x32xf32>
      %254 = arith.addf %252, %253 : vector<1x32xf32>
      %c0_203 = arith.constant 0 : index
      %c0_204 = arith.constant 0 : index
      %255 = vector.load %arg6[%c0_203, %c0_204] : memref<4x32xf32, #tpu.memory_space<vmem>>, vector<4x32xf32>
      %256 = arith.addf %251, %255 : vector<4x32xf32>
      %257 = tpu.concatenate %254, %256 in 0 : vector<1x32xf32>, vector<4x32xf32> -> vector<5x32xf32>
      %c0_205 = arith.constant 0 : index
      %c0_206 = arith.constant 0 : index
      %258 = vector.load %arg7[%c0_205, %c0_206] : memref<1x32xf32, #tpu.memory_space<vmem>>, vector<1x32xf32>
      %c0_207 = arith.constant 0 : index
      %c0_208 = arith.constant 0 : index
      %259 = vector.load %arg8[%c0_207, %c0_208] : memref<1x32xf32, #tpu.memory_space<vmem>>, vector<1x32xf32>
      %cst_209 = arith.constant dense<0.000000e+00> : vector<5xf32>
      %260 = vector.multi_reduction <add>, %257, %cst_209 [1] : vector<5x32xf32> to vector<5xf32>
      %261 = vector.shape_cast %260 : vector<5xf32> to vector<5x1xf32>
      %cst_210 = arith.constant 3.200000e+01 : f32
      %262 = vector.broadcast %cst_210 : f32 to vector<5x1xf32>
      %263 = arith.divf %261, %262 : vector<5x1xf32>
      %264 = vector.broadcast %263 : vector<5x1xf32> to vector<5x32xf32>
      %265 = arith.subf %257, %264 : vector<5x32xf32>
      %266 = arith.mulf %265, %265 : vector<5x32xf32>
      %cst_211 = arith.constant dense<0.000000e+00> : vector<5xf32>
      %267 = vector.multi_reduction <add>, %266, %cst_211 [1] : vector<5x32xf32> to vector<5xf32>
      %268 = vector.shape_cast %267 : vector<5xf32> to vector<5x1xf32>
      %cst_212 = arith.constant 3.200000e+01 : f32
      %269 = vector.broadcast %cst_212 : f32 to vector<5x1xf32>
      %270 = arith.divf %268, %269 : vector<5x1xf32>
      %271 = vector.broadcast %263 : vector<5x1xf32> to vector<5x32xf32>
      %272 = arith.subf %257, %271 : vector<5x32xf32>
      %cst_213 = arith.constant 9.99999974E-6 : f32
      %273 = vector.broadcast %cst_213 : f32 to vector<5x1xf32>
      %274 = arith.addf %270, %273 : vector<5x1xf32>
      %275 = math.rsqrt %274 : vector<5x1xf32>
      %276 = vector.broadcast %275 : vector<5x1xf32> to vector<5x32xf32>
      %277 = arith.mulf %272, %276 : vector<5x32xf32>
      %278 = vector.broadcast %258 : vector<1x32xf32> to vector<5x32xf32>
      %279 = arith.mulf %277, %278 : vector<5x32xf32>
      %280 = vector.broadcast %259 : vector<1x32xf32> to vector<5x32xf32>
      %281 = arith.addf %279, %280 : vector<5x32xf32>
      %c0_214 = arith.constant 0 : index
      %c0_215 = arith.constant 0 : index
      %c0_216 = arith.constant 0 : index
      %282 = vector.load %arg26[%c0_214, %c0_215, %c0_216] : memref<1x5x32xf32, #tpu.memory_space<vmem>>, vector<1x5x32xf32>
      %283 = vector.shape_cast %282 : vector<1x5x32xf32> to vector<5x32xf32>
      %284 = vector.shape_cast %281 : vector<5x32xf32> to vector<1x5x32xf32>
      tpu.vector_store %arg26[%c0_214, %c0_215, %c0_216], %284 {strides = array<i32>} : memref<1x5x32xf32, #tpu.memory_space<vmem>>, vector<1x5x32xf32>,
    } else {
    }
    %c0 = arith.constant 0 : index
    %c0_1 = arith.constant 0 : index
    %c0_2 = arith.constant 0 : index
    %3 = vector.load %arg26[%c0, %c0_1, %c0_2] : memref<1x5x32xf32, #tpu.memory_space<vmem>>, vector<1x5x32xf32>
    %4 = vector.shape_cast %3 : vector<1x5x32xf32> to vector<5x32xf32>
    %c0_3 = arith.constant 0 : index
    %c0_4 = arith.constant 0 : index
    %c0_5 = arith.constant 0 : index
    %5 = vector.load %arg9[%c0_3, %c0_4, %c0_5] : memref<1x1x32xf32, #tpu.memory_space<vmem>>, vector<1x1x32xf32>
    %6 = vector.shape_cast %5 : vector<1x1x32xf32> to vector<1x32xf32>
    %c0_6 = arith.constant 0 : index
    %c0_7 = arith.constant 0 : index
    %c0_8 = arith.constant 0 : index
    %7 = vector.load %arg10[%c0_6, %c0_7, %c0_8] : memref<1x1x32xf32, #tpu.memory_space<vmem>>, vector<1x1x32xf32>
    %8 = vector.shape_cast %7 : vector<1x1x32xf32> to vector<1x32xf32>
    %cst = arith.constant dense<0.000000e+00> : vector<5xf32>
    %9 = vector.multi_reduction <add>, %4, %cst [1] : vector<5x32xf32> to vector<5xf32>
    %10 = vector.shape_cast %9 : vector<5xf32> to vector<5x1xf32>
    %cst_9 = arith.constant 3.200000e+01 : f32
    %11 = vector.broadcast %cst_9 : f32 to vector<5x1xf32>
    %12 = arith.divf %10, %11 : vector<5x1xf32>
    %13 = vector.broadcast %12 : vector<5x1xf32> to vector<5x32xf32>
    %14 = arith.subf %4, %13 : vector<5x32xf32>
    %15 = arith.mulf %14, %14 : vector<5x32xf32>
    %cst_10 = arith.constant dense<0.000000e+00> : vector<5xf32>
    %16 = vector.multi_reduction <add>, %15, %cst_10 [1] : vector<5x32xf32> to vector<5xf32>
    %17 = vector.shape_cast %16 : vector<5xf32> to vector<5x1xf32>
    %cst_11 = arith.constant 3.200000e+01 : f32
    %18 = vector.broadcast %cst_11 : f32 to vector<5x1xf32>
    %19 = arith.divf %17, %18 : vector<5x1xf32>
    %20 = vector.broadcast %12 : vector<5x1xf32> to vector<5x32xf32>
    %21 = arith.subf %4, %20 : vector<5x32xf32>
    %cst_12 = arith.constant 9.99999974E-6 : f32
    %22 = vector.broadcast %cst_12 : f32 to vector<5x1xf32>
    %23 = arith.addf %19, %22 : vector<5x1xf32>
    %24 = math.rsqrt %23 : vector<5x1xf32>
    %25 = vector.broadcast %24 : vector<5x1xf32> to vector<5x32xf32>
    %26 = arith.mulf %21, %25 : vector<5x32xf32>
    %27 = vector.broadcast %6 : vector<1x32xf32> to vector<5x32xf32>
    %28 = arith.mulf %26, %27 : vector<5x32xf32>
    %29 = vector.broadcast %8 : vector<1x32xf32> to vector<5x32xf32>
    %30 = arith.addf %28, %29 : vector<5x32xf32>
    %cst_13 = arith.constant 0.000000e+00 : f32
    %31 = vector.broadcast %cst_13 : f32 to vector<5x32xf32>
    %c0_14 = arith.constant 0 : index
    %c0_15 = arith.constant 0 : index
    %c0_16 = arith.constant 0 : index
    %c0_17 = arith.constant 0 : index
    %32 = vector.load %arg11[%c0_14, %c0_15, %c0_16, %c0_17] : memref<1x4x32x8xf32, #tpu.memory_space<vmem>>, vector<1x1x32x8xf32>
    %33 = vector.shape_cast %32 : vector<1x1x32x8xf32> to vector<32x8xf32>
    %cst_18 = arith.constant dense<0.000000e+00> : vector<5x8xf32>
    %34 = tpu.matmul %30, %33, %cst_18 {dimension_numbers = #tpu.dot_dimension_numbers<[1], [0], [0], [1], [0, 0, 1, 1], [], []>} : vector<5x32xf32>, vector<32x8xf32>, vector<5x8xf32> -> vector<5x8xf32>
    %c0_19 = arith.constant 0 : index
    %c0_20 = arith.constant 0 : index
    %c0_21 = arith.constant 0 : index
    %c0_22 = arith.constant 0 : index
    %35 = vector.load %arg12[%c0_19, %c0_20, %c0_21, %c0_22] : memref<1x4x1x8xf32, #tpu.memory_space<vmem>>, vector<1x1x1x8xf32>
    %36 = vector.shape_cast %35 : vector<1x1x1x8xf32> to vector<1x8xf32>
    %37 = vector.broadcast %36 : vector<1x8xf32> to vector<5x8xf32>
    %38 = arith.addf %34, %37 : vector<5x8xf32>
    %cst_23 = arith.constant 0.353553385 : f32
    %39 = vector.broadcast %cst_23 : f32 to vector<5x8xf32>
    %40 = arith.mulf %38, %39 : vector<5x8xf32>
    %c0_24 = arith.constant 0 : index
    %c0_25 = arith.constant 0 : index
    %c0_26 = arith.constant 0 : index
    %c0_27 = arith.constant 0 : index
    %41 = vector.load %arg13[%c0_24, %c0_25, %c0_26, %c0_27] : memref<1x4x32x8xf32, #tpu.memory_space<vmem>>, vector<1x1x32x8xf32>
    %42 = vector.shape_cast %41 : vector<1x1x32x8xf32> to vector<32x8xf32>
    %cst_28 = arith.constant dense<0.000000e+00> : vector<5x8xf32>
    %43 = tpu.matmul %30, %42, %cst_28 {dimension_numbers = #tpu.dot_dimension_numbers<[1], [0], [0], [1], [0, 0, 1, 1], [], []>} : vector<5x32xf32>, vector<32x8xf32>, vector<5x8xf32> -> vector<5x8xf32>
    %c0_29 = arith.constant 0 : index
    %c0_30 = arith.constant 0 : index
    %c0_31 = arith.constant 0 : index
    %c0_32 = arith.constant 0 : index
    %44 = vector.load %arg14[%c0_29, %c0_30, %c0_31, %c0_32] : memref<1x4x1x8xf32, #tpu.memory_space<vmem>>, vector<1x1x1x8xf32>
    %45 = vector.shape_cast %44 : vector<1x1x1x8xf32> to vector<1x8xf32>
    %46 = vector.broadcast %45 : vector<1x8xf32> to vector<5x8xf32>
    %47 = arith.addf %43, %46 : vector<5x8xf32>
    %c0_33 = arith.constant 0 : index
    %c0_34 = arith.constant 0 : index
    %c0_35 = arith.constant 0 : index
    %c0_36 = arith.constant 0 : index
    %48 = vector.load %arg15[%c0_33, %c0_34, %c0_35, %c0_36] : memref<1x4x32x8xf32, #tpu.memory_space<vmem>>, vector<1x1x32x8xf32>
    %49 = vector.shape_cast %48 : vector<1x1x32x8xf32> to vector<32x8xf32>
    %cst_37 = arith.constant dense<0.000000e+00> : vector<5x8xf32>
    %50 = tpu.matmul %30, %49, %cst_37 {dimension_numbers = #tpu.dot_dimension_numbers<[1], [0], [0], [1], [0, 0, 1, 1], [], []>} : vector<5x32xf32>, vector<32x8xf32>, vector<5x8xf32> -> vector<5x8xf32>
    %c0_38 = arith.constant 0 : index
    %c0_39 = arith.constant 0 : index
    %c0_40 = arith.constant 0 : index
    %c0_41 = arith.constant 0 : index
    %51 = vector.load %arg16[%c0_38, %c0_39, %c0_40, %c0_41] : memref<1x4x1x8xf32, #tpu.memory_space<vmem>>, vector<1x1x1x8xf32>
    %52 = vector.shape_cast %51 : vector<1x1x1x8xf32> to vector<1x8xf32>
    %53 = vector.broadcast %52 : vector<1x8xf32> to vector<5x8xf32>
    %54 = arith.addf %50, %53 : vector<5x8xf32>
    %cst_42 = arith.constant dense<0.000000e+00> : vector<5x5xf32>
    %55 = tpu.matmul %40, %47, %cst_42 {dimension_numbers = #tpu.dot_dimension_numbers<[1], [1], [0], [0], [0, 0, 1, 0], [], []>} : vector<5x8xf32>, vector<5x8xf32>, vector<5x5xf32> -> vector<5x5xf32>
    %cst_43 = arith.constant dense<0xFF800000> : vector<5xf32>
    %56 = vector.multi_reduction <maximumf>, %55, %cst_43 [1] : vector<5x5xf32> to vector<5xf32>
    %57 = vector.shape_cast %56 : vector<5xf32> to vector<5x1xf32>
    %58 = vector.broadcast %57 : vector<5x1xf32> to vector<5x5xf32>
    %59 = arith.subf %55, %58 : vector<5x5xf32>
    %60 = math.exp %59 : vector<5x5xf32>
    %cst_44 = arith.constant dense<0.000000e+00> : vector<5xf32>
    %61 = vector.multi_reduction <add>, %60, %cst_44 [1] : vector<5x5xf32> to vector<5xf32>
    %62 = vector.shape_cast %61 : vector<5xf32> to vector<5x1xf32>
    %63 = tpu.reciprocal %62 {approx = true} : vector<5x1xf32> -> vector<5x1xf32>
    %64 = vector.broadcast %63 : vector<5x1xf32> to vector<5x5xf32>
    %65 = arith.mulf %60, %64 : vector<5x5xf32>
    %cst_45 = arith.constant dense<0.000000e+00> : vector<5x8xf32>
    %66 = tpu.matmul %65, %54, %cst_45 {dimension_numbers = #tpu.dot_dimension_numbers<[1], [0], [0], [1], [0, 0, 1, 1], [], []>} : vector<5x5xf32>, vector<5x8xf32>, vector<5x8xf32> -> vector<5x8xf32>
    %c0_46 = arith.constant 0 : index
    %c0_47 = arith.constant 0 : index
    %c0_48 = arith.constant 0 : index
    %c0_49 = arith.constant 0 : index
    %67 = vector.load %arg17[%c0_46, %c0_47, %c0_48, %c0_49] : memref<1x4x8x32xf32, #tpu.memory_space<vmem>>, vector<1x1x8x32xf32>
    %68 = vector.shape_cast %67 : vector<1x1x8x32xf32> to vector<8x32xf32>
    %cst_50 = arith.constant dense<0.000000e+00> : vector<5x32xf32>
    %69 = tpu.matmul %66, %68, %cst_50 {dimension_numbers = #tpu.dot_dimension_numbers<[1], [0], [0], [1], [0, 0, 1, 1], [], []>} : vector<5x8xf32>, vector<8x32xf32>, vector<5x32xf32> -> vector<5x32xf32>
    %70 = arith.addf %31, %69 : vector<5x32xf32>
    %c0_51 = arith.constant 0 : index
    %c1 = arith.constant 1 : index
    %c0_52 = arith.constant 0 : index
    %c0_53 = arith.constant 0 : index
    %71 = vector.load %arg11[%c0_51, %c1, %c0_52, %c0_53] : memref<1x4x32x8xf32, #tpu.memory_space<vmem>>, vector<1x1x32x8xf32>
    %72 = vector.shape_cast %71 : vector<1x1x32x8xf32> to vector<32x8xf32>
    %cst_54 = arith.constant dense<0.000000e+00> : vector<5x8xf32>
    %73 = tpu.matmul %30, %72, %cst_54 {dimension_numbers = #tpu.dot_dimension_numbers<[1], [0], [0], [1], [0, 0, 1, 1], [], []>} : vector<5x32xf32>, vector<32x8xf32>, vector<5x8xf32> -> vector<5x8xf32>
    %c0_55 = arith.constant 0 : index
    %c1_56 = arith.constant 1 : index
    %c0_57 = arith.constant 0 : index
    %c0_58 = arith.constant 0 : index
    %74 = vector.load %arg12[%c0_55, %c1_56, %c0_57, %c0_58] : memref<1x4x1x8xf32, #tpu.memory_space<vmem>>, vector<1x1x1x8xf32>
    %75 = vector.shape_cast %74 : vector<1x1x1x8xf32> to vector<1x8xf32>
    %76 = vector.broadcast %75 : vector<1x8xf32> to vector<5x8xf32>
    %77 = arith.addf %73, %76 : vector<5x8xf32>
    %cst_59 = arith.constant 0.353553385 : f32
    %78 = vector.broadcast %cst_59 : f32 to vector<5x8xf32>
    %79 = arith.mulf %77, %78 : vector<5x8xf32>
    %c0_60 = arith.constant 0 : index
    %c1_61 = arith.constant 1 : index
    %c0_62 = arith.constant 0 : index
    %c0_63 = arith.constant 0 : index
    %80 = vector.load %arg13[%c0_60, %c1_61, %c0_62, %c0_63] : memref<1x4x32x8xf32, #tpu.memory_space<vmem>>, vector<1x1x32x8xf32>
    %81 = vector.shape_cast %80 : vector<1x1x32x8xf32> to vector<32x8xf32>
    %cst_64 = arith.constant dense<0.000000e+00> : vector<5x8xf32>
    %82 = tpu.matmul %30, %81, %cst_64 {dimension_numbers = #tpu.dot_dimension_numbers<[1], [0], [0], [1], [0, 0, 1, 1], [], []>} : vector<5x32xf32>, vector<32x8xf32>, vector<5x8xf32> -> vector<5x8xf32>
    %c0_65 = arith.constant 0 : index
    %c1_66 = arith.constant 1 : index
    %c0_67 = arith.constant 0 : index
    %c0_68 = arith.constant 0 : index
    %83 = vector.load %arg14[%c0_65, %c1_66, %c0_67, %c0_68] : memref<1x4x1x8xf32, #tpu.memory_space<vmem>>, vector<1x1x1x8xf32>
    %84 = vector.shape_cast %83 : vector<1x1x1x8xf32> to vector<1x8xf32>
    %85 = vector.broadcast %84 : vector<1x8xf32> to vector<5x8xf32>
    %86 = arith.addf %82, %85 : vector<5x8xf32>
    %c0_69 = arith.constant 0 : index
    %c1_70 = arith.constant 1 : index
    %c0_71 = arith.constant 0 : index
    %c0_72 = arith.constant 0 : index
    %87 = vector.load %arg15[%c0_69, %c1_70, %c0_71, %c0_72] : memref<1x4x32x8xf32, #tpu.memory_space<vmem>>, vector<1x1x32x8xf32>
    %88 = vector.shape_cast %87 : vector<1x1x32x8xf32> to vector<32x8xf32>
    %cst_73 = arith.constant dense<0.000000e+00> : vector<5x8xf32>
    %89 = tpu.matmul %30, %88, %cst_73 {dimension_numbers = #tpu.dot_dimension_numbers<[1], [0], [0], [1], [0, 0, 1, 1], [], []>} : vector<5x32xf32>, vector<32x8xf32>, vector<5x8xf32> -> vector<5x8xf32>
    %c0_74 = arith.constant 0 : index
    %c1_75 = arith.constant 1 : index
    %c0_76 = arith.constant 0 : index
    %c0_77 = arith.constant 0 : index
    %90 = vector.load %arg16[%c0_74, %c1_75, %c0_76, %c0_77] : memref<1x4x1x8xf32, #tpu.memory_space<vmem>>, vector<1x1x1x8xf32>
    %91 = vector.shape_cast %90 : vector<1x1x1x8xf32> to vector<1x8xf32>
    %92 = vector.broadcast %91 : vector<1x8xf32> to vector<5x8xf32>
    %93 = arith.addf %89, %92 : vector<5x8xf32>
    %cst_78 = arith.constant dense<0.000000e+00> : vector<5x5xf32>
    %94 = tpu.matmul %79, %86, %cst_78 {dimension_numbers = #tpu.dot_dimension_numbers<[1], [1], [0], [0], [0, 0, 1, 0], [], []>} : vector<5x8xf32>, vector<5x8xf32>, vector<5x5xf32> -> vector<5x5xf32>
    %cst_79 = arith.constant dense<0xFF800000> : vector<5xf32>
    %95 = vector.multi_reduction <maximumf>, %94, %cst_79 [1] : vector<5x5xf32> to vector<5xf32>
    %96 = vector.shape_cast %95 : vector<5xf32> to vector<5x1xf32>
    %97 = vector.broadcast %96 : vector<5x1xf32> to vector<5x5xf32>
    %98 = arith.subf %94, %97 : vector<5x5xf32>
    %99 = math.exp %98 : vector<5x5xf32>
    %cst_80 = arith.constant dense<0.000000e+00> : vector<5xf32>
    %100 = vector.multi_reduction <add>, %99, %cst_80 [1] : vector<5x5xf32> to vector<5xf32>
    %101 = vector.shape_cast %100 : vector<5xf32> to vector<5x1xf32>
    %102 = tpu.reciprocal %101 {approx = true} : vector<5x1xf32> -> vector<5x1xf32>
    %103 = vector.broadcast %102 : vector<5x1xf32> to vector<5x5xf32>
    %104 = arith.mulf %99, %103 : vector<5x5xf32>
    %cst_81 = arith.constant dense<0.000000e+00> : vector<5x8xf32>
    %105 = tpu.matmul %104, %93, %cst_81 {dimension_numbers = #tpu.dot_dimension_numbers<[1], [0], [0], [1], [0, 0, 1, 1], [], []>} : vector<5x5xf32>, vector<5x8xf32>, vector<5x8xf32> -> vector<5x8xf32>
    %c0_82 = arith.constant 0 : index
    %c1_83 = arith.constant 1 : index
    %c0_84 = arith.constant 0 : index
    %c0_85 = arith.constant 0 : index
    %106 = vector.load %arg17[%c0_82, %c1_83, %c0_84, %c0_85] : memref<1x4x8x32xf32, #tpu.memory_space<vmem>>, vector<1x1x8x32xf32>
    %107 = vector.shape_cast %106 : vector<1x1x8x32xf32> to vector<8x32xf32>
    %cst_86 = arith.constant dense<0.000000e+00> : vector<5x32xf32>
    %108 = tpu.matmul %105, %107, %cst_86 {dimension_numbers = #tpu.dot_dimension_numbers<[1], [0], [0], [1], [0, 0, 1, 1], [], []>} : vector<5x8xf32>, vector<8x32xf32>, vector<5x32xf32> -> vector<5x32xf32>
    %109 = arith.addf %70, %108 : vector<5x32xf32>
    %c0_87 = arith.constant 0 : index
    %c2 = arith.constant 2 : index
    %c0_88 = arith.constant 0 : index
    %c0_89 = arith.constant 0 : index
    %110 = vector.load %arg11[%c0_87, %c2, %c0_88, %c0_89] : memref<1x4x32x8xf32, #tpu.memory_space<vmem>>, vector<1x1x32x8xf32>
    %111 = vector.shape_cast %110 : vector<1x1x32x8xf32> to vector<32x8xf32>
    %cst_90 = arith.constant dense<0.000000e+00> : vector<5x8xf32>
    %112 = tpu.matmul %30, %111, %cst_90 {dimension_numbers = #tpu.dot_dimension_numbers<[1], [0], [0], [1], [0, 0, 1, 1], [], []>} : vector<5x32xf32>, vector<32x8xf32>, vector<5x8xf32> -> vector<5x8xf32>
    %c0_91 = arith.constant 0 : index
    %c2_92 = arith.constant 2 : index
    %c0_93 = arith.constant 0 : index
    %c0_94 = arith.constant 0 : index
    %113 = vector.load %arg12[%c0_91, %c2_92, %c0_93, %c0_94] : memref<1x4x1x8xf32, #tpu.memory_space<vmem>>, vector<1x1x1x8xf32>
    %114 = vector.shape_cast %113 : vector<1x1x1x8xf32> to vector<1x8xf32>
    %115 = vector.broadcast %114 : vector<1x8xf32> to vector<5x8xf32>
    %116 = arith.addf %112, %115 : vector<5x8xf32>
    %cst_95 = arith.constant 0.353553385 : f32
    %117 = vector.broadcast %cst_95 : f32 to vector<5x8xf32>
    %118 = arith.mulf %116, %117 : vector<5x8xf32>
    %c0_96 = arith.constant 0 : index
    %c2_97 = arith.constant 2 : index
    %c0_98 = arith.constant 0 : index
    %c0_99 = arith.constant 0 : index
    %119 = vector.load %arg13[%c0_96, %c2_97, %c0_98, %c0_99] : memref<1x4x32x8xf32, #tpu.memory_space<vmem>>, vector<1x1x32x8xf32>
    %120 = vector.shape_cast %119 : vector<1x1x32x8xf32> to vector<32x8xf32>
    %cst_100 = arith.constant dense<0.000000e+00> : vector<5x8xf32>
    %121 = tpu.matmul %30, %120, %cst_100 {dimension_numbers = #tpu.dot_dimension_numbers<[1], [0], [0], [1], [0, 0, 1, 1], [], []>} : vector<5x32xf32>, vector<32x8xf32>, vector<5x8xf32> -> vector<5x8xf32>
    %c0_101 = arith.constant 0 : index
    %c2_102 = arith.constant 2 : index
    %c0_103 = arith.constant 0 : index
    %c0_104 = arith.constant 0 : index
    %122 = vector.load %arg14[%c0_101, %c2_102, %c0_103, %c0_104] : memref<1x4x1x8xf32, #tpu.memory_space<vmem>>, vector<1x1x1x8xf32>
    %123 = vector.shape_cast %122 : vector<1x1x1x8xf32> to vector<1x8xf32>
    %124 = vector.broadcast %123 : vector<1x8xf32> to vector<5x8xf32>
    %125 = arith.addf %121, %124 : vector<5x8xf32>
    %c0_105 = arith.constant 0 : index
    %c2_106 = arith.constant 2 : index
    %c0_107 = arith.constant 0 : index
    %c0_108 = arith.constant 0 : index
    %126 = vector.load %arg15[%c0_105, %c2_106, %c0_107, %c0_108] : memref<1x4x32x8xf32, #tpu.memory_space<vmem>>, vector<1x1x32x8xf32>
    %127 = vector.shape_cast %126 : vector<1x1x32x8xf32> to vector<32x8xf32>
    %cst_109 = arith.constant dense<0.000000e+00> : vector<5x8xf32>
    %128 = tpu.matmul %30, %127, %cst_109 {dimension_numbers = #tpu.dot_dimension_numbers<[1], [0], [0], [1], [0, 0, 1, 1], [], []>} : vector<5x32xf32>, vector<32x8xf32>, vector<5x8xf32> -> vector<5x8xf32>
    %c0_110 = arith.constant 0 : index
    %c2_111 = arith.constant 2 : index
    %c0_112 = arith.constant 0 : index
    %c0_113 = arith.constant 0 : index
    %129 = vector.load %arg16[%c0_110, %c2_111, %c0_112, %c0_113] : memref<1x4x1x8xf32, #tpu.memory_space<vmem>>, vector<1x1x1x8xf32>
    %130 = vector.shape_cast %129 : vector<1x1x1x8xf32> to vector<1x8xf32>
    %131 = vector.broadcast %130 : vector<1x8xf32> to vector<5x8xf32>
    %132 = arith.addf %128, %131 : vector<5x8xf32>
    %cst_114 = arith.constant dense<0.000000e+00> : vector<5x5xf32>
    %133 = tpu.matmul %118, %125, %cst_114 {dimension_numbers = #tpu.dot_dimension_numbers<[1], [1], [0], [0], [0, 0, 1, 0], [], []>} : vector<5x8xf32>, vector<5x8xf32>, vector<5x5xf32> -> vector<5x5xf32>
    %cst_115 = arith.constant dense<0xFF800000> : vector<5xf32>
    %134 = vector.multi_reduction <maximumf>, %133, %cst_115 [1] : vector<5x5xf32> to vector<5xf32>
    %135 = vector.shape_cast %134 : vector<5xf32> to vector<5x1xf32>
    %136 = vector.broadcast %135 : vector<5x1xf32> to vector<5x5xf32>
    %137 = arith.subf %133, %136 : vector<5x5xf32>
    %138 = math.exp %137 : vector<5x5xf32>
    %cst_116 = arith.constant dense<0.000000e+00> : vector<5xf32>
    %139 = vector.multi_reduction <add>, %138, %cst_116 [1] : vector<5x5xf32> to vector<5xf32>
    %140 = vector.shape_cast %139 : vector<5xf32> to vector<5x1xf32>
    %141 = tpu.reciprocal %140 {approx = true} : vector<5x1xf32> -> vector<5x1xf32>
    %142 = vector.broadcast %141 : vector<5x1xf32> to vector<5x5xf32>
    %143 = arith.mulf %138, %142 : vector<5x5xf32>
    %cst_117 = arith.constant dense<0.000000e+00> : vector<5x8xf32>
    %144 = tpu.matmul %143, %132, %cst_117 {dimension_numbers = #tpu.dot_dimension_numbers<[1], [0], [0], [1], [0, 0, 1, 1], [], []>} : vector<5x5xf32>, vector<5x8xf32>, vector<5x8xf32> -> vector<5x8xf32>
    %c0_118 = arith.constant 0 : index
    %c2_119 = arith.constant 2 : index
    %c0_120 = arith.constant 0 : index
    %c0_121 = arith.constant 0 : index
    %145 = vector.load %arg17[%c0_118, %c2_119, %c0_120, %c0_121] : memref<1x4x8x32xf32, #tpu.memory_space<vmem>>, vector<1x1x8x32xf32>
    %146 = vector.shape_cast %145 : vector<1x1x8x32xf32> to vector<8x32xf32>
    %cst_122 = arith.constant dense<0.000000e+00> : vector<5x32xf32>
    %147 = tpu.matmul %144, %146, %cst_122 {dimension_numbers = #tpu.dot_dimension_numbers<[1], [0], [0], [1], [0, 0, 1, 1], [], []>} : vector<5x8xf32>, vector<8x32xf32>, vector<5x32xf32> -> vector<5x32xf32>
    %148 = arith.addf %109, %147 : vector<5x32xf32>
    %c0_123 = arith.constant 0 : index
    %c3 = arith.constant 3 : index
    %c0_124 = arith.constant 0 : index
    %c0_125 = arith.constant 0 : index
    %149 = vector.load %arg11[%c0_123, %c3, %c0_124, %c0_125] : memref<1x4x32x8xf32, #tpu.memory_space<vmem>>, vector<1x1x32x8xf32>
    %150 = vector.shape_cast %149 : vector<1x1x32x8xf32> to vector<32x8xf32>
    %cst_126 = arith.constant dense<0.000000e+00> : vector<5x8xf32>
    %151 = tpu.matmul %30, %150, %cst_126 {dimension_numbers = #tpu.dot_dimension_numbers<[1], [0], [0], [1], [0, 0, 1, 1], [], []>} : vector<5x32xf32>, vector<32x8xf32>, vector<5x8xf32> -> vector<5x8xf32>
    %c0_127 = arith.constant 0 : index
    %c3_128 = arith.constant 3 : index
    %c0_129 = arith.constant 0 : index
    %c0_130 = arith.constant 0 : index
    %152 = vector.load %arg12[%c0_127, %c3_128, %c0_129, %c0_130] : memref<1x4x1x8xf32, #tpu.memory_space<vmem>>, vector<1x1x1x8xf32>
    %153 = vector.shape_cast %152 : vector<1x1x1x8xf32> to vector<1x8xf32>
    %154 = vector.broadcast %153 : vector<1x8xf32> to vector<5x8xf32>
    %155 = arith.addf %151, %154 : vector<5x8xf32>
    %cst_131 = arith.constant 0.353553385 : f32
    %156 = vector.broadcast %cst_131 : f32 to vector<5x8xf32>
    %157 = arith.mulf %155, %156 : vector<5x8xf32>
    %c0_132 = arith.constant 0 : index
    %c3_133 = arith.constant 3 : index
    %c0_134 = arith.constant 0 : index
    %c0_135 = arith.constant 0 : index
    %158 = vector.load %arg13[%c0_132, %c3_133, %c0_134, %c0_135] : memref<1x4x32x8xf32, #tpu.memory_space<vmem>>, vector<1x1x32x8xf32>
    %159 = vector.shape_cast %158 : vector<1x1x32x8xf32> to vector<32x8xf32>
    %cst_136 = arith.constant dense<0.000000e+00> : vector<5x8xf32>
    %160 = tpu.matmul %30, %159, %cst_136 {dimension_numbers = #tpu.dot_dimension_numbers<[1], [0], [0], [1], [0, 0, 1, 1], [], []>} : vector<5x32xf32>, vector<32x8xf32>, vector<5x8xf32> -> vector<5x8xf32>
    %c0_137 = arith.constant 0 : index
    %c3_138 = arith.constant 3 : index
    %c0_139 = arith.constant 0 : index
    %c0_140 = arith.constant 0 : index
    %161 = vector.load %arg14[%c0_137, %c3_138, %c0_139, %c0_140] : memref<1x4x1x8xf32, #tpu.memory_space<vmem>>, vector<1x1x1x8xf32>
    %162 = vector.shape_cast %161 : vector<1x1x1x8xf32> to vector<1x8xf32>
    %163 = vector.broadcast %162 : vector<1x8xf32> to vector<5x8xf32>
    %164 = arith.addf %160, %163 : vector<5x8xf32>
    %c0_141 = arith.constant 0 : index
    %c3_142 = arith.constant 3 : index
    %c0_143 = arith.constant 0 : index
    %c0_144 = arith.constant 0 : index
    %165 = vector.load %arg15[%c0_141, %c3_142, %c0_143, %c0_144] : memref<1x4x32x8xf32, #tpu.memory_space<vmem>>, vector<1x1x32x8xf32>
    %166 = vector.shape_cast %165 : vector<1x1x32x8xf32> to vector<32x8xf32>
    %cst_145 = arith.constant dense<0.000000e+00> : vector<5x8xf32>
    %167 = tpu.matmul %30, %166, %cst_145 {dimension_numbers = #tpu.dot_dimension_numbers<[1], [0], [0], [1], [0, 0, 1, 1], [], []>} : vector<5x32xf32>, vector<32x8xf32>, vector<5x8xf32> -> vector<5x8xf32>
    %c0_146 = arith.constant 0 : index
    %c3_147 = arith.constant 3 : index
    %c0_148 = arith.constant 0 : index
    %c0_149 = arith.constant 0 : index
    %168 = vector.load %arg16[%c0_146, %c3_147, %c0_148, %c0_149] : memref<1x4x1x8xf32, #tpu.memory_space<vmem>>, vector<1x1x1x8xf32>
    %169 = vector.shape_cast %168 : vector<1x1x1x8xf32> to vector<1x8xf32>
    %170 = vector.broadcast %169 : vector<1x8xf32> to vector<5x8xf32>
    %171 = arith.addf %167, %170 : vector<5x8xf32>
    %cst_150 = arith.constant dense<0.000000e+00> : vector<5x5xf32>
    %172 = tpu.matmul %157, %164, %cst_150 {dimension_numbers = #tpu.dot_dimension_numbers<[1], [1], [0], [0], [0, 0, 1, 0], [], []>} : vector<5x8xf32>, vector<5x8xf32>, vector<5x5xf32> -> vector<5x5xf32>
    %cst_151 = arith.constant dense<0xFF800000> : vector<5xf32>
    %173 = vector.multi_reduction <maximumf>, %172, %cst_151 [1] : vector<5x5xf32> to vector<5xf32>
    %174 = vector.shape_cast %173 : vector<5xf32> to vector<5x1xf32>
    %175 = vector.broadcast %174 : vector<5x1xf32> to vector<5x5xf32>
    %176 = arith.subf %172, %175 : vector<5x5xf32>
    %177 = math.exp %176 : vector<5x5xf32>
    %cst_152 = arith.constant dense<0.000000e+00> : vector<5xf32>
    %178 = vector.multi_reduction <add>, %177, %cst_152 [1] : vector<5x5xf32> to vector<5xf32>
    %179 = vector.shape_cast %178 : vector<5xf32> to vector<5x1xf32>
    %180 = tpu.reciprocal %179 {approx = true} : vector<5x1xf32> -> vector<5x1xf32>
    %181 = vector.broadcast %180 : vector<5x1xf32> to vector<5x5xf32>
    %182 = arith.mulf %177, %181 : vector<5x5xf32>
    %cst_153 = arith.constant dense<0.000000e+00> : vector<5x8xf32>
    %183 = tpu.matmul %182, %171, %cst_153 {dimension_numbers = #tpu.dot_dimension_numbers<[1], [0], [0], [1], [0, 0, 1, 1], [], []>} : vector<5x5xf32>, vector<5x8xf32>, vector<5x8xf32> -> vector<5x8xf32>
    %c0_154 = arith.constant 0 : index
    %c3_155 = arith.constant 3 : index
    %c0_156 = arith.constant 0 : index
    %c0_157 = arith.constant 0 : index
    %184 = vector.load %arg17[%c0_154, %c3_155, %c0_156, %c0_157] : memref<1x4x8x32xf32, #tpu.memory_space<vmem>>, vector<1x1x8x32xf32>
    %185 = vector.shape_cast %184 : vector<1x1x8x32xf32> to vector<8x32xf32>
    %cst_158 = arith.constant dense<0.000000e+00> : vector<5x32xf32>
    %186 = tpu.matmul %183, %185, %cst_158 {dimension_numbers = #tpu.dot_dimension_numbers<[1], [0], [0], [1], [0, 0, 1, 1], [], []>} : vector<5x8xf32>, vector<8x32xf32>, vector<5x32xf32> -> vector<5x32xf32>
    %187 = arith.addf %148, %186 : vector<5x32xf32>
    %188 = arith.addf %4, %187 : vector<5x32xf32>
    %c0_159 = arith.constant 0 : index
    %c0_160 = arith.constant 0 : index
    %c0_161 = arith.constant 0 : index
    %189 = vector.load %arg18[%c0_159, %c0_160, %c0_161] : memref<1x1x32xf32, #tpu.memory_space<vmem>>, vector<1x1x32xf32>
    %190 = vector.shape_cast %189 : vector<1x1x32xf32> to vector<1x32xf32>
    %191 = vector.broadcast %190 : vector<1x32xf32> to vector<5x32xf32>
    %192 = arith.addf %188, %191 : vector<5x32xf32>
    %c0_162 = arith.constant 0 : index
    %c0_163 = arith.constant 0 : index
    %c0_164 = arith.constant 0 : index
    %193 = vector.load %arg19[%c0_162, %c0_163, %c0_164] : memref<1x1x32xf32, #tpu.memory_space<vmem>>, vector<1x1x32xf32>
    %194 = vector.shape_cast %193 : vector<1x1x32xf32> to vector<1x32xf32>
    %c0_165 = arith.constant 0 : index
    %c0_166 = arith.constant 0 : index
    %c0_167 = arith.constant 0 : index
    %195 = vector.load %arg20[%c0_165, %c0_166, %c0_167] : memref<1x1x32xf32, #tpu.memory_space<vmem>>, vector<1x1x32xf32>
    %196 = vector.shape_cast %195 : vector<1x1x32xf32> to vector<1x32xf32>
    %cst_168 = arith.constant dense<0.000000e+00> : vector<5xf32>
    %197 = vector.multi_reduction <add>, %192, %cst_168 [1] : vector<5x32xf32> to vector<5xf32>
    %198 = vector.shape_cast %197 : vector<5xf32> to vector<5x1xf32>
    %cst_169 = arith.constant 3.200000e+01 : f32
    %199 = vector.broadcast %cst_169 : f32 to vector<5x1xf32>
    %200 = arith.divf %198, %199 : vector<5x1xf32>
    %201 = vector.broadcast %200 : vector<5x1xf32> to vector<5x32xf32>
    %202 = arith.subf %192, %201 : vector<5x32xf32>
    %203 = arith.mulf %202, %202 : vector<5x32xf32>
    %cst_170 = arith.constant dense<0.000000e+00> : vector<5xf32>
    %204 = vector.multi_reduction <add>, %203, %cst_170 [1] : vector<5x32xf32> to vector<5xf32>
    %205 = vector.shape_cast %204 : vector<5xf32> to vector<5x1xf32>
    %cst_171 = arith.constant 3.200000e+01 : f32
    %206 = vector.broadcast %cst_171 : f32 to vector<5x1xf32>
    %207 = arith.divf %205, %206 : vector<5x1xf32>
    %208 = vector.broadcast %200 : vector<5x1xf32> to vector<5x32xf32>
    %209 = arith.subf %192, %208 : vector<5x32xf32>
    %cst_172 = arith.constant 9.99999974E-6 : f32
    %210 = vector.broadcast %cst_172 : f32 to vector<5x1xf32>
    %211 = arith.addf %207, %210 : vector<5x1xf32>
    %212 = math.rsqrt %211 : vector<5x1xf32>
    %213 = vector.broadcast %212 : vector<5x1xf32> to vector<5x32xf32>
    %214 = arith.mulf %209, %213 : vector<5x32xf32>
    %215 = vector.broadcast %194 : vector<1x32xf32> to vector<5x32xf32>
    %216 = arith.mulf %214, %215 : vector<5x32xf32>
    %217 = vector.broadcast %196 : vector<1x32xf32> to vector<5x32xf32>
    %218 = arith.addf %216, %217 : vector<5x32xf32>
    %c0_173 = arith.constant 0 : index
    %c0_174 = arith.constant 0 : index
    %c0_175 = arith.constant 0 : index
    %219 = vector.load %arg21[%c0_173, %c0_174, %c0_175] : memref<1x32x64xf32, #tpu.memory_space<vmem>>, vector<1x32x64xf32>
    %220 = vector.shape_cast %219 : vector<1x32x64xf32> to vector<32x64xf32>
    %cst_176 = arith.constant dense<0.000000e+00> : vector<5x64xf32>
    %221 = tpu.matmul %218, %220, %cst_176 {dimension_numbers = #tpu.dot_dimension_numbers<[1], [0], [0], [1], [0, 0, 1, 1], [], []>} : vector<5x32xf32>, vector<32x64xf32>, vector<5x64xf32> -> vector<5x64xf32>
    %c0_177 = arith.constant 0 : index
    %c0_178 = arith.constant 0 : index
    %c0_179 = arith.constant 0 : index
    %222 = vector.load %arg22[%c0_177, %c0_178, %c0_179] : memref<1x1x64xf32, #tpu.memory_space<vmem>>, vector<1x1x64xf32>
    %223 = vector.shape_cast %222 : vector<1x1x64xf32> to vector<1x64xf32>
    %224 = vector.broadcast %223 : vector<1x64xf32> to vector<5x64xf32>
    %225 = arith.addf %221, %224 : vector<5x64xf32>
    %cst_180 = arith.constant 1.702000e+00 : f32
    %226 = vector.broadcast %cst_180 : f32 to vector<5x64xf32>
    %227 = arith.mulf %226, %225 : vector<5x64xf32>
    %228 = arith.negf %227 : vector<5x64xf32>
    %229 = math.exp %228 : vector<5x64xf32>
    %cst_181 = arith.constant 1.000000e+00 : f32
    %230 = vector.broadcast %cst_181 : f32 to vector<5x64xf32>
    %231 = arith.addf %230, %229 : vector<5x64xf32>
    %232 = arith.divf %230, %231 : vector<5x64xf32>
    %233 = arith.mulf %225, %232 : vector<5x64xf32>
    %c0_182 = arith.constant 0 : index
    %c0_183 = arith.constant 0 : index
    %c0_184 = arith.constant 0 : index
    %234 = vector.load %arg23[%c0_182, %c0_183, %c0_184] : memref<1x64x32xf32, #tpu.memory_space<vmem>>, vector<1x64x32xf32>
    %235 = vector.shape_cast %234 : vector<1x64x32xf32> to vector<64x32xf32>
    %cst_185 = arith.constant dense<0.000000e+00> : vector<5x32xf32>
    %236 = tpu.matmul %233, %235, %cst_185 {dimension_numbers = #tpu.dot_dimension_numbers<[1], [0], [0], [1], [0, 0, 1, 1], [], []>} : vector<5x64xf32>, vector<64x32xf32>, vector<5x32xf32> -> vector<5x32xf32>
    %c0_186 = arith.constant 0 : index
    %c0_187 = arith.constant 0 : index
    %c0_188 = arith.constant 0 : index
    %237 = vector.load %arg24[%c0_186, %c0_187, %c0_188] : memref<1x1x32xf32, #tpu.memory_space<vmem>>, vector<1x1x32xf32>
    %238 = vector.shape_cast %237 : vector<1x1x32xf32> to vector<1x32xf32>
    %239 = vector.broadcast %238 : vector<1x32xf32> to vector<5x32xf32>
    %240 = arith.addf %236, %239 : vector<5x32xf32>
    %241 = arith.addf %192, %240 : vector<5x32xf32>
    %c0_189 = arith.constant 0 : index
    %c0_190 = arith.constant 0 : index
    %c0_191 = arith.constant 0 : index
    %242 = vector.load %arg26[%c0_189, %c0_190, %c0_191] : memref<1x5x32xf32, #tpu.memory_space<vmem>>, vector<1x5x32xf32>
    %243 = vector.shape_cast %242 : vector<1x5x32xf32> to vector<5x32xf32>
    %244 = vector.shape_cast %241 : vector<5x32xf32> to vector<1x5x32xf32>
    tpu.vector_store %arg26[%c0_189, %c0_190, %c0_191], %244 {strides = array<i32>} : memref<1x5x32xf32, #tpu.memory_space<vmem>>, vector<1x5x32xf32>,
    %c1_i32 = arith.constant 1 : i32
    %245 = arith.cmpi eq, %arg1, %c1_i32 : i32
    %246 = arith.extui %245 : i1 to i32
    %c0_i32_192 = arith.constant 0 : i32
    %247 = arith.cmpi ne, %246, %c0_i32_192 : i32
    scf.if %247 {
      %c0_193 = arith.constant 0 : index
      %c0_194 = arith.constant 0 : index
      %c0_195 = arith.constant 0 : index
      %248 = vector.load %arg25[%c0_193, %c0_194, %c0_195] : memref<1x5x32xf32, #tpu.memory_space<vmem>>, vector<1x5x32xf32>
      %249 = vector.shape_cast %248 : vector<1x5x32xf32> to vector<5x32xf32>
      %250 = vector.shape_cast %241 : vector<5x32xf32> to vector<1x5x32xf32>
      tpu.vector_store %arg25[%c0_193, %c0_194, %c0_195], %250 {strides = array<i32>} : memref<1x5x32xf32, #tpu.memory_space<vmem>>, vector<1x5x32xf32>,
    } else {
    }
    return
  }
  func.func @transform_0(%arg0: i32, %arg1: i32) -> (i32, i32, i32) {
    %c0_i32 = arith.constant 0 : i32
    %c0_i32_0 = arith.constant 0 : i32
    %c0_i32_1 = arith.constant 0 : i32
    return %arg0, %c0_i32, %c0_i32_0 : i32, i32, i32
  }
  func.func @transform_1(%arg0: i32, %arg1: i32) -> (i32, i32) {
    %c0_i32 = arith.constant 0 : i32
    %c0_i32_0 = arith.constant 0 : i32
    %c0_i32_1 = arith.constant 0 : i32
    return %c0_i32, %c0_i32_0 : i32, i32
  }
  func.func @transform_2(%arg0: i32, %arg1: i32) -> (i32, i32) {
    %c0_i32 = arith.constant 0 : i32
    %c0_i32_0 = arith.constant 0 : i32
    %c0_i32_1 = arith.constant 0 : i32
    return %c0_i32, %c0_i32_0 : i32, i32
  }
  func.func @transform_3(%arg0: i32, %arg1: i32) -> (i32, i32) {
    %c0_i32 = arith.constant 0 : i32
    %c0_i32_0 = arith.constant 0 : i32
    %c0_i32_1 = arith.constant 0 : i32
    return %c0_i32, %c0_i32_0 : i32, i32
  }
  func.func @transform_4(%arg0: i32, %arg1: i32) -> (i32, i32) {
    %c0_i32 = arith.constant 0 : i32
    %c0_i32_0 = arith.constant 0 : i32
    %c0_i32_1 = arith.constant 0 : i32
    return %c0_i32, %c0_i32_0 : i32, i32
  }
  func.func @transform_5(%arg0: i32, %arg1: i32) -> (i32, i32) {
    %c0_i32 = arith.constant 0 : i32
    %c0_i32_0 = arith.constant 0 : i32
    %c0_i32_1 = arith.constant 0 : i32
    return %c0_i32, %c0_i32_0 : i32, i32
  }
  func.func @transform_6(%arg0: i32, %arg1: i32) -> (i32, i32) {
    %c0_i32 = arith.constant 0 : i32
    %c0_i32_0 = arith.constant 0 : i32
    %c0_i32_1 = arith.constant 0 : i32
    return %c0_i32, %c0_i32_0 : i32, i32
  }
  func.func @transform_7(%arg0: i32, %arg1: i32) -> (i32, i32, i32) {
    %c0_i32 = arith.constant 0 : i32
    %c0_i32_0 = arith.constant 0 : i32
    %c0_i32_1 = arith.constant 0 : i32
    return %arg1, %c0_i32, %c0_i32_0 : i32, i32, i32
  }
  func.func @transform_8(%arg0: i32, %arg1: i32) -> (i32, i32, i32) {
    %c0_i32 = arith.constant 0 : i32
    %c0_i32_0 = arith.constant 0 : i32
    %c0_i32_1 = arith.constant 0 : i32
    return %arg1, %c0_i32, %c0_i32_0 : i32, i32, i32
  }
  func.func @transform_9(%arg0: i32, %arg1: i32) -> (i32, i32, i32, i32) {
    %c0_i32 = arith.constant 0 : i32
    %c0_i32_0 = arith.constant 0 : i32
    %c0_i32_1 = arith.constant 0 : i32
    %c0_i32_2 = arith.constant 0 : i32
    return %arg1, %c0_i32, %c0_i32_0, %c0_i32_1 : i32, i32, i32, i32
  }
  func.func @transform_10(%arg0: i32, %arg1: i32) -> (i32, i32, i32, i32) {
    %c0_i32 = arith.constant 0 : i32
    %c0_i32_0 = arith.constant 0 : i32
    %c0_i32_1 = arith.constant 0 : i32
    %c0_i32_2 = arith.constant 0 : i32
    return %arg1, %c0_i32, %c0_i32_0, %c0_i32_1 : i32, i32, i32, i32
  }
  func.func @transform_11(%arg0: i32, %arg1: i32) -> (i32, i32, i32, i32) {
    %c0_i32 = arith.constant 0 : i32
    %c0_i32_0 = arith.constant 0 : i32
    %c0_i32_1 = arith.constant 0 : i32
    %c0_i32_2 = arith.constant 0 : i32
    return %arg1, %c0_i32, %c0_i32_0, %c0_i32_1 : i32, i32, i32, i32
  }
  func.func @transform_12(%arg0: i32, %arg1: i32) -> (i32, i32, i32, i32) {
    %c0_i32 = arith.constant 0 : i32
    %c0_i32_0 = arith.constant 0 : i32
    %c0_i32_1 = arith.constant 0 : i32
    %c0_i32_2 = arith.constant 0 : i32
    return %arg1, %c0_i32, %c0_i32_0, %c0_i32_1 : i32, i32, i32, i32
  }
  func.func @transform_13(%arg0: i32, %arg1: i32) -> (i32, i32, i32, i32) {
    %c0_i32 = arith.constant 0 : i32
    %c0_i32_0 = arith.constant 0 : i32
    %c0_i32_1 = arith.constant 0 : i32
    %c0_i32_2 = arith.constant 0 : i32
    return %arg1, %c0_i32, %c0_i32_0, %c0_i32_1 : i32, i32, i32, i32
  }
  func.func @transform_14(%arg0: i32, %arg1: i32) -> (i32, i32, i32, i32) {
    %c0_i32 = arith.constant 0 : i32
    %c0_i32_0 = arith.constant 0 : i32
    %c0_i32_1 = arith.constant 0 : i32
    %c0_i32_2 = arith.constant 0 : i32
    return %arg1, %c0_i32, %c0_i32_0, %c0_i32_1 : i32, i32, i32, i32
  }
  func.func @transform_15(%arg0: i32, %arg1: i32) -> (i32, i32, i32, i32) {
    %c0_i32 = arith.constant 0 : i32
    %c0_i32_0 = arith.constant 0 : i32
    %c0_i32_1 = arith.constant 0 : i32
    %c0_i32_2 = arith.constant 0 : i32
    return %arg1, %c0_i32, %c0_i32_0, %c0_i32_1 : i32, i32, i32, i32
  }
  func.func @transform_16(%arg0: i32, %arg1: i32) -> (i32, i32, i32) {
    %c0_i32 = arith.constant 0 : i32
    %c0_i32_0 = arith.constant 0 : i32
    %c0_i32_1 = arith.constant 0 : i32
    return %arg1, %c0_i32, %c0_i32_0 : i32, i32, i32
  }
  func.func @transform_17(%arg0: i32, %arg1: i32) -> (i32, i32, i32) {
    %c0_i32 = arith.constant 0 : i32
    %c0_i32_0 = arith.constant 0 : i32
    %c0_i32_1 = arith.constant 0 : i32
    return %arg1, %c0_i32, %c0_i32_0 : i32, i32, i32
  }
  func.func @transform_18(%arg0: i32, %arg1: i32) -> (i32, i32, i32) {
    %c0_i32 = arith.constant 0 : i32
    %c0_i32_0 = arith.constant 0 : i32
    %c0_i32_1 = arith.constant 0 : i32
    return %arg1, %c0_i32, %c0_i32_0 : i32, i32, i32
  }
  func.func @transform_19(%arg0: i32, %arg1: i32) -> (i32, i32, i32) {
    %c0_i32 = arith.constant 0 : i32
    %c0_i32_0 = arith.constant 0 : i32
    %c0_i32_1 = arith.constant 0 : i32
    return %arg1, %c0_i32, %c0_i32_0 : i32, i32, i32
  }
  func.func @transform_20(%arg0: i32, %arg1: i32) -> (i32, i32, i32) {
    %c0_i32 = arith.constant 0 : i32
    %c0_i32_0 = arith.constant 0 : i32
    %c0_i32_1 = arith.constant 0 : i32
    return %arg1, %c0_i32, %c0_i32_0 : i32, i32, i32
  }
  func.func @transform_21(%arg0: i32, %arg1: i32) -> (i32, i32, i32) {
    %c0_i32 = arith.constant 0 : i32
    %c0_i32_0 = arith.constant 0 : i32
    %c0_i32_1 = arith.constant 0 : i32
    return %arg1, %c0_i32, %c0_i32_0 : i32, i32, i32
  }
  func.func @transform_22(%arg0: i32, %arg1: i32) -> (i32, i32, i32) {
    %c0_i32 = arith.constant 0 : i32
    %c0_i32_0 = arith.constant 0 : i32
    %c0_i32_1 = arith.constant 0 : i32
    return %arg1, %c0_i32, %c0_i32_0 : i32, i32, i32
  }
  func.func @transform_23(%arg0: i32, %arg1: i32) -> (i32, i32, i32) {
    %c0_i32 = arith.constant 0 : i32
    %c0_i32_0 = arith.constant 0 : i32
    %c0_i32_1 = arith.constant 0 : i32
    return %arg0, %c0_i32, %c0_i32_0 : i32, i32, i32
  }
}

</mosaic_0001>

<llo_original>
// kernel: tpu_custom_call.1
$region0: #{tpu_custom_call.1}
  #allocation0 [shape = 'u32[]', space=smem, size = 0x4, offset = 0x4, fixed_abs, tag = 'smem constant byte address 0x4 - core index']
  #allocation1 [shape = 'u32[144,128]{1,0:T(1,128)}', space=vmem, size = 0x12000, scoped, tag = 'internal scratch']
  #allocation2 [shape = 'f32[1,5,32]{2,1,0:T(8,128)}', space=vmem, size = 0x1000, scoped, tag = 'scratch operand']
  %s0 = inlined_call_operand.vmem [shape: f32[2,4,192], index: 0, kind: input, shape index: {}]
  %s1 = inlined_call_operand.vmem [shape: f32[192,32], index: 1, kind: input, shape index: {}]
  %s2 = inlined_call_operand.vmem [shape: f32[1,32], index: 2, kind: input, shape index: {}]
  %s3 = inlined_call_operand.vmem [shape: f32[1,32], index: 3, kind: input, shape index: {}]
  %s4 = inlined_call_operand.vmem [shape: f32[4,32], index: 4, kind: input, shape index: {}]
  %s5 = inlined_call_operand.vmem [shape: f32[1,32], index: 5, kind: input, shape index: {}]
  %s6 = inlined_call_operand.vmem [shape: f32[1,32], index: 6, kind: input, shape index: {}]
  %s7 = inlined_call_operand.vmem [shape: f32[2,1,32], index: 7, kind: input, shape index: {}]
  %s8 = inlined_call_operand.vmem [shape: f32[2,1,32], index: 8, kind: input, shape index: {}]
  %s9 = inlined_call_operand.vmem [shape: f32[2,4,32,8], index: 9, kind: input, shape index: {}]
  %s10 = inlined_call_operand.vmem [shape: f32[2,4,1,8], index: 10, kind: input, shape index: {}]
  %s11 = inlined_call_operand.vmem [shape: f32[2,4,32,8], index: 11, kind: input, shape index: {}]
  %s12 = inlined_call_operand.vmem [shape: f32[2,4,1,8], index: 12, kind: input, shape index: {}]
  %s13 = inlined_call_operand.vmem [shape: f32[2,4,32,8], index: 13, kind: input, shape index: {}]
  %s14 = inlined_call_operand.vmem [shape: f32[2,4,1,8], index: 14, kind: input, shape index: {}]
  %s15 = inlined_call_operand.vmem [shape: f32[2,4,8,32], index: 15, kind: input, shape index: {}]
  %s16 = inlined_call_operand.vmem [shape: f32[2,1,32], index: 16, kind: input, shape index: {}]
  %s17 = inlined_call_operand.vmem [shape: f32[2,1,32], index: 17, kind: input, shape index: {}]
  %s18 = inlined_call_operand.vmem [shape: f32[2,1,32], index: 18, kind: input, shape index: {}]
  %s19 = inlined_call_operand.vmem [shape: f32[2,32,64], index: 19, kind: input, shape index: {}]
  %s20 = inlined_call_operand.vmem [shape: f32[2,1,64], index: 20, kind: input, shape index: {}]
  %s21 = inlined_call_operand.vmem [shape: f32[2,64,32], index: 21, kind: input, shape index: {}]
  %s22 = inlined_call_operand.vmem [shape: f32[2,1,32], index: 22, kind: input, shape index: {}]
  %s23 = inlined_call_operand.vmem [shape: f32[2,5,32], index: 23, kind: output, shape index: {}]
  %s24 = sld [smem:[#allocation0]]
  $region133: #{tpu_custom_call.1} parent=0
    _
  %s26 = ssub.s32 1, %s24
  %s27 = scalar_select 0, %s26, %s24
  loop: start=0, step=1, limit=6
  $region2: #{tpu_custom_call.1} parent=0 // loop_pre_header
    _
  $region3: #{tpu_custom_call.1} parent=0 // loop_header
    %s29 = sphi 0, %s33
    %p30 = scmp.ge.s32.totalorder %s29, 6
    %s36 = sphi 0, %s48
    %s37 = sphi 0, %s44
    %s38 = sphi 0, %s36
    %s39 = sphi 0, %s37
    %s40 = sphi 0, %s38
    %s41 = sphi 0, %s39
    %s51 = sphi 0, %s53
    %s54 = sphi 0, %s51
    %s55 = sphi 0, %s54
    %s71 = sphi 0, %s55
    %s75 = sphi 0, %s75
    %s77 = sphi 0, %s75
    %s78 = sphi 0, %s77
    %s92 = sphi 0, %s78
    %s96 = sphi 0, %s96
    %s98 = sphi 0, %s96
    %s99 = sphi 0, %s98
    %s113 = sphi 0, %s99
    %s117 = sphi 0, %s117
    %s119 = sphi 0, %s117
    %s120 = sphi 0, %s119
    %s134 = sphi 0, %s120
    %s138 = sphi 0, %s138
    %s140 = sphi 0, %s138
    %s141 = sphi 0, %s140
    %s155 = sphi 0, %s141
    %s159 = sphi 0, %s159
    %s161 = sphi 0, %s159
    %s162 = sphi 0, %s161
    %s176 = sphi 0, %s162
    %s180 = sphi 0, %s180
    %s182 = sphi 0, %s180
    %s183 = sphi 0, %s182
    %s197 = sphi 0, %s183
    %s203 = sphi 0, %s205
    %s206 = sphi 0, %s203
    %s207 = sphi 0, %s206
    %s223 = sphi 0, %s207
    %s229 = sphi 0, %s231
    %s232 = sphi 0, %s229
    %s233 = sphi 0, %s232
    %s249 = sphi 0, %s233
    %s255 = sphi 0, %s257
    %s258 = sphi 0, %s255
    %s259 = sphi 0, %s258
    %s275 = sphi 0, %s259
    %s281 = sphi 0, %s283
    %s284 = sphi 0, %s281
    %s285 = sphi 0, %s284
    %s301 = sphi 0, %s285
    %s307 = sphi 0, %s309
    %s310 = sphi 0, %s307
    %s311 = sphi 0, %s310
    %s327 = sphi 0, %s311
    %s333 = sphi 0, %s335
    %s336 = sphi 0, %s333
    %s337 = sphi 0, %s336
    %s353 = sphi 0, %s337
    %s359 = sphi 0, %s361
    %s362 = sphi 0, %s359
    %s363 = sphi 0, %s362
    %s379 = sphi 0, %s363
    %s385 = sphi 0, %s387
    %s388 = sphi 0, %s385
    %s389 = sphi 0, %s388
    %s405 = sphi 0, %s389
    %s411 = sphi 0, %s413
    %s414 = sphi 0, %s411
    %s415 = sphi 0, %s414
    %s431 = sphi 0, %s415
    %s437 = sphi 0, %s439
    %s440 = sphi 0, %s437
    %s441 = sphi 0, %s440
    %s457 = sphi 0, %s441
    %s463 = sphi 0, %s465
    %s466 = sphi 0, %s463
    %s467 = sphi 0, %s466
    %s483 = sphi 0, %s467
    %s489 = sphi 0, %s491
    %s492 = sphi 0, %s489
    %s493 = sphi 0, %s492
    %s509 = sphi 0, %s493
    %s515 = sphi 0, %s517
    %s518 = sphi 0, %s515
    %s519 = sphi 0, %s518
    %s535 = sphi 0, %s519
    %s541 = sphi 0, %s543
    %s544 = sphi 0, %s541
    %s545 = sphi 0, %s544
    %s561 = sphi 0, %s545
    %s567 = sphi 0, %s569
    %s570 = sphi 0, %s567
    %s571 = sphi 0, %s570
    %s587 = sphi 0, %s571
    %s593 = sphi 0, %s595
    %s596 = sphi 0, %s593
    %s597 = sphi 0, %s596
    %s613 = sphi 0, %s597
    %s619 = sphi 0, %s621
    %s622 = sphi 0, %s619
    %s623 = sphi 0, %s622
    %s639 = sphi 0, %s623
  $region4: #{tpu_custom_call.1} parent=0 // loop_header_branch
    %32 = sbr.rel (%p30) target = $region8
  $region5: #{tpu_custom_call.1} parent=0 // loop_body
    %s34 = ssub.s32 %s29, 1
    %s35 = ssub.s32 %s29, 2
    %s42 = sadd.s32 1, %s37
    %p43 = scmp.ge.s32.totalorder %s42, 2
    %s44 = scalar_select %p43, 0, %s42
    %s45 = sadd.s32 1, %s36
    %s46 = scalar_select %p43, %s45, %s36
    %p47 = scmp.ge.s32.totalorder %s46, 2
    %s48 = scalar_select %p47, 0, %s46
    %s49 = ssub.s32 %s36, %s48
    %p50 = scmp.eq.s32.totalorder %s49, 0
    %s52 = sadd.s32 %s51, 1
    %s53 = scalar_select %p50, %s51, %s52
    %p56 = pneg %p50
    %p57 = scmp.eq.s32.totalorder %s29, 3
    %p58 = por %p56, %p57
    %p59 = scmp.ne.s32.totalorder %s51, %s54
    %p60 = scmp.eq.s32.totalorder %s29, 0
    %p61 = por %p59, %p60
    %p62 = scmp.ne.s32.totalorder %s51, %s54
    %p63 = scmp.eq.s32.totalorder %s34, 3
    %p64 = por %p62, %p63
    %p65 = scmp.ne.s32.totalorder %s54, %s55
    %p66 = scmp.eq.s32.totalorder %s34, 0
    %p67 = por %p65, %p66
    %p68 = scmp.ne.s32.totalorder %s54, %s55
    %p69 = scmp.eq.s32.totalorder %s35, 3
    %p70 = por %p68, %p69
    %p72 = scmp.ne.s32.totalorder %s55, %s71
    %p73 = scmp.eq.s32.totalorder %s35, 0
    %p74 = por %p72, %p73
    %s76 = sadd.s32 %s75, 1
    %p79 = scmp.eq.s32.totalorder %s29, 3
    %p80 = scmp.ne.s32.totalorder %s75, %s77
    %p81 = scmp.eq.s32.totalorder %s29, 0
    %p82 = por %p80, %p81
    %p83 = scmp.ne.s32.totalorder %s75, %s77
    %p84 = scmp.eq.s32.totalorder %s34, 3
    %p85 = por %p83, %p84
    %p86 = scmp.ne.s32.totalorder %s77, %s78
    %p87 = scmp.eq.s32.totalorder %s34, 0
    %p88 = por %p86, %p87
    %p89 = scmp.ne.s32.totalorder %s77, %s78
    %p90 = scmp.eq.s32.totalorder %s35, 3
    %p91 = por %p89, %p90
    %p93 = scmp.ne.s32.totalorder %s78, %s92
    %p94 = scmp.eq.s32.totalorder %s35, 0
    %p95 = por %p93, %p94
    %s97 = sadd.s32 %s96, 1
    %p100 = scmp.eq.s32.totalorder %s29, 3
    %p101 = scmp.ne.s32.totalorder %s96, %s98
    %p102 = scmp.eq.s32.totalorder %s29, 0
    %p103 = por %p101, %p102
    %p104 = scmp.ne.s32.totalorder %s96, %s98
    %p105 = scmp.eq.s32.totalorder %s34, 3
    %p106 = por %p104, %p105
    %p107 = scmp.ne.s32.totalorder %s98, %s99
    %p108 = scmp.eq.s32.totalorder %s34, 0
    %p109 = por %p107, %p108
    %p110 = scmp.ne.s32.totalorder %s98, %s99
    %p111 = scmp.eq.s32.totalorder %s35, 3
    %p112 = por %p110, %p111
    %p114 = scmp.ne.s32.totalorder %s99, %s113
    %p115 = scmp.eq.s32.totalorder %s35, 0
    %p116 = por %p114, %p115
    %s118 = sadd.s32 %s117, 1
    %p121 = scmp.eq.s32.totalorder %s29, 3
    %p122 = scmp.ne.s32.totalorder %s117, %s119
    %p123 = scmp.eq.s32.totalorder %s29, 0
    %p124 = por %p122, %p123
    %p125 = scmp.ne.s32.totalorder %s117, %s119
    %p126 = scmp.eq.s32.totalorder %s34, 3
    %p127 = por %p125, %p126
    %p128 = scmp.ne.s32.totalorder %s119, %s120
    %p129 = scmp.eq.s32.totalorder %s34, 0
    %p130 = por %p128, %p129
    %p131 = scmp.ne.s32.totalorder %s119, %s120
    %p132 = scmp.eq.s32.totalorder %s35, 3
    %p133 = por %p131, %p132
    %p135 = scmp.ne.s32.totalorder %s120, %s134
    %p136 = scmp.eq.s32.totalorder %s35, 0
    %p137 = por %p135, %p136
    %s139 = sadd.s32 %s138, 1
    %p142 = scmp.eq.s32.totalorder %s29, 3
    %p143 = scmp.ne.s32.totalorder %s138, %s140
    %p144 = scmp.eq.s32.totalorder %s29, 0
    %p145 = por %p143, %p144
    %p146 = scmp.ne.s32.totalorder %s138, %s140
    %p147 = scmp.eq.s32.totalorder %s34, 3
    %p148 = por %p146, %p147
    %p149 = scmp.ne.s32.totalorder %s140, %s141
    %p150 = scmp.eq.s32.totalorder %s34, 0
    %p151 = por %p149, %p150
    %p152 = scmp.ne.s32.totalorder %s140, %s141
    %p153 = scmp.eq.s32.totalorder %s35, 3
    %p154 = por %p152, %p153
    %p156 = scmp.ne.s32.totalorder %s141, %s155
    %p157 = scmp.eq.s32.totalorder %s35, 0
    %p158 = por %p156, %p157
    %s160 = sadd.s32 %s159, 1
    %p163 = scmp.eq.s32.totalorder %s29, 3
    %p164 = scmp.ne.s32.totalorder %s159, %s161
    %p165 = scmp.eq.s32.totalorder %s29, 0
    %p166 = por %p164, %p165
    %p167 = scmp.ne.s32.totalorder %s159, %s161
    %p168 = scmp.eq.s32.totalorder %s34, 3
    %p169 = por %p167, %p168
    %p170 = scmp.ne.s32.totalorder %s161, %s162
    %p171 = scmp.eq.s32.totalorder %s34, 0
    %p172 = por %p170, %p171
    %p173 = scmp.ne.s32.totalorder %s161, %s162
    %p174 = scmp.eq.s32.totalorder %s35, 3
    %p175 = por %p173, %p174
    %p177 = scmp.ne.s32.totalorder %s162, %s176
    %p178 = scmp.eq.s32.totalorder %s35, 0
    %p179 = por %p177, %p178
    %s181 = sadd.s32 %s180, 1
    %p184 = scmp.eq.s32.totalorder %s29, 3
    %p185 = scmp.ne.s32.totalorder %s180, %s182
    %p186 = scmp.eq.s32.totalorder %s29, 0
    %p187 = por %p185, %p186
    %p188 = scmp.ne.s32.totalorder %s180, %s182
    %p189 = scmp.eq.s32.totalorder %s34, 3
    %p190 = por %p188, %p189
    %p191 = scmp.ne.s32.totalorder %s182, %s183
    %p192 = scmp.eq.s32.totalorder %s34, 0
    %p193 = por %p191, %p192
    %p194 = scmp.ne.s32.totalorder %s182, %s183
    %p195 = scmp.eq.s32.totalorder %s35, 3
    %p196 = por %p194, %p195
    %p198 = scmp.ne.s32.totalorder %s183, %s197
    %p199 = scmp.eq.s32.totalorder %s35, 0
    %p200 = por %p198, %p199
    %s201 = ssub.s32 %s37, %s44
    %p202 = scmp.eq.s32.totalorder %s201, 0
    %s204 = sadd.s32 %s203, 1
    %s205 = scalar_select %p202, %s203, %s204
    %p208 = pneg %p202
    %p209 = scmp.eq.s32.totalorder %s29, 3
    %p210 = por %p208, %p209
    %p211 = scmp.ne.s32.totalorder %s203, %s206
    %p212 = scmp.eq.s32.totalorder %s29, 0
    %p213 = por %p211, %p212
    %p214 = scmp.ne.s32.totalorder %s203, %s206
    %p215 = scmp.eq.s32.totalorder %s34, 3
    %p216 = por %p214, %p215
    %p217 = scmp.ne.s32.totalorder %s206, %s207
    %p218 = scmp.eq.s32.totalorder %s34, 0
    %p219 = por %p217, %p218
    %p220 = scmp.ne.s32.totalorder %s206, %s207
    %p221 = scmp.eq.s32.totalorder %s35, 3
    %p222 = por %p220, %p221
    %p224 = scmp.ne.s32.totalorder %s207, %s223
    %p225 = scmp.eq.s32.totalorder %s35, 0
    %p226 = por %p224, %p225
    %s227 = ssub.s32 %s37, %s44
    %p228 = scmp.eq.s32.totalorder %s227, 0
    %s230 = sadd.s32 %s229, 1
    %s231 = scalar_select %p228, %s229, %s230
    %p234 = pneg %p228
    %p235 = scmp.eq.s32.totalorder %s29, 3
    %p236 = por %p234, %p235
    %p237 = scmp.ne.s32.totalorder %s229, %s232
    %p238 = scmp.eq.s32.totalorder %s29, 0
    %p239 = por %p237, %p238
    %p240 = scmp.ne.s32.totalorder %s229, %s232
    %p241 = scmp.eq.s32.totalorder %s34, 3
    %p242 = por %p240, %p241
    %p243 = scmp.ne.s32.totalorder %s232, %s233
    %p244 = scmp.eq.s32.totalorder %s34, 0
    %p245 = por %p243, %p244
    %p246 = scmp.ne.s32.totalorder %s232, %s233
    %p247 = scmp.eq.s32.totalorder %s35, 3
    %p248 = por %p246, %p247
    %p250 = scmp.ne.s32.totalorder %s233, %s249
    %p251 = scmp.eq.s32.totalorder %s35, 0
    %p252 = por %p250, %p251
    %s253 = ssub.s32 %s37, %s44
    %p254 = scmp.eq.s32.totalorder %s253, 0
    %s256 = sadd.s32 %s255, 1
    %s257 = scalar_select %p254, %s255, %s256
    %p260 = pneg %p254
    %p261 = scmp.eq.s32.totalorder %s29, 3
    %p262 = por %p260, %p261
    %p263 = scmp.ne.s32.totalorder %s255, %s258
    %p264 = scmp.eq.s32.totalorder %s29, 0
    %p265 = por %p263, %p264
    %p266 = scmp.ne.s32.totalorder %s255, %s258
    %p267 = scmp.eq.s32.totalorder %s34, 3
    %p268 = por %p266, %p267
    %p269 = scmp.ne.s32.totalorder %s258, %s259
    %p270 = scmp.eq.s32.totalorder %s34, 0
    %p271 = por %p269, %p270
    %p272 = scmp.ne.s32.totalorder %s258, %s259
    %p273 = scmp.eq.s32.totalorder %s35, 3
    %p274 = por %p272, %p273
    %p276 = scmp.ne.s32.totalorder %s259, %s275
    %p277 = scmp.eq.s32.totalorder %s35, 0
    %p278 = por %p276, %p277
    %s279 = ssub.s32 %s37, %s44
    %p280 = scmp.eq.s32.totalorder %s279, 0
    %s282 = sadd.s32 %s281, 1
    %s283 = scalar_select %p280, %s281, %s282
    %p286 = pneg %p280
    %p287 = scmp.eq.s32.totalorder %s29, 3
    %p288 = por %p286, %p287
    %p289 = scmp.ne.s32.totalorder %s281, %s284
    %p290 = scmp.eq.s32.totalorder %s29, 0
    %p291 = por %p289, %p290
    %p292 = scmp.ne.s32.totalorder %s281, %s284
    %p293 = scmp.eq.s32.totalorder %s34, 3
    %p294 = por %p292, %p293
    %p295 = scmp.ne.s32.totalorder %s284, %s285
    %p296 = scmp.eq.s32.totalorder %s34, 0
    %p297 = por %p295, %p296
    %p298 = scmp.ne.s32.totalorder %s284, %s285
    %p299 = scmp.eq.s32.totalorder %s35, 3
    %p300 = por %p298, %p299
    %p302 = scmp.ne.s32.totalorder %s285, %s301
    %p303 = scmp.eq.s32.totalorder %s35, 0
    %p304 = por %p302, %p303
    %s305 = ssub.s32 %s37, %s44
    %p306 = scmp.eq.s32.totalorder %s305, 0
    %s308 = sadd.s32 %s307, 1
    %s309 = scalar_select %p306, %s307, %s308
    %p312 = pneg %p306
    %p313 = scmp.eq.s32.totalorder %s29, 3
    %p314 = por %p312, %p313
    %p315 = scmp.ne.s32.totalorder %s307, %s310
    %p316 = scmp.eq.s32.totalorder %s29, 0
    %p317 = por %p315, %p316
    %p318 = scmp.ne.s32.totalorder %s307, %s310
    %p319 = scmp.eq.s32.totalorder %s34, 3
    %p320 = por %p318, %p319
    %p321 = scmp.ne.s32.totalorder %s310, %s311
    %p322 = scmp.eq.s32.totalorder %s34, 0
    %p323 = por %p321, %p322
    %p324 = scmp.ne.s32.totalorder %s310, %s311
    %p325 = scmp.eq.s32.totalorder %s35, 3
    %p326 = por %p324, %p325
    %p328 = scmp.ne.s32.totalorder %s311, %s327
    %p329 = scmp.eq.s32.totalorder %s35, 0
    %p330 = por %p328, %p329
    %s331 = ssub.s32 %s37, %s44
    %p332 = scmp.eq.s32.totalorder %s331, 0
    %s334 = sadd.s32 %s333, 1
    %s335 = scalar_select %p332, %s333, %s334
    %p338 = pneg %p332
    %p339 = scmp.eq.s32.totalorder %s29, 3
    %p340 = por %p338, %p339
    %p341 = scmp.ne.s32.totalorder %s333, %s336
    %p342 = scmp.eq.s32.totalorder %s29, 0
    %p343 = por %p341, %p342
    %p344 = scmp.ne.s32.totalorder %s333, %s336
    %p345 = scmp.eq.s32.totalorder %s34, 3
    %p346 = por %p344, %p345
    %p347 = scmp.ne.s32.totalorder %s336, %s337
    %p348 = scmp.eq.s32.totalorder %s34, 0
    %p349 = por %p347, %p348
    %p350 = scmp.ne.s32.totalorder %s336, %s337
    %p351 = scmp.eq.s32.totalorder %s35, 3
    %p352 = por %p350, %p351
    %p354 = scmp.ne.s32.totalorder %s337, %s353
    %p355 = scmp.eq.s32.totalorder %s35, 0
    %p356 = por %p354, %p355
    %s357 = ssub.s32 %s37, %s44
    %p358 = scmp.eq.s32.totalorder %s357, 0
    %s360 = sadd.s32 %s359, 1
    %s361 = scalar_select %p358, %s359, %s360
    %p364 = pneg %p358
    %p365 = scmp.eq.s32.totalorder %s29, 3
    %p366 = por %p364, %p365
    %p367 = scmp.ne.s32.totalorder %s359, %s362
    %p368 = scmp.eq.s32.totalorder %s29, 0
    %p369 = por %p367, %p368
    %p370 = scmp.ne.s32.totalorder %s359, %s362
    %p371 = scmp.eq.s32.totalorder %s34, 3
    %p372 = por %p370, %p371
    %p373 = scmp.ne.s32.totalorder %s362, %s363
    %p374 = scmp.eq.s32.totalorder %s34, 0
    %p375 = por %p373, %p374
    %p376 = scmp.ne.s32.totalorder %s362, %s363
    %p377 = scmp.eq.s32.totalorder %s35, 3
    %p378 = por %p376, %p377
    %p380 = scmp.ne.s32.totalorder %s363, %s379
    %p381 = scmp.eq.s32.totalorder %s35, 0
    %p382 = por %p380, %p381
    %s383 = ssub.s32 %s37, %s44
    %p384 = scmp.eq.s32.totalorder %s383, 0
    %s386 = sadd.s32 %s385, 1
    %s387 = scalar_select %p384, %s385, %s386
    %p390 = pneg %p384
    %p391 = scmp.eq.s32.totalorder %s29, 3
    %p392 = por %p390, %p391
    %p393 = scmp.ne.s32.totalorder %s385, %s388
    %p394 = scmp.eq.s32.totalorder %s29, 0
    %p395 = por %p393, %p394
    %p396 = scmp.ne.s32.totalorder %s385, %s388
    %p397 = scmp.eq.s32.totalorder %s34, 3
    %p398 = por %p396, %p397
    %p399 = scmp.ne.s32.totalorder %s388, %s389
    %p400 = scmp.eq.s32.totalorder %s34, 0
    %p401 = por %p399, %p400
    %p402 = scmp.ne.s32.totalorder %s388, %s389
    %p403 = scmp.eq.s32.totalorder %s35, 3
    %p404 = por %p402, %p403
    %p406 = scmp.ne.s32.totalorder %s389, %s405
    %p407 = scmp.eq.s32.totalorder %s35, 0
    %p408 = por %p406, %p407
    %s409 = ssub.s32 %s37, %s44
    %p410 = scmp.eq.s32.totalorder %s409, 0
    %s412 = sadd.s32 %s411, 1
    %s413 = scalar_select %p410, %s411, %s412
    %p416 = pneg %p410
    %p417 = scmp.eq.s32.totalorder %s29, 3
    %p418 = por %p416, %p417
    %p419 = scmp.ne.s32.totalorder %s411, %s414
    %p420 = scmp.eq.s32.totalorder %s29, 0
    %p421 = por %p419, %p420
    %p422 = scmp.ne.s32.totalorder %s411, %s414
    %p423 = scmp.eq.s32.totalorder %s34, 3
    %p424 = por %p422, %p423
    %p425 = scmp.ne.s32.totalorder %s414, %s415
    %p426 = scmp.eq.s32.totalorder %s34, 0
    %p427 = por %p425, %p426
    %p428 = scmp.ne.s32.totalorder %s414, %s415
    %p429 = scmp.eq.s32.totalorder %s35, 3
    %p430 = por %p428, %p429
    %p432 = scmp.ne.s32.totalorder %s415, %s431
    %p433 = scmp.eq.s32.totalorder %s35, 0
    %p434 = por %p432, %p433
    %s435 = ssub.s32 %s37, %s44
    %p436 = scmp.eq.s32.totalorder %s435, 0
    %s438 = sadd.s32 %s437, 1
    %s439 = scalar_select %p436, %s437, %s438
    %p442 = pneg %p436
    %p443 = scmp.eq.s32.totalorder %s29, 3
    %p444 = por %p442, %p443
    %p445 = scmp.ne.s32.totalorder %s437, %s440
    %p446 = scmp.eq.s32.totalorder %s29, 0
    %p447 = por %p445, %p446
    %p448 = scmp.ne.s32.totalorder %s437, %s440
    %p449 = scmp.eq.s32.totalorder %s34, 3
    %p450 = por %p448, %p449
    %p451 = scmp.ne.s32.totalorder %s440, %s441
    %p452 = scmp.eq.s32.totalorder %s34, 0
    %p453 = por %p451, %p452
    %p454 = scmp.ne.s32.totalorder %s440, %s441
    %p455 = scmp.eq.s32.totalorder %s35, 3
    %p456 = por %p454, %p455
    %p458 = scmp.ne.s32.totalorder %s441, %s457
    %p459 = scmp.eq.s32.totalorder %s35, 0
    %p460 = por %p458, %p459
    %s461 = ssub.s32 %s37, %s44
    %p462 = scmp.eq.s32.totalorder %s461, 0
    %s464 = sadd.s32 %s463, 1
    %s465 = scalar_select %p462, %s463, %s464
    %p468 = pneg %p462
    %p469 = scmp.eq.s32.totalorder %s29, 3
    %p470 = por %p468, %p469
    %p471 = scmp.ne.s32.totalorder %s463, %s466
    %p472 = scmp.eq.s32.totalorder %s29, 0
    %p473 = por %p471, %p472
    %p474 = scmp.ne.s32.totalorder %s463, %s466
    %p475 = scmp.eq.s32.totalorder %s34, 3
    %p476 = por %p474, %p475
    %p477 = scmp.ne.s32.totalorder %s466, %s467
    %p478 = scmp.eq.s32.totalorder %s34, 0
    %p479 = por %p477, %p478
    %p480 = scmp.ne.s32.totalorder %s466, %s467
    %p481 = scmp.eq.s32.totalorder %s35, 3
    %p482 = por %p480, %p481
    %p484 = scmp.ne.s32.totalorder %s467, %s483
    %p485 = scmp.eq.s32.totalorder %s35, 0
    %p486 = por %p484, %p485
    %s487 = ssub.s32 %s37, %s44
    %p488 = scmp.eq.s32.totalorder %s487, 0
    %s490 = sadd.s32 %s489, 1
    %s491 = scalar_select %p488, %s489, %s490
    %p494 = pneg %p488
    %p495 = scmp.eq.s32.totalorder %s29, 3
    %p496 = por %p494, %p495
    %p497 = scmp.ne.s32.totalorder %s489, %s492
    %p498 = scmp.eq.s32.totalorder %s29, 0
    %p499 = por %p497, %p498
    %p500 = scmp.ne.s32.totalorder %s489, %s492
    %p501 = scmp.eq.s32.totalorder %s34, 3
    %p502 = por %p500, %p501
    %p503 = scmp.ne.s32.totalorder %s492, %s493
    %p504 = scmp.eq.s32.totalorder %s34, 0
    %p505 = por %p503, %p504
    %p506 = scmp.ne.s32.totalorder %s492, %s493
    %p507 = scmp.eq.s32.totalorder %s35, 3
    %p508 = por %p506, %p507
    %p510 = scmp.ne.s32.totalorder %s493, %s509
    %p511 = scmp.eq.s32.totalorder %s35, 0
    %p512 = por %p510, %p511
    %s513 = ssub.s32 %s37, %s44
    %p514 = scmp.eq.s32.totalorder %s513, 0
    %s516 = sadd.s32 %s515, 1
    %s517 = scalar_select %p514, %s515, %s516
    %p520 = pneg %p514
    %p521 = scmp.eq.s32.totalorder %s29, 3
    %p522 = por %p520, %p521
    %p523 = scmp.ne.s32.totalorder %s515, %s518
    %p524 = scmp.eq.s32.totalorder %s29, 0
    %p525 = por %p523, %p524
    %p526 = scmp.ne.s32.totalorder %s515, %s518
    %p527 = scmp.eq.s32.totalorder %s34, 3
    %p528 = por %p526, %p527
    %p529 = scmp.ne.s32.totalorder %s518, %s519
    %p530 = scmp.eq.s32.totalorder %s34, 0
    %p531 = por %p529, %p530
    %p532 = scmp.ne.s32.totalorder %s518, %s519
    %p533 = scmp.eq.s32.totalorder %s35, 3
    %p534 = por %p532, %p533
    %p536 = scmp.ne.s32.totalorder %s519, %s535
    %p537 = scmp.eq.s32.totalorder %s35, 0
    %p538 = por %p536, %p537
    %s539 = ssub.s32 %s37, %s44
    %p540 = scmp.eq.s32.totalorder %s539, 0
    %s542 = sadd.s32 %s541, 1
    %s543 = scalar_select %p540, %s541, %s542
    %p546 = pneg %p540
    %p547 = scmp.eq.s32.totalorder %s29, 3
    %p548 = por %p546, %p547
    %p549 = scmp.ne.s32.totalorder %s541, %s544
    %p550 = scmp.eq.s32.totalorder %s29, 0
    %p551 = por %p549, %p550
    %p552 = scmp.ne.s32.totalorder %s541, %s544
    %p553 = scmp.eq.s32.totalorder %s34, 3
    %p554 = por %p552, %p553
    %p555 = scmp.ne.s32.totalorder %s544, %s545
    %p556 = scmp.eq.s32.totalorder %s34, 0
    %p557 = por %p555, %p556
    %p558 = scmp.ne.s32.totalorder %s544, %s545
    %p559 = scmp.eq.s32.totalorder %s35, 3
    %p560 = por %p558, %p559
    %p562 = scmp.ne.s32.totalorder %s545, %s561
    %p563 = scmp.eq.s32.totalorder %s35, 0
    %p564 = por %p562, %p563
    %s565 = ssub.s32 %s37, %s44
    %p566 = scmp.eq.s32.totalorder %s565, 0
    %s568 = sadd.s32 %s567, 1
    %s569 = scalar_select %p566, %s567, %s568
    %p572 = pneg %p566
    %p573 = scmp.eq.s32.totalorder %s29, 3
    %p574 = por %p572, %p573
    %p575 = scmp.ne.s32.totalorder %s567, %s570
    %p576 = scmp.eq.s32.totalorder %s29, 0
    %p577 = por %p575, %p576
    %p578 = scmp.ne.s32.totalorder %s567, %s570
    %p579 = scmp.eq.s32.totalorder %s34, 3
    %p580 = por %p578, %p579
    %p581 = scmp.ne.s32.totalorder %s570, %s571
    %p582 = scmp.eq.s32.totalorder %s34, 0
    %p583 = por %p581, %p582
    %p584 = scmp.ne.s32.totalorder %s570, %s571
    %p585 = scmp.eq.s32.totalorder %s35, 3
    %p586 = por %p584, %p585
    %p588 = scmp.ne.s32.totalorder %s571, %s587
    %p589 = scmp.eq.s32.totalorder %s35, 0
    %p590 = por %p588, %p589
    %s591 = ssub.s32 %s37, %s44
    %p592 = scmp.eq.s32.totalorder %s591, 0
    %s594 = sadd.s32 %s593, 1
    %s595 = scalar_select %p592, %s593, %s594
    %p598 = pneg %p592
    %p599 = scmp.eq.s32.totalorder %s29, 3
    %p600 = por %p598, %p599
    %p601 = scmp.ne.s32.totalorder %s593, %s596
    %p602 = scmp.eq.s32.totalorder %s29, 0
    %p603 = por %p601, %p602
    %p604 = scmp.ne.s32.totalorder %s593, %s596
    %p605 = scmp.eq.s32.totalorder %s34, 3
    %p606 = por %p604, %p605
    %p607 = scmp.ne.s32.totalorder %s596, %s597
    %p608 = scmp.eq.s32.totalorder %s34, 0
    %p609 = por %p607, %p608
    %p610 = scmp.ne.s32.totalorder %s596, %s597
    %p611 = scmp.eq.s32.totalorder %s35, 3
    %p612 = por %p610, %p611
    %p614 = scmp.ne.s32.totalorder %s597, %s613
    %p615 = scmp.eq.s32.totalorder %s35, 0
    %p616 = por %p614, %p615
    %s617 = ssub.s32 %s36, %s48
    %p618 = scmp.eq.s32.totalorder %s617, 0
    %s620 = sadd.s32 %s619, 1
    %s621 = scalar_select %p618, %s619, %s620
    %p624 = pneg %p618
    %p625 = scmp.eq.s32.totalorder %s29, 3
    %p626 = por %p624, %p625
    %p627 = scmp.ne.s32.totalorder %s619, %s622
    %p628 = scmp.eq.s32.totalorder %s29, 0
    %p629 = por %p627, %p628
    %p630 = scmp.ne.s32.totalorder %s619, %s622
    %p631 = scmp.eq.s32.totalorder %s34, 3
    %p632 = por %p630, %p631
    %p633 = scmp.ne.s32.totalorder %s622, %s623
    %p634 = scmp.eq.s32.totalorder %s34, 0
    %p635 = por %p633, %p634
    %p636 = scmp.ne.s32.totalorder %s622, %s623
    %p637 = scmp.eq.s32.totalorder %s35, 3
    %p638 = por %p636, %p637
    %p640 = scmp.ne.s32.totalorder %s623, %s639
    %p641 = scmp.eq.s32.totalorder %s35, 0
    %p642 = por %p640, %p641
    %p643 = scmp.le.s32.totalorder 1, %s29
    %p644 = scmp.lt.s32.totalorder %s29, 5
    %p645 = pnand %p643, %p644
    %p646 = pneg %p645
    // Predicated region
    $region9: #{tpu_custom_call.1} parent=5 // pred_check
      _
    $region10: #{tpu_custom_call.1} parent=5 // pred_check_branch
      %648 = sbr.rel (%p645) target = $region12
    $region11: #{tpu_custom_call.1} parent=5 // pred_region
      %s649 = ssub.s32 %s29, 1
      // Predicated region
      $region13: #{tpu_custom_call.1} parent=11 // pred_check
        %p650 = pneg %p88
      $region14: #{tpu_custom_call.1} parent=11 // pred_check_branch
        %652 = sbr.rel (%p650) target = $region16
      $region15: #{tpu_custom_call.1} parent=11 // pred_region
        _
      $region16: #{tpu_custom_call.1} parent=11 // pred_fallthru
        _
      // Predicated region
      $region17: #{tpu_custom_call.1} parent=11 // pred_check
        %p653 = pneg %p109
      $region18: #{tpu_custom_call.1} parent=11 // pred_check_branch
        %655 = sbr.rel (%p653) target = $region20
      $region19: #{tpu_custom_call.1} parent=11 // pred_region
        _
      $region20: #{tpu_custom_call.1} parent=11 // pred_fallthru
        _
      // Predicated region
      $region21: #{tpu_custom_call.1} parent=11 // pred_check
        %p656 = pneg %p130
      $region22: #{tpu_custom_call.1} parent=11 // pred_check_branch
        %658 = sbr.rel (%p656) target = $region24
      $region23: #{tpu_custom_call.1} parent=11 // pred_region
        _
      $region24: #{tpu_custom_call.1} parent=11 // pred_fallthru
        _
      // Predicated region
      $region25: #{tpu_custom_call.1} parent=11 // pred_check
        %p659 = pneg %p151
      $region26: #{tpu_custom_call.1} parent=11 // pred_check_branch
        %661 = sbr.rel (%p659) target = $region28
      $region27: #{tpu_custom_call.1} parent=11 // pred_region
        _
      $region28: #{tpu_custom_call.1} parent=11 // pred_fallthru
        _
      // Predicated region
      $region29: #{tpu_custom_call.1} parent=11 // pred_check
        %p662 = pneg %p172
      $region30: #{tpu_custom_call.1} parent=11 // pred_check_branch
        %664 = sbr.rel (%p662) target = $region32
      $region31: #{tpu_custom_call.1} parent=11 // pred_region
        _
      $region32: #{tpu_custom_call.1} parent=11 // pred_fallthru
        _
      // Predicated region
      $region33: #{tpu_custom_call.1} parent=11 // pred_check
        %p665 = pneg %p193
      $region34: #{tpu_custom_call.1} parent=11 // pred_check_branch
        %667 = sbr.rel (%p665) target = $region36
      $region35: #{tpu_custom_call.1} parent=11 // pred_region
        _
      $region36: #{tpu_custom_call.1} parent=11 // pred_fallthru
        _
    $region12: #{tpu_custom_call.1} parent=5 // pred_fallthru
      _
    %p668 = scmp.lt.s32.totalorder %s29, 4
    // Predicated region
    $region37: #{tpu_custom_call.1} parent=5 // pred_check
      %p669 = pneg %p668
    $region38: #{tpu_custom_call.1} parent=5 // pred_check_branch
      %671 = sbr.rel (%p669) target = $region40
    $region39: #{tpu_custom_call.1} parent=5 // pred_region
      // Predicated region
      $region41: #{tpu_custom_call.1} parent=39 // pred_check
        %p672 = pneg %p61
      $region42: #{tpu_custom_call.1} parent=39 // pred_check_branch
        %674 = sbr.rel (%p672) target = $region44
      $region43: #{tpu_custom_call.1} parent=39 // pred_region
        %p675 = scmp.lt.s32.totalorder %s36, 1
        %s676 = scalar_select %p675, %s36, 1
        %s677 = smul.addr %s676, 2
        %s678 = smul.addr %s677, 4
        %s679 = scalar_lea.vmem %s0, %s678
      $region44: #{tpu_custom_call.1} parent=39 // pred_fallthru
        _
      // Predicated region
      $region45: #{tpu_custom_call.1} parent=39 // pred_check
        %p680 = pneg %p213
      $region46: #{tpu_custom_call.1} parent=39 // pred_check_branch
        %682 = sbr.rel (%p680) target = $region48
      $region47: #{tpu_custom_call.1} parent=39 // pred_region
        %p683 = scmp.lt.s32.totalorder %s37, 1
        %s684 = scalar_select %p683, %s37, 1
        %s685 = scalar_lea.vmem %s7, %s684
      $region48: #{tpu_custom_call.1} parent=39 // pred_fallthru
        _
      // Predicated region
      $region49: #{tpu_custom_call.1} parent=39 // pred_check
        %p686 = pneg %p239
      $region50: #{tpu_custom_call.1} parent=39 // pred_check_branch
        %688 = sbr.rel (%p686) target = $region52
      $region51: #{tpu_custom_call.1} parent=39 // pred_region
        %p689 = scmp.lt.s32.totalorder %s37, 1
        %s690 = scalar_select %p689, %s37, 1
        %s691 = scalar_lea.vmem %s8, %s690
      $region52: #{tpu_custom_call.1} parent=39 // pred_fallthru
        _
      // Predicated region
      $region53: #{tpu_custom_call.1} parent=39 // pred_check
        %p692 = pneg %p265
      $region54: #{tpu_custom_call.1} parent=39 // pred_check_branch
        %694 = sbr.rel (%p692) target = $region56
      $region55: #{tpu_custom_call.1} parent=39 // pred_region
        %p695 = scmp.lt.s32.totalorder %s37, 1
        %s696 = scalar_select %p695, %s37, 1
        %s697 = smul.addr %s696, 16
        %s698 = smul.addr %s697, 8
        %s699 = scalar_lea.vmem %s9, %s698
      $region56: #{tpu_custom_call.1} parent=39 // pred_fallthru
        _
      // Predicated region
      $region57: #{tpu_custom_call.1} parent=39 // pred_check
        %p700 = pneg %p291
      $region58: #{tpu_custom_call.1} parent=39 // pred_check_branch
        %702 = sbr.rel (%p700) target = $region60
      $region59: #{tpu_custom_call.1} parent=39 // pred_region
        %p703 = scmp.lt.s32.totalorder %s37, 1
        %s704 = scalar_select %p703, %s37, 1
        %s705 = smul.addr %s704, 4
        %s706 = scalar_lea.vmem %s10, %s705
      $region60: #{tpu_custom_call.1} parent=39 // pred_fallthru
        _
      // Predicated region
      $region61: #{tpu_custom_call.1} parent=39 // pred_check
        %p707 = pneg %p317
      $region62: #{tpu_custom_call.1} parent=39 // pred_check_branch
        %709 = sbr.rel (%p707) target = $region64
      $region63: #{tpu_custom_call.1} parent=39 // pred_region
        %p710 = scmp.lt.s32.totalorder %s37, 1
        %s711 = scalar_select %p710, %s37, 1
        %s712 = smul.addr %s711, 16
        %s713 = smul.addr %s712, 8
        %s714 = scalar_lea.vmem %s11, %s713
      $region64: #{tpu_custom_call.1} parent=39 // pred_fallthru
        _
      // Predicated region
      $region65: #{tpu_custom_call.1} parent=39 // pred_check
        %p715 = pneg %p343
      $region66: #{tpu_custom_call.1} parent=39 // pred_check_branch
        %717 = sbr.rel (%p715) target = $region68
      $region67: #{tpu_custom_call.1} parent=39 // pred_region
        %p718 = scmp.lt.s32.totalorder %s37, 1
        %s719 = scalar_select %p718, %s37, 1
        %s720 = smul.addr %s719, 4
        %s721 = scalar_lea.vmem %s12, %s720
      $region68: #{tpu_custom_call.1} parent=39 // pred_fallthru
        _
      // Predicated region
      $region69: #{tpu_custom_call.1} parent=39 // pred_check
        %p722 = pneg %p369
      $region70: #{tpu_custom_call.1} parent=39 // pred_check_branch
        %724 = sbr.rel (%p722) target = $region72
      $region71: #{tpu_custom_call.1} parent=39 // pred_region
        %p725 = scmp.lt.s32.totalorder %s37, 1
        %s726 = scalar_select %p725, %s37, 1
        %s727 = smul.addr %s726, 16
        %s728 = smul.addr %s727, 8
        %s729 = scalar_lea.vmem %s13, %s728
      $region72: #{tpu_custom_call.1} parent=39 // pred_fallthru
        _
      // Predicated region
      $region73: #{tpu_custom_call.1} parent=39 // pred_check
        %p730 = pneg %p395
      $region74: #{tpu_custom_call.1} parent=39 // pred_check_branch
        %732 = sbr.rel (%p730) target = $region76
      $region75: #{tpu_custom_call.1} parent=39 // pred_region
        %p733 = scmp.lt.s32.totalorder %s37, 1
        %s734 = scalar_select %p733, %s37, 1
        %s735 = smul.addr %s734, 4
        %s736 = scalar_lea.vmem %s14, %s735
      $region76: #{tpu_custom_call.1} parent=39 // pred_fallthru
        _
      // Predicated region
      $region77: #{tpu_custom_call.1} parent=39 // pred_check
        %p737 = pneg %p421
      $region78: #{tpu_custom_call.1} parent=39 // pred_check_branch
        %739 = sbr.rel (%p737) target = $region80
      $region79: #{tpu_custom_call.1} parent=39 // pred_region
        %p740 = scmp.lt.s32.totalorder %s37, 1
        %s741 = scalar_select %p740, %s37, 1
        %s742 = smul.addr %s741, 4
        %s743 = smul.addr %s742, 8
        %s744 = scalar_lea.vmem %s15, %s743
      $region80: #{tpu_custom_call.1} parent=39 // pred_fallthru
        _
      // Predicated region
      $region81: #{tpu_custom_call.1} parent=39 // pred_check
        %p745 = pneg %p447
      $region82: #{tpu_custom_call.1} parent=39 // pred_check_branch
        %747 = sbr.rel (%p745) target = $region84
      $region83: #{tpu_custom_call.1} parent=39 // pred_region
        %p748 = scmp.lt.s32.totalorder %s37, 1
        %s749 = scalar_select %p748, %s37, 1
        %s750 = scalar_lea.vmem %s16, %s749
      $region84: #{tpu_custom_call.1} parent=39 // pred_fallthru
        _
      // Predicated region
      $region85: #{tpu_custom_call.1} parent=39 // pred_check
        %p751 = pneg %p473
      $region86: #{tpu_custom_call.1} parent=39 // pred_check_branch
        %753 = sbr.rel (%p751) target = $region88
      $region87: #{tpu_custom_call.1} parent=39 // pred_region
        %p754 = scmp.lt.s32.totalorder %s37, 1
        %s755 = scalar_select %p754, %s37, 1
        %s756 = scalar_lea.vmem %s17, %s755
      $region88: #{tpu_custom_call.1} parent=39 // pred_fallthru
        _
      // Predicated region
      $region89: #{tpu_custom_call.1} parent=39 // pred_check
        %p757 = pneg %p499
      $region90: #{tpu_custom_call.1} parent=39 // pred_check_branch
        %759 = sbr.rel (%p757) target = $region92
      $region91: #{tpu_custom_call.1} parent=39 // pred_region
        %p760 = scmp.lt.s32.totalorder %s37, 1
        %s761 = scalar_select %p760, %s37, 1
        %s762 = scalar_lea.vmem %s18, %s761
      $region92: #{tpu_custom_call.1} parent=39 // pred_fallthru
        _
      // Predicated region
      $region93: #{tpu_custom_call.1} parent=39 // pred_check
        %p763 = pneg %p525
      $region94: #{tpu_custom_call.1} parent=39 // pred_check_branch
        %765 = sbr.rel (%p763) target = $region96
      $region95: #{tpu_custom_call.1} parent=39 // pred_region
        %p766 = scmp.lt.s32.totalorder %s37, 1
        %s767 = scalar_select %p766, %s37, 1
        %s768 = smul.addr %s767, 4
        %s769 = smul.addr %s768, 8
        %s770 = scalar_lea.vmem %s19, %s769
      $region96: #{tpu_custom_call.1} parent=39 // pred_fallthru
        _
      // Predicated region
      $region97: #{tpu_custom_call.1} parent=39 // pred_check
        %p771 = pneg %p551
      $region98: #{tpu_custom_call.1} parent=39 // pred_check_branch
        %773 = sbr.rel (%p771) target = $region100
      $region99: #{tpu_custom_call.1} parent=39 // pred_region
        %p774 = scmp.lt.s32.totalorder %s37, 1
        %s775 = scalar_select %p774, %s37, 1
        %s776 = scalar_lea.vmem %s20, %s775
      $region100: #{tpu_custom_call.1} parent=39 // pred_fallthru
        _
      // Predicated region
      $region101: #{tpu_custom_call.1} parent=39 // pred_check
        %p777 = pneg %p577
      $region102: #{tpu_custom_call.1} parent=39 // pred_check_branch
        %779 = sbr.rel (%p777) target = $region104
      $region103: #{tpu_custom_call.1} parent=39 // pred_region
        %p780 = scmp.lt.s32.totalorder %s37, 1
        %s781 = scalar_select %p780, %s37, 1
        %s782 = smul.addr %s781, 8
        %s783 = smul.addr %s782, 8
        %s784 = scalar_lea.vmem %s21, %s783
      $region104: #{tpu_custom_call.1} parent=39 // pred_fallthru
        _
      // Predicated region
      $region105: #{tpu_custom_call.1} parent=39 // pred_check
        %p785 = pneg %p603
      $region106: #{tpu_custom_call.1} parent=39 // pred_check_branch
        %787 = sbr.rel (%p785) target = $region108
      $region107: #{tpu_custom_call.1} parent=39 // pred_region
        %p788 = scmp.lt.s32.totalorder %s37, 1
        %s789 = scalar_select %p788, %s37, 1
        %s790 = scalar_lea.vmem %s22, %s789
      $region108: #{tpu_custom_call.1} parent=39 // pred_fallthru
        _
    $region40: #{tpu_custom_call.1} parent=5 // pred_fallthru
      _
    %p791 = scmp.le.s32.totalorder 1, %s29
    %p792 = scmp.lt.s32.totalorder %s29, 5
    %p793 = pnand %p791, %p792
    %p794 = pneg %p793
    // Predicated region
    $region109: #{tpu_custom_call.1} parent=5 // pred_check
      _
    $region110: #{tpu_custom_call.1} parent=5 // pred_check_branch
      %796 = sbr.rel (%p793) target = $region112
    $region111: #{tpu_custom_call.1} parent=5 // pred_region
      %s797 = ssub.s32 %s29, 1
      %p798 = scmp.lt.s32.totalorder %s38, 1
      %s799 = scalar_select %p798, %s38, 1
      %s800 = smul.addr %s799, 2
      %s801 = smul.addr %s800, 4
      %s802 = scalar_lea.vmem %s0, %s801
      %p803 = pneg %p67
      %p804 = pneg %p64
      %p805 = pneg %p88
      %p806 = pneg %p85
      %p807 = pneg %p109
      %p808 = pneg %p106
      %p809 = pneg %p130
      %p810 = pneg %p127
      %p811 = pneg %p151
      %p812 = pneg %p148
      %p813 = pneg %p172
      %p814 = pneg %p169
      %p815 = pneg %p193
      %p816 = pneg %p190
      %p817 = scmp.lt.s32.totalorder %s39, 1
      %s818 = scalar_select %p817, %s39, 1
      %s819 = scalar_lea.vmem %s7, %s818
      %p820 = pneg %p219
      %p821 = pneg %p216
      %p822 = scmp.lt.s32.totalorder %s39, 1
      %s823 = scalar_select %p822, %s39, 1
      %s824 = scalar_lea.vmem %s8, %s823
      %p825 = pneg %p245
      %p826 = pneg %p242
      %p827 = scmp.lt.s32.totalorder %s39, 1
      %s828 = scalar_select %p827, %s39, 1
      %s829 = smul.addr %s828, 16
      %s830 = smul.addr %s829, 8
      %s831 = scalar_lea.vmem %s9, %s830
      %p832 = pneg %p271
      %p833 = pneg %p268
      %p834 = scmp.lt.s32.totalorder %s39, 1
      %s835 = scalar_select %p834, %s39, 1
      %s836 = smul.addr %s835, 4
      %s837 = scalar_lea.vmem %s10, %s836
      %p838 = pneg %p297
      %p839 = pneg %p294
      %p840 = scmp.lt.s32.totalorder %s39, 1
      %s841 = scalar_select %p840, %s39, 1
      %s842 = smul.addr %s841, 16
      %s843 = smul.addr %s842, 8
      %s844 = scalar_lea.vmem %s11, %s843
      %p845 = pneg %p323
      %p846 = pneg %p320
      %p847 = scmp.lt.s32.totalorder %s39, 1
      %s848 = scalar_select %p847, %s39, 1
      %s849 = smul.addr %s848, 4
      %s850 = scalar_lea.vmem %s12, %s849
      %p851 = pneg %p349
      %p852 = pneg %p346
      %p853 = scmp.lt.s32.totalorder %s39, 1
      %s854 = scalar_select %p853, %s39, 1
      %s855 = smul.addr %s854, 16
      %s856 = smul.addr %s855, 8
      %s857 = scalar_lea.vmem %s13, %s856
      %p858 = pneg %p375
      %p859 = pneg %p372
      %p860 = scmp.lt.s32.totalorder %s39, 1
      %s861 = scalar_select %p860, %s39, 1
      %s862 = smul.addr %s861, 4
      %s863 = scalar_lea.vmem %s14, %s862
      %p864 = pneg %p401
      %p865 = pneg %p398
      %p866 = scmp.lt.s32.totalorder %s39, 1
      %s867 = scalar_select %p866, %s39, 1
      %s868 = smul.addr %s867, 4
      %s869 = smul.addr %s868, 8
      %s870 = scalar_lea.vmem %s15, %s869
      %p871 = pneg %p427
      %p872 = pneg %p424
      %p873 = scmp.lt.s32.totalorder %s39, 1
      %s874 = scalar_select %p873, %s39, 1
      %s875 = scalar_lea.vmem %s16, %s874
      %p876 = pneg %p453
      %p877 = pneg %p450
      %p878 = scmp.lt.s32.totalorder %s39, 1
      %s879 = scalar_select %p878, %s39, 1
      %s880 = scalar_lea.vmem %s17, %s879
      %p881 = pneg %p479
      %p882 = pneg %p476
      %p883 = scmp.lt.s32.totalorder %s39, 1
      %s884 = scalar_select %p883, %s39, 1
      %s885 = scalar_lea.vmem %s18, %s884
      %p886 = pneg %p505
      %p887 = pneg %p502
      %p888 = scmp.lt.s32.totalorder %s39, 1
      %s889 = scalar_select %p888, %s39, 1
      %s890 = smul.addr %s889, 4
      %s891 = smul.addr %s890, 8
      %s892 = scalar_lea.vmem %s19, %s891
      %p893 = pneg %p531
      %p894 = pneg %p528
      %p895 = scmp.lt.s32.totalorder %s39, 1
      %s896 = scalar_select %p895, %s39, 1
      %s897 = scalar_lea.vmem %s20, %s896
      %p898 = pneg %p557
      %p899 = pneg %p554
      %p900 = scmp.lt.s32.totalorder %s39, 1
      %s901 = scalar_select %p900, %s39, 1
      %s902 = smul.addr %s901, 8
      %s903 = smul.addr %s902, 8
      %s904 = scalar_lea.vmem %s21, %s903
      %p905 = pneg %p583
      %p906 = pneg %p580
      %p907 = scmp.lt.s32.totalorder %s39, 1
      %s908 = scalar_select %p907, %s39, 1
      %s909 = scalar_lea.vmem %s22, %s908
      %p910 = pneg %p609
      %p911 = pneg %p606
      %p912 = pneg %p635
      %p913 = pneg %p632
      %p914 = scmp.lt.s32.totalorder %s38, 1
      %s915 = scalar_select %p914, %s38, 1
      %s916 = smul.addr %s915, 8
      %s917 = scalar_lea.vmem %s23, %s916
      %p918 = scmp.lt.s32.totalorder %s38, 1
      %s919 = scalar_select %p918, %s38, 1
      %s920 = smul.addr %s919, 2
      %s921 = smul.addr %s920, 4
      %s922 = scalar_lea.vmem %s0, %s921
      %p923 = scmp.lt.s32.totalorder %s39, 1
      %s924 = scalar_select %p923, %s39, 1
      %s925 = scalar_lea.vmem %s7, %s924
      %p926 = scmp.lt.s32.totalorder %s39, 1
      %s927 = scalar_select %p926, %s39, 1
      %s928 = scalar_lea.vmem %s8, %s927
      %p929 = scmp.lt.s32.totalorder %s39, 1
      %s930 = scalar_select %p929, %s39, 1
      %s931 = smul.addr %s930, 16
      %s932 = smul.addr %s931, 8
      %s933 = scalar_lea.vmem %s9, %s932
      %p934 = scmp.lt.s32.totalorder %s39, 1
      %s935 = scalar_select %p934, %s39, 1
      %s936 = smul.addr %s935, 4
      %s937 = scalar_lea.vmem %s10, %s936
      %p938 = scmp.lt.s32.totalorder %s39, 1
      %s939 = scalar_select %p938, %s39, 1
      %s940 = smul.addr %s939, 16
      %s941 = smul.addr %s940, 8
      %s942 = scalar_lea.vmem %s11, %s941
      %p943 = scmp.lt.s32.totalorder %s39, 1
      %s944 = scalar_select %p943, %s39, 1
      %s945 = smul.addr %s944, 4
      %s946 = scalar_lea.vmem %s12, %s945
      %p947 = scmp.lt.s32.totalorder %s39, 1
      %s948 = scalar_select %p947, %s39, 1
      %s949 = smul.addr %s948, 16
      %s950 = smul.addr %s949, 8
      %s951 = scalar_lea.vmem %s13, %s950
      %p952 = scmp.lt.s32.totalorder %s39, 1
      %s953 = scalar_select %p952, %s39, 1
      %s954 = smul.addr %s953, 4
      %s955 = scalar_lea.vmem %s14, %s954
      %p956 = scmp.lt.s32.totalorder %s39, 1
      %s957 = scalar_select %p956, %s39, 1
      %s958 = smul.addr %s957, 4
      %s959 = smul.addr %s958, 8
      %s960 = scalar_lea.vmem %s15, %s959
      %p961 = scmp.lt.s32.totalorder %s39, 1
      %s962 = scalar_select %p961, %s39, 1
      %s963 = scalar_lea.vmem %s16, %s962
      %p964 = scmp.lt.s32.totalorder %s39, 1
      %s965 = scalar_select %p964, %s39, 1
      %s966 = scalar_lea.vmem %s17, %s965
      %p967 = scmp.lt.s32.totalorder %s39, 1
      %s968 = scalar_select %p967, %s39, 1
      %s969 = scalar_lea.vmem %s18, %s968
      %p970 = scmp.lt.s32.totalorder %s39, 1
      %s971 = scalar_select %p970, %s39, 1
      %s972 = smul.addr %s971, 4
      %s973 = smul.addr %s972, 8
      %s974 = scalar_lea.vmem %s19, %s973
      %p975 = scmp.lt.s32.totalorder %s39, 1
      %s976 = scalar_select %p975, %s39, 1
      %s977 = scalar_lea.vmem %s20, %s976
      %p978 = scmp.lt.s32.totalorder %s39, 1
      %s979 = scalar_select %p978, %s39, 1
      %s980 = smul.addr %s979, 8
      %s981 = smul.addr %s980, 8
      %s982 = scalar_lea.vmem %s21, %s981
      %p983 = scmp.lt.s32.totalorder %s39, 1
      %s984 = scalar_select %p983, %s39, 1
      %s985 = scalar_lea.vmem %s22, %s984
      %p986 = scmp.lt.s32.totalorder %s38, 1
      %s987 = scalar_select %p986, %s38, 1
      %s988 = smul.addr %s987, 8
      %s989 = scalar_lea.vmem %s23, %s988
      %p990 = scmp.eq.s32.totalorder %s39, 0
      // Predicated region
      $region113: #{tpu_custom_call.1} parent=111 // pred_check
        %p991 = pneg %p990
      $region114: #{tpu_custom_call.1} parent=111 // pred_check_branch
        %993 = sbr.rel (%p991) target = $region116
      $region115: #{tpu_custom_call.1} parent=111 // pred_region
        %v994 = vld [vmem:[%s922] sm:$0xff]
        %v995 = vld [vmem:[%s1] sm:$0xff]
        %v996 = vld [vmem:[%s1 + $0x8] sm:$0xff]
        %v997 = vld [vmem:[%s1 + $0x10] sm:$0xff]
        %v998 = vld [vmem:[%s1 + $0x18] sm:$0xff]
        %v999 = vld [vmem:[%s1 + $0x20] sm:$0xff]
        %v1000 = vld [vmem:[%s1 + $0x28] sm:$0xff]
        %v1001 = vld [vmem:[%s1 + $0x30] sm:$0xff]
        %v1002 = vld [vmem:[%s1 + $0x38] sm:$0xff]
        %v1003 = vld [vmem:[%s1 + $0x40] sm:$0xff]
        %v1004 = vld [vmem:[%s1 + $0x48] sm:$0xff]
        %v1005 = vld [vmem:[%s1 + $0x50] sm:$0xff]
        %v1006 = vld [vmem:[%s1 + $0x58] sm:$0xff]
        %v1007 = vld [vmem:[%s1 + $0x60] sm:$0xff]
        %v1008 = vld [vmem:[%s1 + $0x68] sm:$0xff]
        %v1009 = vld [vmem:[%s1 + $0x70] sm:$0xff]
        %v1010 = vld [vmem:[%s1 + $0x78] sm:$0xff]
        %v1011 = vld [vmem:[%s1 + $0x80] sm:$0xff]
        %v1012 = vld [vmem:[%s1 + $0x88] sm:$0xff]
        %v1013 = vld [vmem:[%s1 + $0x90] sm:$0xff]
        %v1014 = vld [vmem:[%s1 + $0x98] sm:$0xff]
        %v1015 = vld [vmem:[%s1 + $0xa0] sm:$0xff]
        %v1016 = vld [vmem:[%s1 + $0xa8] sm:$0xff]
        %v1017 = vld [vmem:[%s1 + $0xb0] sm:$0xff]
        %v1018 = vld [vmem:[%s1 + $0xb8] sm:$0xff]
        %v1019 = vld [vmem:[%s2] sm:$0x1]
        %v1020 = vld [vmem:[%s3] sm:$0x1]
        %v1021 = vadd.f32 %v1019, %v1020
        %v1022 = vld [vmem:[%s4] sm:$0xf]
        %v1024 = vcombine.high %v994, %v994
        %vm1025 = vcmask 523264
        %v1026 = vsel %vm1025, %v1024, 0
        %1028 = vmatprep.subr.mxu0 0.0
        %1029 = vmatpush1.msra.mxu0 %v995
        %1030 = vmatprep.subr.mxu0 0.0
        %1031 = vmatpush1.msra.mxu0 %v996
        %1032 = vmatprep.subr.mxu0 0.0
        %1033 = vmatpush1.msra.mxu0 %v997
        %1034 = vmatprep.subr.mxu0 0.0
        %1035 = vmatpush1.msra.mxu0 %v998
        %1036 = vmatprep.subr.mxu0 0.0
        %1037 = vmatpush1.msra.mxu0 %v999
        %1038 = vmatprep.subr.mxu0 0.0
        %1039 = vmatpush1.msra.mxu0 %v1000
        %1040 = vmatprep.subr.mxu0 0.0
        %1041 = vmatpush1.msra.mxu0 %v1001
        %1042 = vmatprep.subr.mxu0 0.0
        %1043 = vmatpush1.msra.mxu0 %v1002
        %1044 = vmatprep.subr.mxu0 0.0
        %1045 = vmatpush1.msra.mxu0 %v1003
        %1046 = vmatprep.subr.mxu0 0.0
        %1047 = vmatpush1.msra.mxu0 %v1004
        %1048 = vmatprep.subr.mxu0 0.0
        %1049 = vmatpush1.msra.mxu0 %v1005
        %1050 = vmatprep.subr.mxu0 0.0
        %1051 = vmatpush1.msra.mxu0 %v1006
        %1052 = vmatprep.subr.mxu0 0.0
        %1053 = vmatpush1.msra.mxu0 %v1007
        %1054 = vmatprep.subr.mxu0 0.0
        %1055 = vmatpush1.msra.mxu0 %v1008
        %1056 = vmatprep.subr.mxu0 0.0
        %1057 = vmatpush1.msra.mxu0 %v1009
        %1058 = vmatprep.subr.mxu0 0.0
        %1059 = vmatpush1.msra.mxu0 %v1010
        %1060 = vmatprep.subr.mxu0 0.0
        %1061 = vmatpush1.msra.mxu0 %v1011
        %1062 = vmatprep.subr.mxu0 0.0
        %1063 = vmatpush1.msra.mxu0 %v1012
        %1064 = vmatprep.subr.mxu0 0.0
        %1065 = vmatpush1.msra.mxu0 %v1013
        %1066 = vmatprep.subr.mxu0 0.0
        %1067 = vmatpush1.msra.mxu0 %v1014
        %1068 = vmatprep.subr.mxu0 0.0
        %1069 = vmatpush1.msra.mxu0 %v1015
        %1070 = vmatprep.subr.mxu0 0.0
        %1071 = vmatpush1.msra.mxu0 %v1016
        %1072 = vmatprep.subr.mxu0 0.0
        %1073 = vmatpush1.msra.mxu0 %v1017
        %1074 = vmatprep.subr.mxu0 0.0
        %1075 = vmatpush1.msra.mxu0 %v1018
        %1076 = vmatprep.subr.mxu0 0.0
        %1077 = vmatpush1.msra.mxu0 0.0
        %1078 = vmatprep.subr.mxu0 0.0
        %1079 = vmatpush1.msra.mxu0 0.0
        %1080 = vmatprep.subr.mxu0 0.0
        %1081 = vmatpush1.msra.mxu0 0.0
        %1082 = vmatprep.subr.mxu0 0.0
        %1083 = vmatpush1.msra.mxu0 0.0
        %1084 = vmatprep.subr.mxu0 0.0
        %1085 = vmatpush1.msra.mxu0 0.0
        %1086 = vmatprep.subr.mxu0 0.0
        %1087 = vmatpush1.msra.mxu0 0.0
        %1088 = vmatprep.subr.mxu0 0.0
        %1089 = vmatpush1.msra.mxu0 0.0
        %1090 = vmatprep.subr.mxu0 0.0
        %1091 = vmatpush1.msra.mxu0 0.0
        %1092 = vmatprep.mubr.f32.mxu0 %v1026
        %1093 = vmatmul.mubr.f32.gmra.mrb[0].mxu0 %v994
        %v1094 = vpop.f32.mrb[0].mxu0
        %v1095 = vadd.f32 %v1022, %v1094
        %v1096 = vpop.f32.mrb[0].mxu0
        %1097 = vdwg.mxu0
        %v1099 = vrot.slane %v1095, 7
        %vm1101 = vcmask 1040384
        %v1102 = vsel %vm1101, %v1021, %v1099
        %v1103 = vld [vmem:[%s5] sm:$0x1]
        %v1104 = vld [vmem:[%s6] sm:$0x1]
        %vm1105 = vcmask 258048
        %v1106 = vsel %vm1105, %v1102, 0.0
        %1107 = vadd.xlane.f32.xlu0 %v1106
        %v1108 = vpop.xlane.xlu0 %1107
        %v1109 = vrcp.pop 32.0
        %v1110 = vmul.f32 %v1108, %v1109
        %v1111 = vsub.f32 %v1102, %v1110
        %v1112 = vmul.f32 %v1111, %v1111
        %v1113 = vsel %vm1105, %v1112, 0.0
        %1114 = vadd.xlane.f32.xlu0 %v1113
        %v1115 = vpop.xlane.xlu0 %1114
        %v1116 = vmul.f32 %v1115, %v1109
        %v1117 = vadd.f32 %v1116, 1e-05
        %v1118 = vrsqrt.pop %v1117
        %v1119 = vmul.f32 %v1111, %v1118
        %v1121 = vlaneseq
        %v1122 = vshrl.u32 %v1121, 7
        %v1123 = vsub.s32 0, %v1122
        %v1124 = vrot.slane %v1103, %v1123
        %v1126 = vmul.f32 %v1119, %v1124
        %v1128 = vlaneseq
        %v1129 = vshrl.u32 %v1128, 7
        %v1130 = vsub.s32 0, %v1129
        %v1131 = vrot.slane %v1104, %v1130
        %v1133 = vadd.f32 %v1126, %v1131
        %1134 = vst.msk [vmem:[#allocation2] sm:$0x1f] %vm1105, %v1133
      $region116: #{tpu_custom_call.1} parent=111 // pred_fallthru
        _
      %v1135 = vld [vmem:[#allocation2] sm:$0x1f]
      %v1136 = vld [vmem:[%s925] sm:$0x1]
      %v1137 = vld [vmem:[%s928] sm:$0x1]
      %vm1138 = vcmask 258048
      %v1139 = vsel %vm1138, %v1135, 0.0
      %1140 = vadd.xlane.f32.xlu0 %v1139
      %v1141 = vpop.xlane.xlu0 %1140
      %v1142 = vrcp.pop 32.0
      %v1143 = vmul.f32 %v1141, %v1142
      %v1144 = vsub.f32 %v1135, %v1143
      %v1145 = vmul.f32 %v1144, %v1144
      %v1146 = vsel %vm1138, %v1145, 0.0
      %1147 = vadd.xlane.f32.xlu0 %v1146
      %v1148 = vpop.xlane.xlu0 %1147
      %v1149 = vmul.f32 %v1148, %v1142
      %v1150 = vadd.f32 %v1149, 1e-05
      %v1151 = vrsqrt.pop %v1150
      %v1152 = vmul.f32 %v1144, %v1151
      %v1154 = vlaneseq
      %v1155 = vshrl.u32 %v1154, 7
      %v1156 = vsub.s32 0, %v1155
      %v1157 = vrot.slane %v1136, %v1156
      %v1159 = vmul.f32 %v1152, %v1157
      %v1161 = vlaneseq
      %v1162 = vshrl.u32 %v1161, 7
      %v1163 = vsub.s32 0, %v1162
      %v1164 = vrot.slane %v1137, %v1163
      %v1166 = vadd.f32 %v1159, %v1164
      %v1167 = vld [vmem:[%s933] sm:$0xff]
      %v1168 = vld [vmem:[%s933 + $0x8] sm:$0xff]
      %v1169 = vld [vmem:[%s933 + $0x10] sm:$0xff]
      %v1170 = vld [vmem:[%s933 + $0x18] sm:$0xff]
      %v1171 = vld [vmem:[%s937] sm:$0x1]
      %v1173 = vlaneseq
      %v1174 = vshrl.u32 %v1173, 7
      %v1175 = vsub.s32 0, %v1174
      %v1176 = vrot.slane %v1171, %v1175
      %vm1178 = vcmask 261120
      %v1180 = vsel %vm1178, %v1166, 0
      %1182 = vmatprep.subr.mxu0 0.0
      %1183 = vmatpush1.msra.mxu0 %v1167
      %1184 = vmatprep.subr.mxu0 0.0
      %1185 = vmatpush1.msra.mxu0 %v1168
      %1186 = vmatprep.subr.mxu0 0.0
      %1187 = vmatpush1.msra.mxu0 %v1169
      %1188 = vmatprep.subr.mxu0 0.0
      %1189 = vmatpush1.msra.mxu0 %v1170
      %1190 = vmatprep.subr.mxu0 0.0
      %1191 = vmatpush1.msra.mxu0 0.0
      %1192 = vmatprep.subr.mxu0 0.0
      %1193 = vmatpush1.msra.mxu0 0.0
      %1194 = vmatprep.subr.mxu0 0.0
      %1195 = vmatpush1.msra.mxu0 0.0
      %1196 = vmatprep.subr.mxu0 0.0
      %1197 = vmatpush1.msra.mxu0 0.0
      %1198 = vmatprep.subr.mxu0 0.0
      %1199 = vmatpush1.msra.mxu0 0.0
      %1200 = vmatprep.subr.mxu0 0.0
      %1201 = vmatpush1.msra.mxu0 0.0
      %1202 = vmatprep.subr.mxu0 0.0
      %1203 = vmatpush1.msra.mxu0 0.0
      %1204 = vmatprep.subr.mxu0 0.0
      %1205 = vmatpush1.msra.mxu0 0.0
      %1206 = vmatprep.subr.mxu0 0.0
      %1207 = vmatpush1.msra.mxu0 0.0
      %1208 = vmatprep.subr.mxu0 0.0
      %1209 = vmatpush1.msra.mxu0 0.0
      %1210 = vmatprep.subr.mxu0 0.0
      %1211 = vmatpush1.msra.mxu0 0.0
      %1212 = vmatprep.subr.mxu0 0.0
      %1213 = vmatpush1.msra.mxu0 0.0
      %1214 = vmatprep.subr.mxu0 0.0
      %1215 = vmatpush1.msra.mxu0 0.0
      %1216 = vmatprep.subr.mxu0 0.0
      %1217 = vmatpush1.msra.mxu0 0.0
      %1218 = vmatprep.subr.mxu0 0.0
      %1219 = vmatpush1.msra.mxu0 0.0
      %1220 = vmatprep.subr.mxu0 0.0
      %1221 = vmatpush1.msra.mxu0 0.0
      %1222 = vmatprep.subr.mxu0 0.0
      %1223 = vmatpush1.msra.mxu0 0.0
      %1224 = vmatprep.subr.mxu0 0.0
      %1225 = vmatpush1.msra.mxu0 0.0
      %1226 = vmatprep.subr.mxu0 0.0
      %1227 = vmatpush1.msra.mxu0 0.0
      %1228 = vmatprep.subr.mxu0 0.0
      %1229 = vmatpush1.msra.mxu0 0.0
      %1230 = vmatprep.subr.mxu0 0.0
      %1231 = vmatpush1.msra.mxu0 0.0
      %1232 = vmatprep.subr.mxu0 0.0
      %1233 = vmatpush1.msra.mxu0 0.0
      %1234 = vmatprep.subr.mxu0 0.0
      %1235 = vmatpush1.msra.mxu0 0.0
      %1236 = vmatprep.subr.mxu0 0.0
      %1237 = vmatpush1.msra.mxu0 0.0
      %1238 = vmatprep.subr.mxu0 0.0
      %1239 = vmatpush1.msra.mxu0 0.0
      %1240 = vmatprep.subr.mxu0 0.0
      %1241 = vmatpush1.msra.mxu0 0.0
      %1242 = vmatprep.subr.mxu0 0.0
      %1243 = vmatpush1.msra.mxu0 0.0
      %1244 = vmatprep.subr.mxu0 0.0
      %1245 = vmatpush1.msra.mxu0 0.0
      %1246 = vmatprep.mubr.f32.mxu0 0.0
      %1247 = vmatmul.mubr.f32.gmra.mrb[0].mxu0 %v1180
      %v1248 = vpop.f32.mrb[0].mxu0
      %v1249 = vadd.f32 %v1176, %v1248
      %v1250 = vpop.f32.mrb[0].mxu0
      %1251 = vdwg.mxu0
      %v1252 = vmul.f32 %v1249, 0.35355338
      %v1253 = vld [vmem:[%s942] sm:$0xff]
      %v1254 = vld [vmem:[%s942 + $0x8] sm:$0xff]
      %v1255 = vld [vmem:[%s942 + $0x10] sm:$0xff]
      %v1256 = vld [vmem:[%s942 + $0x18] sm:$0xff]
      %v1257 = vld [vmem:[%s946] sm:$0x1]
      %v1259 = vlaneseq
      %v1260 = vshrl.u32 %v1259, 7
      %v1261 = vsub.s32 0, %v1260
      %v1262 = vrot.slane %v1257, %v1261
      %1264 = vmatprep.subr.mxu0 0.0
      %1265 = vmatpush1.msra.mxu0 %v1253
      %1266 = vmatprep.subr.mxu0 0.0
      %1267 = vmatpush1.msra.mxu0 %v1254
      %1268 = vmatprep.subr.mxu0 0.0
      %1269 = vmatpush1.msra.mxu0 %v1255
      %1270 = vmatprep.subr.mxu0 0.0
      %1271 = vmatpush1.msra.mxu0 %v1256
      %1272 = vmatprep.subr.mxu0 0.0
      %1273 = vmatpush1.msra.mxu0 0.0
      %1274 = vmatprep.subr.mxu0 0.0
      %1275 = vmatpush1.msra.mxu0 0.0
      %1276 = vmatprep.subr.mxu0 0.0
      %1277 = vmatpush1.msra.mxu0 0.0
      %1278 = vmatprep.subr.mxu0 0.0
      %1279 = vmatpush1.msra.mxu0 0.0
      %1280 = vmatprep.subr.mxu0 0.0
      %1281 = vmatpush1.msra.mxu0 0.0
      %1282 = vmatprep.subr.mxu0 0.0
      %1283 = vmatpush1.msra.mxu0 0.0
      %1284 = vmatprep.subr.mxu0 0.0
      %1285 = vmatpush1.msra.mxu0 0.0
      %1286 = vmatprep.subr.mxu0 0.0
      %1287 = vmatpush1.msra.mxu0 0.0
      %1288 = vmatprep.subr.mxu0 0.0
      %1289 = vmatpush1.msra.mxu0 0.0
      %1290 = vmatprep.subr.mxu0 0.0
      %1291 = vmatpush1.msra.mxu0 0.0
      %1292 = vmatprep.subr.mxu0 0.0
      %1293 = vmatpush1.msra.mxu0 0.0
      %1294 = vmatprep.subr.mxu0 0.0
      %1295 = vmatpush1.msra.mxu0 0.0
      %1296 = vmatprep.subr.mxu0 0.0
      %1297 = vmatpush1.msra.mxu0 0.0
      %1298 = vmatprep.subr.mxu0 0.0
      %1299 = vmatpush1.msra.mxu0 0.0
      %1300 = vmatprep.subr.mxu0 0.0
      %1301 = vmatpush1.msra.mxu0 0.0
      %1302 = vmatprep.subr.mxu0 0.0
      %1303 = vmatpush1.msra.mxu0 0.0
      %1304 = vmatprep.subr.mxu0 0.0
      %1305 = vmatpush1.msra.mxu0 0.0
      %1306 = vmatprep.subr.mxu0 0.0
      %1307 = vmatpush1.msra.mxu0 0.0
      %1308 = vmatprep.subr.mxu0 0.0
      %1309 = vmatpush1.msra.mxu0 0.0
      %1310 = vmatprep.subr.mxu0 0.0
      %1311 = vmatpush1.msra.mxu0 0.0
      %1312 = vmatprep.subr.mxu0 0.0
      %1313 = vmatpush1.msra.mxu0 0.0
      %1314 = vmatprep.subr.mxu0 0.0
      %1315 = vmatpush1.msra.mxu0 0.0
      %1316 = vmatprep.subr.mxu0 0.0
      %1317 = vmatpush1.msra.mxu0 0.0
      %1318 = vmatprep.subr.mxu0 0.0
      %1319 = vmatpush1.msra.mxu0 0.0
      %1320 = vmatprep.subr.mxu0 0.0
      %1321 = vmatpush1.msra.mxu0 0.0
      %1322 = vmatprep.subr.mxu0 0.0
      %1323 = vmatpush1.msra.mxu0 0.0
      %1324 = vmatprep.subr.mxu0 0.0
      %1325 = vmatpush1.msra.mxu0 0.0
      %1326 = vmatprep.subr.mxu0 0.0
      %1327 = vmatpush1.msra.mxu0 0.0
      %1328 = vmatprep.mubr.f32.mxu0 0.0
      %1329 = vmatmul.mubr.f32.gmra.mrb[0].mxu0 %v1180
      %v1330 = vpop.f32.mrb[0].mxu0
      %v1331 = vadd.f32 %v1262, %v1330
      %v1332 = vpop.f32.mrb[0].mxu0
      %1333 = vdwg.mxu0
      %v1334 = vld [vmem:[%s951] sm:$0xff]
      %v1335 = vld [vmem:[%s951 + $0x8] sm:$0xff]
      %v1336 = vld [vmem:[%s951 + $0x10] sm:$0xff]
      %v1337 = vld [vmem:[%s951 + $0x18] sm:$0xff]
      %v1338 = vld [vmem:[%s955] sm:$0x1]
      %v1340 = vlaneseq
      %v1341 = vshrl.u32 %v1340, 7
      %v1342 = vsub.s32 0, %v1341
      %v1343 = vrot.slane %v1338, %v1342
      %1345 = vmatprep.subr.mxu0 0.0
      %1346 = vmatpush1.msra.mxu0 %v1334
      %1347 = vmatprep.subr.mxu0 0.0
      %1348 = vmatpush1.msra.mxu0 %v1335
      %1349 = vmatprep.subr.mxu0 0.0
      %1350 = vmatpush1.msra.mxu0 %v1336
      %1351 = vmatprep.subr.mxu0 0.0
      %1352 = vmatpush1.msra.mxu0 %v1337
      %1353 = vmatprep.subr.mxu0 0.0
      %1354 = vmatpush1.msra.mxu0 0.0
      %1355 = vmatprep.subr.mxu0 0.0
      %1356 = vmatpush1.msra.mxu0 0.0
      %1357 = vmatprep.subr.mxu0 0.0
      %1358 = vmatpush1.msra.mxu0 0.0
      %1359 = vmatprep.subr.mxu0 0.0
      %1360 = vmatpush1.msra.mxu0 0.0
      %1361 = vmatprep.subr.mxu0 0.0
      %1362 = vmatpush1.msra.mxu0 0.0
      %1363 = vmatprep.subr.mxu0 0.0
      %1364 = vmatpush1.msra.mxu0 0.0
      %1365 = vmatprep.subr.mxu0 0.0
      %1366 = vmatpush1.msra.mxu0 0.0
      %1367 = vmatprep.subr.mxu0 0.0
      %1368 = vmatpush1.msra.mxu0 0.0
      %1369 = vmatprep.subr.mxu0 0.0
      %1370 = vmatpush1.msra.mxu0 0.0
      %1371 = vmatprep.subr.mxu0 0.0
      %1372 = vmatpush1.msra.mxu0 0.0
      %1373 = vmatprep.subr.mxu0 0.0
      %1374 = vmatpush1.msra.mxu0 0.0
      %1375 = vmatprep.subr.mxu0 0.0
      %1376 = vmatpush1.msra.mxu0 0.0
      %1377 = vmatprep.subr.mxu0 0.0
      %1378 = vmatpush1.msra.mxu0 0.0
      %1379 = vmatprep.subr.mxu0 0.0
      %1380 = vmatpush1.msra.mxu0 0.0
      %1381 = vmatprep.subr.mxu0 0.0
      %1382 = vmatpush1.msra.mxu0 0.0
      %1383 = vmatprep.subr.mxu0 0.0
      %1384 = vmatpush1.msra.mxu0 0.0
      %1385 = vmatprep.subr.mxu0 0.0
      %1386 = vmatpush1.msra.mxu0 0.0
      %1387 = vmatprep.subr.mxu0 0.0
      %1388 = vmatpush1.msra.mxu0 0.0
      %1389 = vmatprep.subr.mxu0 0.0
      %1390 = vmatpush1.msra.mxu0 0.0
      %1391 = vmatprep.subr.mxu0 0.0
      %1392 = vmatpush1.msra.mxu0 0.0
      %1393 = vmatprep.subr.mxu0 0.0
      %1394 = vmatpush1.msra.mxu0 0.0
      %1395 = vmatprep.subr.mxu0 0.0
      %1396 = vmatpush1.msra.mxu0 0.0
      %1397 = vmatprep.subr.mxu0 0.0
      %1398 = vmatpush1.msra.mxu0 0.0
      %1399 = vmatprep.subr.mxu0 0.0
      %1400 = vmatpush1.msra.mxu0 0.0
      %1401 = vmatprep.subr.mxu0 0.0
      %1402 = vmatpush1.msra.mxu0 0.0
      %1403 = vmatprep.subr.mxu0 0.0
      %1404 = vmatpush1.msra.mxu0 0.0
      %1405 = vmatprep.subr.mxu0 0.0
      %1406 = vmatpush1.msra.mxu0 0.0
      %1407 = vmatprep.subr.mxu0 0.0
      %1408 = vmatpush1.msra.mxu0 0.0
      %1409 = vmatprep.mubr.f32.mxu0 0.0
      %1410 = vmatmul.mubr.f32.gmra.mrb[0].mxu0 %v1180
      %v1411 = vpop.f32.mrb[0].mxu0
      %v1412 = vadd.f32 %v1343, %v1411
      %v1413 = vpop.f32.mrb[0].mxu0
      %1414 = vdwg.mxu0
      %vm1415 = vcmask 64512
      %v1417 = vsel %vm1415, %v1252, 0
      %v1420 = vsel %vm1415, %v1331, 0
      %1422 = vmatprep.subr.mxu0 0.0
      %1423 = vmatpush1.xpose.msra.mxu0 %v1420
      %1424 = vmatprep.subr.mxu0 0.0
      %1425 = vmatpush1.xpose.msra.mxu0 0.0
      %1426 = vmatprep.subr.mxu0 0.0
      %1427 = vmatpush1.xpose.msra.mxu0 0.0
      %1428 = vmatprep.subr.mxu0 0.0
      %1429 = vmatpush1.xpose.msra.mxu0 0.0
      %1430 = vmatprep.subr.mxu0 0.0
      %1431 = vmatpush1.xpose.msra.mxu0 0.0
      %1432 = vmatprep.subr.mxu0 0.0
      %1433 = vmatpush1.xpose.msra.mxu0 0.0
      %1434 = vmatprep.subr.mxu0 0.0
      %1435 = vmatpush1.xpose.msra.mxu0 0.0
      %1436 = vmatprep.subr.mxu0 0.0
      %1437 = vmatpush1.xpose.msra.mxu0 0.0
      %1438 = vmatprep.subr.mxu0 0.0
      %1439 = vmatpush1.xpose.msra.mxu0 0.0
      %1440 = vmatprep.subr.mxu0 0.0
      %1441 = vmatpush1.xpose.msra.mxu0 0.0
      %1442 = vmatprep.subr.mxu0 0.0
      %1443 = vmatpush1.xpose.msra.mxu0 0.0
      %1444 = vmatprep.subr.mxu0 0.0
      %1445 = vmatpush1.xpose.msra.mxu0 0.0
      %1446 = vmatprep.subr.mxu0 0.0
      %1447 = vmatpush1.xpose.msra.mxu0 0.0
      %1448 = vmatprep.subr.mxu0 0.0
      %1449 = vmatpush1.xpose.msra.mxu0 0.0
      %1450 = vmatprep.subr.mxu0 0.0
      %1451 = vmatpush1.xpose.msra.mxu0 0.0
      %1452 = vmatprep.subr.mxu0 0.0
      %1453 = vmatpush1.xpose.msra.mxu0 0.0
      %1454 = vmatprep.subr.mxu0 0.0
      %1455 = vmatpush1.xpose.msra.mxu0 0.0
      %1456 = vmatprep.subr.mxu0 0.0
      %1457 = vmatpush1.xpose.msra.mxu0 0.0
      %1458 = vmatprep.subr.mxu0 0.0
      %1459 = vmatpush1.xpose.msra.mxu0 0.0
      %1460 = vmatprep.subr.mxu0 0.0
      %1461 = vmatpush1.xpose.msra.mxu0 0.0
      %1462 = vmatprep.subr.mxu0 0.0
      %1463 = vmatpush1.xpose.msra.mxu0 0.0
      %1464 = vmatprep.subr.mxu0 0.0
      %1465 = vmatpush1.xpose.msra.mxu0 0.0
      %1466 = vmatprep.subr.mxu0 0.0
      %1467 = vmatpush1.xpose.msra.mxu0 0.0
      %1468 = vmatprep.subr.mxu0 0.0
      %1469 = vmatpush1.xpose.msra.mxu0 0.0
      %1470 = vmatprep.subr.mxu0 0.0
      %1471 = vmatpush1.xpose.msra.mxu0 0.0
      %1472 = vmatprep.subr.mxu0 0.0
      %1473 = vmatpush1.xpose.msra.mxu0 0.0
      %1474 = vmatprep.subr.mxu0 0.0
      %1475 = vmatpush1.xpose.msra.mxu0 0.0
      %1476 = vmatprep.subr.mxu0 0.0
      %1477 = vmatpush1.xpose.msra.mxu0 0.0
      %1478 = vmatprep.subr.mxu0 0.0
      %1479 = vmatpush1.xpose.msra.mxu0 0.0
      %1480 = vmatprep.subr.mxu0 0.0
      %1481 = vmatpush1.xpose.msra.mxu0 0.0
      %1482 = vmatprep.subr.mxu0 0.0
      %1483 = vmatpush1.xpose.msra.mxu0 0.0
      %1484 = vmatprep.subr.mxu0 0.0
      %1485 = vmatpush1.xpose.msra.mxu0 0.0
      %1486 = vmatprep.mubr.f32.mxu0 0.0
      %1487 = vmatmul.mubr.f32.gmra.mrb[0].mxu0 %v1417
      %v1488 = vpop.f32.mrb[0].mxu0
      %v1489 = vadd.f32 0.0, %v1488
      %v1490 = vpop.f32.mrb[0].mxu0
      %1491 = vdwg.mxu0
      %vm1492 = vcmask 36864
      %v1493 = vsel %vm1492, %v1489, -inf
      %1494 = vmax.xlane.f32.xlu0 %v1493
      %v1495 = vpop.xlane.xlu0 %1494
      %v1496 = vsub.f32 %v1489, %v1495
      %v1497 = vmul.f32 %v1496, 1.442695
      %v1498 = vpow.pop %v1497
      %v1499 = vsel %vm1492, %v1498, 0.0
      %1500 = vadd.xlane.f32.xlu0 %v1499
      %v1501 = vpop.xlane.xlu0 %1500
      %v1502 = vrcp.pop %v1501
      %v1503 = vmul.f32 %v1498, %v1502
      %vm1504 = vcmask 39936
      %v1506 = vsel %vm1504, %v1503, 0
      %vm1508 = vcmask 1044480
      %v1510 = vsel %vm1508, %v1412, 0
      %1512 = vmatprep.subr.mxu0 0.0
      %1513 = vmatpush1.msra.mxu0 %v1510
      %1514 = vmatprep.subr.mxu0 0.0
      %1515 = vmatpush1.msra.mxu0 0.0
      %1516 = vmatprep.subr.mxu0 0.0
      %1517 = vmatpush1.msra.mxu0 0.0
      %1518 = vmatprep.subr.mxu0 0.0
      %1519 = vmatpush1.msra.mxu0 0.0
      %1520 = vmatprep.subr.mxu0 0.0
      %1521 = vmatpush1.msra.mxu0 0.0
      %1522 = vmatprep.subr.mxu0 0.0
      %1523 = vmatpush1.msra.mxu0 0.0
      %1524 = vmatprep.subr.mxu0 0.0
      %1525 = vmatpush1.msra.mxu0 0.0
      %1526 = vmatprep.subr.mxu0 0.0
      %1527 = vmatpush1.msra.mxu0 0.0
      %1528 = vmatprep.subr.mxu0 0.0
      %1529 = vmatpush1.msra.mxu0 0.0
      %1530 = vmatprep.subr.mxu0 0.0
      %1531 = vmatpush1.msra.mxu0 0.0
      %1532 = vmatprep.subr.mxu0 0.0
      %1533 = vmatpush1.msra.mxu0 0.0
      %1534 = vmatprep.subr.mxu0 0.0
      %1535 = vmatpush1.msra.mxu0 0.0
      %1536 = vmatprep.subr.mxu0 0.0
      %1537 = vmatpush1.msra.mxu0 0.0
      %1538 = vmatprep.subr.mxu0 0.0
      %1539 = vmatpush1.msra.mxu0 0.0
      %1540 = vmatprep.subr.mxu0 0.0
      %1541 = vmatpush1.msra.mxu0 0.0
      %1542 = vmatprep.subr.mxu0 0.0
      %1543 = vmatpush1.msra.mxu0 0.0
      %1544 = vmatprep.subr.mxu0 0.0
      %1545 = vmatpush1.msra.mxu0 0.0
      %1546 = vmatprep.subr.mxu0 0.0
      %1547 = vmatpush1.msra.mxu0 0.0
      %1548 = vmatprep.subr.mxu0 0.0
      %1549 = vmatpush1.msra.mxu0 0.0
      %1550 = vmatprep.subr.mxu0 0.0
      %1551 = vmatpush1.msra.mxu0 0.0
      %1552 = vmatprep.subr.mxu0 0.0
      %1553 = vmatpush1.msra.mxu0 0.0
      %1554 = vmatprep.subr.mxu0 0.0
      %1555 = vmatpush1.msra.mxu0 0.0
      %1556 = vmatprep.subr.mxu0 0.0
      %1557 = vmatpush1.msra.mxu0 0.0
      %1558 = vmatprep.subr.mxu0 0.0
      %1559 = vmatpush1.msra.mxu0 0.0
      %1560 = vmatprep.subr.mxu0 0.0
      %1561 = vmatpush1.msra.mxu0 0.0
      %1562 = vmatprep.subr.mxu0 0.0
      %1563 = vmatpush1.msra.mxu0 0.0
      %1564 = vmatprep.subr.mxu0 0.0
      %1565 = vmatpush1.msra.mxu0 0.0
      %1566 = vmatprep.subr.mxu0 0.0
      %1567 = vmatpush1.msra.mxu0 0.0
      %1568 = vmatprep.subr.mxu0 0.0
      %1569 = vmatpush1.msra.mxu0 0.0
      %1570 = vmatprep.subr.mxu0 0.0
      %1571 = vmatpush1.msra.mxu0 0.0
      %1572 = vmatprep.subr.mxu0 0.0
      %1573 = vmatpush1.msra.mxu0 0.0
      %1574 = vmatprep.subr.mxu0 0.0
      %1575 = vmatpush1.msra.mxu0 0.0
      %1576 = vmatprep.mubr.f32.mxu0 0.0
      %1577 = vmatmul.mubr.f32.gmra.mrb[0].mxu0 %v1506
      %v1578 = vpop.f32.mrb[0].mxu0
      %v1579 = vadd.f32 0.0, %v1578
      %v1580 = vpop.f32.mrb[0].mxu0
      %1581 = vdwg.mxu0
      %v1582 = vld [vmem:[%s960] sm:$0xff]
      %s1583 = scalar_lea.vmem %s933, 32
      %v1584 = vld [vmem:[%s1583] sm:$0xff]
      %v1585 = vld [vmem:[%s1583 + $0x8] sm:$0xff]
      %v1586 = vld [vmem:[%s1583 + $0x10] sm:$0xff]
      %v1587 = vld [vmem:[%s1583 + $0x18] sm:$0xff]
      %s1588 = scalar_lea.vmem %s937, 1
      %v1589 = vld [vmem:[%s1588] sm:$0x1]
      %v1591 = vlaneseq
      %v1592 = vshrl.u32 %v1591, 7
      %v1593 = vsub.s32 0, %v1592
      %v1594 = vrot.slane %v1589, %v1593
      %1596 = vmatprep.subr.mxu0 0.0
      %1597 = vmatpush1.msra.mxu0 %v1584
      %1598 = vmatprep.subr.mxu0 0.0
      %1599 = vmatpush1.msra.mxu0 %v1585
      %1600 = vmatprep.subr.mxu0 0.0
      %1601 = vmatpush1.msra.mxu0 %v1586
      %1602 = vmatprep.subr.mxu0 0.0
      %1603 = vmatpush1.msra.mxu0 %v1587
      %1604 = vmatprep.subr.mxu0 0.0
      %1605 = vmatpush1.msra.mxu0 0.0
      %1606 = vmatprep.subr.mxu0 0.0
      %1607 = vmatpush1.msra.mxu0 0.0
      %1608 = vmatprep.subr.mxu0 0.0
      %1609 = vmatpush1.msra.mxu0 0.0
      %1610 = vmatprep.subr.mxu0 0.0
      %1611 = vmatpush1.msra.mxu0 0.0
      %1612 = vmatprep.subr.mxu0 0.0
      %1613 = vmatpush1.msra.mxu0 0.0
      %1614 = vmatprep.subr.mxu0 0.0
      %1615 = vmatpush1.msra.mxu0 0.0
      %1616 = vmatprep.subr.mxu0 0.0
      %1617 = vmatpush1.msra.mxu0 0.0
      %1618 = vmatprep.subr.mxu0 0.0
      %1619 = vmatpush1.msra.mxu0 0.0
      %1620 = vmatprep.subr.mxu0 0.0
      %1621 = vmatpush1.msra.mxu0 0.0
      %1622 = vmatprep.subr.mxu0 0.0
      %1623 = vmatpush1.msra.mxu0 0.0
      %1624 = vmatprep.subr.mxu0 0.0
      %1625 = vmatpush1.msra.mxu0 0.0
      %1626 = vmatprep.subr.mxu0 0.0
      %1627 = vmatpush1.msra.mxu0 0.0
      %1628 = vmatprep.subr.mxu0 0.0
      %1629 = vmatpush1.msra.mxu0 0.0
      %1630 = vmatprep.subr.mxu0 0.0
      %1631 = vmatpush1.msra.mxu0 0.0
      %1632 = vmatprep.subr.mxu0 0.0
      %1633 = vmatpush1.msra.mxu0 0.0
      %1634 = vmatprep.subr.mxu0 0.0
      %1635 = vmatpush1.msra.mxu0 0.0
      %1636 = vmatprep.subr.mxu0 0.0
      %1637 = vmatpush1.msra.mxu0 0.0
      %1638 = vmatprep.subr.mxu0 0.0
      %1639 = vmatpush1.msra.mxu0 0.0
      %1640 = vmatprep.subr.mxu0 0.0
      %1641 = vmatpush1.msra.mxu0 0.0
      %1642 = vmatprep.subr.mxu0 0.0
      %1643 = vmatpush1.msra.mxu0 0.0
      %1644 = vmatprep.subr.mxu0 0.0
      %1645 = vmatpush1.msra.mxu0 0.0
      %1646 = vmatprep.subr.mxu0 0.0
      %1647 = vmatpush1.msra.mxu0 0.0
      %1648 = vmatprep.subr.mxu0 0.0
      %1649 = vmatpush1.msra.mxu0 0.0
      %1650 = vmatprep.subr.mxu0 0.0
      %1651 = vmatpush1.msra.mxu0 0.0
      %1652 = vmatprep.subr.mxu0 0.0
      %1653 = vmatpush1.msra.mxu0 0.0
      %1654 = vmatprep.subr.mxu0 0.0
      %1655 = vmatpush1.msra.mxu0 0.0
      %1656 = vmatprep.subr.mxu0 0.0
      %1657 = vmatpush1.msra.mxu0 0.0
      %1658 = vmatprep.subr.mxu0 0.0
      %1659 = vmatpush1.msra.mxu0 0.0
      %1660 = vmatprep.mubr.f32.mxu0 0.0
      %1661 = vmatmul.mubr.f32.gmra.mrb[0].mxu0 %v1180
      %v1662 = vpop.f32.mrb[0].mxu0
      %v1663 = vadd.f32 %v1594, %v1662
      %v1664 = vpop.f32.mrb[0].mxu0
      %1665 = vdwg.mxu0
      %v1666 = vmul.f32 %v1663, 0.35355338
      %s1667 = scalar_lea.vmem %s942, 32
      %v1668 = vld [vmem:[%s1667] sm:$0xff]
      %v1669 = vld [vmem:[%s1667 + $0x8] sm:$0xff]
      %v1670 = vld [vmem:[%s1667 + $0x10] sm:$0xff]
      %v1671 = vld [vmem:[%s1667 + $0x18] sm:$0xff]
      %s1672 = scalar_lea.vmem %s946, 1
      %v1673 = vld [vmem:[%s1672] sm:$0x1]
      %v1675 = vlaneseq
      %v1676 = vshrl.u32 %v1675, 7
      %v1677 = vsub.s32 0, %v1676
      %v1678 = vrot.slane %v1673, %v1677
      %1680 = vmatprep.subr.mxu0 0.0
      %1681 = vmatpush1.msra.mxu0 %v1668
      %1682 = vmatprep.subr.mxu0 0.0
      %1683 = vmatpush1.msra.mxu0 %v1669
      %1684 = vmatprep.subr.mxu0 0.0
      %1685 = vmatpush1.msra.mxu0 %v1670
      %1686 = vmatprep.subr.mxu0 0.0
      %1687 = vmatpush1.msra.mxu0 %v1671
      %1688 = vmatprep.subr.mxu0 0.0
      %1689 = vmatpush1.msra.mxu0 0.0
      %1690 = vmatprep.subr.mxu0 0.0
      %1691 = vmatpush1.msra.mxu0 0.0
      %1692 = vmatprep.subr.mxu0 0.0
      %1693 = vmatpush1.msra.mxu0 0.0
      %1694 = vmatprep.subr.mxu0 0.0
      %1695 = vmatpush1.msra.mxu0 0.0
      %1696 = vmatprep.subr.mxu0 0.0
      %1697 = vmatpush1.msra.mxu0 0.0
      %1698 = vmatprep.subr.mxu0 0.0
      %1699 = vmatpush1.msra.mxu0 0.0
      %1700 = vmatprep.subr.mxu0 0.0
      %1701 = vmatpush1.msra.mxu0 0.0
      %1702 = vmatprep.subr.mxu0 0.0
      %1703 = vmatpush1.msra.mxu0 0.0
      %1704 = vmatprep.subr.mxu0 0.0
      %1705 = vmatpush1.msra.mxu0 0.0
      %1706 = vmatprep.subr.mxu0 0.0
      %1707 = vmatpush1.msra.mxu0 0.0
      %1708 = vmatprep.subr.mxu0 0.0
      %1709 = vmatpush1.msra.mxu0 0.0
      %1710 = vmatprep.subr.mxu0 0.0
      %1711 = vmatpush1.msra.mxu0 0.0
      %1712 = vmatprep.subr.mxu0 0.0
      %1713 = vmatpush1.msra.mxu0 0.0
      %1714 = vmatprep.subr.mxu0 0.0
      %1715 = vmatpush1.msra.mxu0 0.0
      %1716 = vmatprep.subr.mxu0 0.0
      %1717 = vmatpush1.msra.mxu0 0.0
      %1718 = vmatprep.subr.mxu0 0.0
      %1719 = vmatpush1.msra.mxu0 0.0
      %1720 = vmatprep.subr.mxu0 0.0
      %1721 = vmatpush1.msra.mxu0 0.0
      %1722 = vmatprep.subr.mxu0 0.0
      %1723 = vmatpush1.msra.mxu0 0.0
      %1724 = vmatprep.subr.mxu0 0.0
      %1725 = vmatpush1.msra.mxu0 0.0
      %1726 = vmatprep.subr.mxu0 0.0
      %1727 = vmatpush1.msra.mxu0 0.0
      %1728 = vmatprep.subr.mxu0 0.0
      %1729 = vmatpush1.msra.mxu0 0.0
      %1730 = vmatprep.subr.mxu0 0.0
      %1731 = vmatpush1.msra.mxu0 0.0
      %1732 = vmatprep.subr.mxu0 0.0
      %1733 = vmatpush1.msra.mxu0 0.0
      %1734 = vmatprep.subr.mxu0 0.0
      %1735 = vmatpush1.msra.mxu0 0.0
      %1736 = vmatprep.subr.mxu0 0.0
      %1737 = vmatpush1.msra.mxu0 0.0
      %1738 = vmatprep.subr.mxu0 0.0
      %1739 = vmatpush1.msra.mxu0 0.0
      %1740 = vmatprep.subr.mxu0 0.0
      %1741 = vmatpush1.msra.mxu0 0.0
      %1742 = vmatprep.subr.mxu0 0.0
      %1743 = vmatpush1.msra.mxu0 0.0
      %1744 = vmatprep.mubr.f32.mxu0 0.0
      %1745 = vmatmul.mubr.f32.gmra.mrb[0].mxu0 %v1180
      %v1746 = vpop.f32.mrb[0].mxu0
      %v1747 = vadd.f32 %v1678, %v1746
      %v1748 = vpop.f32.mrb[0].mxu0
      %1749 = vdwg.mxu0
      %s1750 = scalar_lea.vmem %s951, 32
      %v1751 = vld [vmem:[%s1750] sm:$0xff]
      %v1752 = vld [vmem:[%s1750 + $0x8] sm:$0xff]
      %v1753 = vld [vmem:[%s1750 + $0x10] sm:$0xff]
      %v1754 = vld [vmem:[%s1750 + $0x18] sm:$0xff]
      %s1755 = scalar_lea.vmem %s955, 1
      %v1756 = vld [vmem:[%s1755] sm:$0x1]
      %v1758 = vlaneseq
      %v1759 = vshrl.u32 %v1758, 7
      %v1760 = vsub.s32 0, %v1759
      %v1761 = vrot.slane %v1756, %v1760
      %1763 = vmatprep.subr.mxu0 0.0
      %1764 = vmatpush1.msra.mxu0 %v1751
      %1765 = vmatprep.subr.mxu0 0.0
      %1766 = vmatpush1.msra.mxu0 %v1752
      %1767 = vmatprep.subr.mxu0 0.0
      %1768 = vmatpush1.msra.mxu0 %v1753
      %1769 = vmatprep.subr.mxu0 0.0
      %1770 = vmatpush1.msra.mxu0 %v1754
      %1771 = vmatprep.subr.mxu0 0.0
      %1772 = vmatpush1.msra.mxu0 0.0
      %1773 = vmatprep.subr.mxu0 0.0
      %1774 = vmatpush1.msra.mxu0 0.0
      %1775 = vmatprep.subr.mxu0 0.0
      %1776 = vmatpush1.msra.mxu0 0.0
      %1777 = vmatprep.subr.mxu0 0.0
      %1778 = vmatpush1.msra.mxu0 0.0
      %1779 = vmatprep.subr.mxu0 0.0
      %1780 = vmatpush1.msra.mxu0 0.0
      %1781 = vmatprep.subr.mxu0 0.0
      %1782 = vmatpush1.msra.mxu0 0.0
      %1783 = vmatprep.subr.mxu0 0.0
      %1784 = vmatpush1.msra.mxu0 0.0
      %1785 = vmatprep.subr.mxu0 0.0
      %1786 = vmatpush1.msra.mxu0 0.0
      %1787 = vmatprep.subr.mxu0 0.0
      %1788 = vmatpush1.msra.mxu0 0.0
      %1789 = vmatprep.subr.mxu0 0.0
      %1790 = vmatpush1.msra.mxu0 0.0
      %1791 = vmatprep.subr.mxu0 0.0
      %1792 = vmatpush1.msra.mxu0 0.0
      %1793 = vmatprep.subr.mxu0 0.0
      %1794 = vmatpush1.msra.mxu0 0.0
      %1795 = vmatprep.subr.mxu0 0.0
      %1796 = vmatpush1.msra.mxu0 0.0
      %1797 = vmatprep.subr.mxu0 0.0
      %1798 = vmatpush1.msra.mxu0 0.0
      %1799 = vmatprep.subr.mxu0 0.0
      %1800 = vmatpush1.msra.mxu0 0.0
      %1801 = vmatprep.subr.mxu0 0.0
      %1802 = vmatpush1.msra.mxu0 0.0
      %1803 = vmatprep.subr.mxu0 0.0
      %1804 = vmatpush1.msra.mxu0 0.0
      %1805 = vmatprep.subr.mxu0 0.0
      %1806 = vmatpush1.msra.mxu0 0.0
      %1807 = vmatprep.subr.mxu0 0.0
      %1808 = vmatpush1.msra.mxu0 0.0
      %1809 = vmatprep.subr.mxu0 0.0
      %1810 = vmatpush1.msra.mxu0 0.0
      %1811 = vmatprep.subr.mxu0 0.0
      %1812 = vmatpush1.msra.mxu0 0.0
      %1813 = vmatprep.subr.mxu0 0.0
      %1814 = vmatpush1.msra.mxu0 0.0
      %1815 = vmatprep.subr.mxu0 0.0
      %1816 = vmatpush1.msra.mxu0 0.0
      %1817 = vmatprep.subr.mxu0 0.0
      %1818 = vmatpush1.msra.mxu0 0.0
      %1819 = vmatprep.subr.mxu0 0.0
      %1820 = vmatpush1.msra.mxu0 0.0
      %1821 = vmatprep.subr.mxu0 0.0
      %1822 = vmatpush1.msra.mxu0 0.0
      %1823 = vmatprep.subr.mxu0 0.0
      %1824 = vmatpush1.msra.mxu0 0.0
      %1825 = vmatprep.subr.mxu0 0.0
      %1826 = vmatpush1.msra.mxu0 0.0
      %1827 = vmatprep.mubr.f32.mxu0 0.0
      %1828 = vmatmul.mubr.f32.gmra.mrb[0].mxu0 %v1180
      %v1829 = vpop.f32.mrb[0].mxu0
      %v1830 = vadd.f32 %v1761, %v1829
      %v1831 = vpop.f32.mrb[0].mxu0
      %1832 = vdwg.mxu0
      %v1834 = vsel %vm1415, %v1666, 0
      %v1837 = vsel %vm1415, %v1747, 0
      %1839 = vmatprep.subr.mxu0 0.0
      %1840 = vmatpush1.xpose.msra.mxu0 %v1837
      %1841 = vmatprep.subr.mxu0 0.0
      %1842 = vmatpush1.xpose.msra.mxu0 0.0
      %1843 = vmatprep.subr.mxu0 0.0
      %1844 = vmatpush1.xpose.msra.mxu0 0.0
      %1845 = vmatprep.subr.mxu0 0.0
      %1846 = vmatpush1.xpose.msra.mxu0 0.0
      %1847 = vmatprep.subr.mxu0 0.0
      %1848 = vmatpush1.xpose.msra.mxu0 0.0
      %1849 = vmatprep.subr.mxu0 0.0
      %1850 = vmatpush1.xpose.msra.mxu0 0.0
      %1851 = vmatprep.subr.mxu0 0.0
      %1852 = vmatpush1.xpose.msra.mxu0 0.0
      %1853 = vmatprep.subr.mxu0 0.0
      %1854 = vmatpush1.xpose.msra.mxu0 0.0
      %1855 = vmatprep.subr.mxu0 0.0
      %1856 = vmatpush1.xpose.msra.mxu0 0.0
      %1857 = vmatprep.subr.mxu0 0.0
      %1858 = vmatpush1.xpose.msra.mxu0 0.0
      %1859 = vmatprep.subr.mxu0 0.0
      %1860 = vmatpush1.xpose.msra.mxu0 0.0
      %1861 = vmatprep.subr.mxu0 0.0
      %1862 = vmatpush1.xpose.msra.mxu0 0.0
      %1863 = vmatprep.subr.mxu0 0.0
      %1864 = vmatpush1.xpose.msra.mxu0 0.0
      %1865 = vmatprep.subr.mxu0 0.0
      %1866 = vmatpush1.xpose.msra.mxu0 0.0
      %1867 = vmatprep.subr.mxu0 0.0
      %1868 = vmatpush1.xpose.msra.mxu0 0.0
      %1869 = vmatprep.subr.mxu0 0.0
      %1870 = vmatpush1.xpose.msra.mxu0 0.0
      %1871 = vmatprep.subr.mxu0 0.0
      %1872 = vmatpush1.xpose.msra.mxu0 0.0
      %1873 = vmatprep.subr.mxu0 0.0
      %1874 = vmatpush1.xpose.msra.mxu0 0.0
      %1875 = vmatprep.subr.mxu0 0.0
      %1876 = vmatpush1.xpose.msra.mxu0 0.0
      %1877 = vmatprep.subr.mxu0 0.0
      %1878 = vmatpush1.xpose.msra.mxu0 0.0
      %1879 = vmatprep.subr.mxu0 0.0
      %1880 = vmatpush1.xpose.msra.mxu0 0.0
      %1881 = vmatprep.subr.mxu0 0.0
      %1882 = vmatpush1.xpose.msra.mxu0 0.0
      %1883 = vmatprep.subr.mxu0 0.0
      %1884 = vmatpush1.xpose.msra.mxu0 0.0
      %1885 = vmatprep.subr.mxu0 0.0
      %1886 = vmatpush1.xpose.msra.mxu0 0.0
      %1887 = vmatprep.subr.mxu0 0.0
      %1888 = vmatpush1.xpose.msra.mxu0 0.0
      %1889 = vmatprep.subr.mxu0 0.0
      %1890 = vmatpush1.xpose.msra.mxu0 0.0
      %1891 = vmatprep.subr.mxu0 0.0
      %1892 = vmatpush1.xpose.msra.mxu0 0.0
      %1893 = vmatprep.subr.mxu0 0.0
      %1894 = vmatpush1.xpose.msra.mxu0 0.0
      %1895 = vmatprep.subr.mxu0 0.0
      %1896 = vmatpush1.xpose.msra.mxu0 0.0
      %1897 = vmatprep.subr.mxu0 0.0
      %1898 = vmatpush1.xpose.msra.mxu0 0.0
      %1899 = vmatprep.subr.mxu0 0.0
      %1900 = vmatpush1.xpose.msra.mxu0 0.0
      %1901 = vmatprep.subr.mxu0 0.0
      %1902 = vmatpush1.xpose.msra.mxu0 0.0
      %1903 = vmatprep.mubr.f32.mxu0 0.0
      %1904 = vmatmul.mubr.f32.gmra.mrb[0].mxu0 %v1834
      %v1905 = vpop.f32.mrb[0].mxu0
      %v1906 = vadd.f32 0.0, %v1905
      %v1907 = vpop.f32.mrb[0].mxu0
      %1908 = vdwg.mxu0
      %v1909 = vsel %vm1492, %v1906, -inf
      %1910 = vmax.xlane.f32.xlu0 %v1909
      %v1911 = vpop.xlane.xlu0 %1910
      %v1912 = vsub.f32 %v1906, %v1911
      %v1913 = vmul.f32 %v1912, 1.442695
      %v1914 = vpow.pop %v1913
      %v1915 = vsel %vm1492, %v1914, 0.0
      %1916 = vadd.xlane.f32.xlu0 %v1915
      %v1917 = vpop.xlane.xlu0 %1916
      %v1918 = vrcp.pop %v1917
      %v1919 = vmul.f32 %v1914, %v1918
      %v1921 = vsel %vm1504, %v1919, 0
      %v1924 = vsel %vm1508, %v1830, 0
      %1926 = vmatprep.subr.mxu0 0.0
      %1927 = vmatpush1.msra.mxu0 %v1924
      %1928 = vmatprep.subr.mxu0 0.0
      %1929 = vmatpush1.msra.mxu0 0.0
      %1930 = vmatprep.subr.mxu0 0.0
      %1931 = vmatpush1.msra.mxu0 0.0
      %1932 = vmatprep.subr.mxu0 0.0
      %1933 = vmatpush1.msra.mxu0 0.0
      %1934 = vmatprep.subr.mxu0 0.0
      %1935 = vmatpush1.msra.mxu0 0.0
      %1936 = vmatprep.subr.mxu0 0.0
      %1937 = vmatpush1.msra.mxu0 0.0
      %1938 = vmatprep.subr.mxu0 0.0
      %1939 = vmatpush1.msra.mxu0 0.0
      %1940 = vmatprep.subr.mxu0 0.0
      %1941 = vmatpush1.msra.mxu0 0.0
      %1942 = vmatprep.subr.mxu0 0.0
      %1943 = vmatpush1.msra.mxu0 0.0
      %1944 = vmatprep.subr.mxu0 0.0
      %1945 = vmatpush1.msra.mxu0 0.0
      %1946 = vmatprep.subr.mxu0 0.0
      %1947 = vmatpush1.msra.mxu0 0.0
      %1948 = vmatprep.subr.mxu0 0.0
      %1949 = vmatpush1.msra.mxu0 0.0
      %1950 = vmatprep.subr.mxu0 0.0
      %1951 = vmatpush1.msra.mxu0 0.0
      %1952 = vmatprep.subr.mxu0 0.0
      %1953 = vmatpush1.msra.mxu0 0.0
      %1954 = vmatprep.subr.mxu0 0.0
      %1955 = vmatpush1.msra.mxu0 0.0
      %1956 = vmatprep.subr.mxu0 0.0
      %1957 = vmatpush1.msra.mxu0 0.0
      %1958 = vmatprep.subr.mxu0 0.0
      %1959 = vmatpush1.msra.mxu0 0.0
      %1960 = vmatprep.subr.mxu0 0.0
      %1961 = vmatpush1.msra.mxu0 0.0
      %1962 = vmatprep.subr.mxu0 0.0
      %1963 = vmatpush1.msra.mxu0 0.0
      %1964 = vmatprep.subr.mxu0 0.0
      %1965 = vmatpush1.msra.mxu0 0.0
      %1966 = vmatprep.subr.mxu0 0.0
      %1967 = vmatpush1.msra.mxu0 0.0
      %1968 = vmatprep.subr.mxu0 0.0
      %1969 = vmatpush1.msra.mxu0 0.0
      %1970 = vmatprep.subr.mxu0 0.0
      %1971 = vmatpush1.msra.mxu0 0.0
      %1972 = vmatprep.subr.mxu0 0.0
      %1973 = vmatpush1.msra.mxu0 0.0
      %1974 = vmatprep.subr.mxu0 0.0
      %1975 = vmatpush1.msra.mxu0 0.0
      %1976 = vmatprep.subr.mxu0 0.0
      %1977 = vmatpush1.msra.mxu0 0.0
      %1978 = vmatprep.subr.mxu0 0.0
      %1979 = vmatpush1.msra.mxu0 0.0
      %1980 = vmatprep.subr.mxu0 0.0
      %1981 = vmatpush1.msra.mxu0 0.0
      %1982 = vmatprep.subr.mxu0 0.0
      %1983 = vmatpush1.msra.mxu0 0.0
      %1984 = vmatprep.subr.mxu0 0.0
      %1985 = vmatpush1.msra.mxu0 0.0
      %1986 = vmatprep.subr.mxu0 0.0
      %1987 = vmatpush1.msra.mxu0 0.0
      %1988 = vmatprep.subr.mxu0 0.0
      %1989 = vmatpush1.msra.mxu0 0.0
      %1990 = vmatprep.mubr.f32.mxu0 0.0
      %1991 = vmatmul.mubr.f32.gmra.mrb[0].mxu0 %v1921
      %v1992 = vpop.f32.mrb[0].mxu0
      %v1993 = vadd.f32 0.0, %v1992
      %v1994 = vpop.f32.mrb[0].mxu0
      %1995 = vdwg.mxu0
      %s1996 = scalar_lea.vmem %s960, 8
      %v1997 = vld [vmem:[%s1996] sm:$0xff]
      %v1999 = vsel %vm1415, %v1993, 0
      %2001 = vmatprep.subr.mxu0 0.0
      %2002 = vmatpush1.msra.mxu0 %v1997
      %2003 = vmatprep.subr.mxu0 0.0
      %2004 = vmatpush1.msra.mxu0 0.0
      %2005 = vmatprep.subr.mxu0 0.0
      %2006 = vmatpush1.msra.mxu0 0.0
      %2007 = vmatprep.subr.mxu0 0.0
      %2008 = vmatpush1.msra.mxu0 0.0
      %2009 = vmatprep.subr.mxu0 0.0
      %2010 = vmatpush1.msra.mxu0 0.0
      %2011 = vmatprep.subr.mxu0 0.0
      %2012 = vmatpush1.msra.mxu0 0.0
      %2013 = vmatprep.subr.mxu0 0.0
      %2014 = vmatpush1.msra.mxu0 0.0
      %2015 = vmatprep.subr.mxu0 0.0
      %2016 = vmatpush1.msra.mxu0 0.0
      %2017 = vmatprep.subr.mxu0 0.0
      %2018 = vmatpush1.msra.mxu0 0.0
      %2019 = vmatprep.subr.mxu0 0.0
      %2020 = vmatpush1.msra.mxu0 0.0
      %2021 = vmatprep.subr.mxu0 0.0
      %2022 = vmatpush1.msra.mxu0 0.0
      %2023 = vmatprep.subr.mxu0 0.0
      %2024 = vmatpush1.msra.mxu0 0.0
      %2025 = vmatprep.subr.mxu0 0.0
      %2026 = vmatpush1.msra.mxu0 0.0
      %2027 = vmatprep.subr.mxu0 0.0
      %2028 = vmatpush1.msra.mxu0 0.0
      %2029 = vmatprep.subr.mxu0 0.0
      %2030 = vmatpush1.msra.mxu0 0.0
      %2031 = vmatprep.subr.mxu0 0.0
      %2032 = vmatpush1.msra.mxu0 0.0
      %2033 = vmatprep.subr.mxu0 0.0
      %2034 = vmatpush1.msra.mxu0 0.0
      %2035 = vmatprep.subr.mxu0 0.0
      %2036 = vmatpush1.msra.mxu0 0.0
      %2037 = vmatprep.subr.mxu0 0.0
      %2038 = vmatpush1.msra.mxu0 0.0
      %2039 = vmatprep.subr.mxu0 0.0
      %2040 = vmatpush1.msra.mxu0 0.0
      %2041 = vmatprep.subr.mxu0 0.0
      %2042 = vmatpush1.msra.mxu0 0.0
      %2043 = vmatprep.subr.mxu0 0.0
      %2044 = vmatpush1.msra.mxu0 0.0
      %2045 = vmatprep.subr.mxu0 0.0
      %2046 = vmatpush1.msra.mxu0 0.0
      %2047 = vmatprep.subr.mxu0 0.0
      %2048 = vmatpush1.msra.mxu0 0.0
      %2049 = vmatprep.subr.mxu0 0.0
      %2050 = vmatpush1.msra.mxu0 0.0
      %2051 = vmatprep.subr.mxu0 0.0
      %2052 = vmatpush1.msra.mxu0 0.0
      %2053 = vmatprep.subr.mxu0 0.0
      %2054 = vmatpush1.msra.mxu0 0.0
      %2055 = vmatprep.subr.mxu0 0.0
      %2056 = vmatpush1.msra.mxu0 0.0
      %2057 = vmatprep.subr.mxu0 0.0
      %2058 = vmatpush1.msra.mxu0 0.0
      %2059 = vmatprep.subr.mxu0 0.0
      %2060 = vmatpush1.msra.mxu0 0.0
      %2061 = vmatprep.subr.mxu0 0.0
      %2062 = vmatpush1.msra.mxu0 0.0
      %2063 = vmatprep.subr.mxu0 0.0
      %2064 = vmatpush1.msra.mxu0 0.0
      %2065 = vmatprep.mubr.f32.mxu0 0.0
      %2066 = vmatmul.mubr.f32.gmra.mrb[0].mxu0 %v1999
      %v2067 = vpop.f32.mrb[0].mxu0
      %v2068 = vadd.f32 0.0, %v2067
      %v2069 = vpop.f32.mrb[0].mxu0
      %2070 = vdwg.mxu0
      %v2072 = vsel %vm1415, %v1579, 0
      %2074 = vmatprep.subr.mxu0 0.0
      %2075 = vmatpush1.msra.mxu0 %v1582
      %2076 = vmatprep.subr.mxu0 0.0
      %2077 = vmatpush1.msra.mxu0 0.0
      %2078 = vmatprep.subr.mxu0 0.0
      %2079 = vmatpush1.msra.mxu0 0.0
      %2080 = vmatprep.subr.mxu0 0.0
      %2081 = vmatpush1.msra.mxu0 0.0
      %2082 = vmatprep.subr.mxu0 0.0
      %2083 = vmatpush1.msra.mxu0 0.0
      %2084 = vmatprep.subr.mxu0 0.0
      %2085 = vmatpush1.msra.mxu0 0.0
      %2086 = vmatprep.subr.mxu0 0.0
      %2087 = vmatpush1.msra.mxu0 0.0
      %2088 = vmatprep.subr.mxu0 0.0
      %2089 = vmatpush1.msra.mxu0 0.0
      %2090 = vmatprep.subr.mxu0 0.0
      %2091 = vmatpush1.msra.mxu0 0.0
      %2092 = vmatprep.subr.mxu0 0.0
      %2093 = vmatpush1.msra.mxu0 0.0
      %2094 = vmatprep.subr.mxu0 0.0
      %2095 = vmatpush1.msra.mxu0 0.0
      %2096 = vmatprep.subr.mxu0 0.0
      %2097 = vmatpush1.msra.mxu0 0.0
      %2098 = vmatprep.subr.mxu0 0.0
      %2099 = vmatpush1.msra.mxu0 0.0
      %2100 = vmatprep.subr.mxu0 0.0
      %2101 = vmatpush1.msra.mxu0 0.0
      %2102 = vmatprep.subr.mxu0 0.0
      %2103 = vmatpush1.msra.mxu0 0.0
      %2104 = vmatprep.subr.mxu0 0.0
      %2105 = vmatpush1.msra.mxu0 0.0
      %2106 = vmatprep.subr.mxu0 0.0
      %2107 = vmatpush1.msra.mxu0 0.0
      %2108 = vmatprep.subr.mxu0 0.0
      %2109 = vmatpush1.msra.mxu0 0.0
      %2110 = vmatprep.subr.mxu0 0.0
      %2111 = vmatpush1.msra.mxu0 0.0
      %2112 = vmatprep.subr.mxu0 0.0
      %2113 = vmatpush1.msra.mxu0 0.0
      %2114 = vmatprep.subr.mxu0 0.0
      %2115 = vmatpush1.msra.mxu0 0.0
      %2116 = vmatprep.subr.mxu0 0.0
      %2117 = vmatpush1.msra.mxu0 0.0
      %2118 = vmatprep.subr.mxu0 0.0
      %2119 = vmatpush1.msra.mxu0 0.0
      %2120 = vmatprep.subr.mxu0 0.0
      %2121 = vmatpush1.msra.mxu0 0.0
      %2122 = vmatprep.subr.mxu0 0.0
      %2123 = vmatpush1.msra.mxu0 0.0
      %2124 = vmatprep.subr.mxu0 0.0
      %2125 = vmatpush1.msra.mxu0 0.0
      %2126 = vmatprep.subr.mxu0 0.0
      %2127 = vmatpush1.msra.mxu0 0.0
      %2128 = vmatprep.subr.mxu0 0.0
      %2129 = vmatpush1.msra.mxu0 0.0
      %2130 = vmatprep.subr.mxu0 0.0
      %2131 = vmatpush1.msra.mxu0 0.0
      %2132 = vmatprep.subr.mxu0 0.0
      %2133 = vmatpush1.msra.mxu0 0.0
      %2134 = vmatprep.subr.mxu0 0.0
      %2135 = vmatpush1.msra.mxu0 0.0
      %2136 = vmatprep.subr.mxu0 0.0
      %2137 = vmatpush1.msra.mxu0 0.0
      %2138 = vmatprep.mubr.f32.mxu0 0.0
      %2139 = vmatmul.mubr.f32.gmra.mrb[0].mxu0 %v2072
      %v2140 = vpop.f32.mrb[0].mxu0
      %v2141 = vadd.f32 %v2068, %v2140
      %v2142 = vpop.f32.mrb[0].mxu0
      %2143 = vdwg.mxu0
      %s2144 = scalar_lea.vmem %s933, 64
      %v2145 = vld [vmem:[%s2144] sm:$0xff]
      %v2146 = vld [vmem:[%s2144 + $0x8] sm:$0xff]
      %v2147 = vld [vmem:[%s2144 + $0x10] sm:$0xff]
      %v2148 = vld [vmem:[%s2144 + $0x18] sm:$0xff]
      %s2149 = scalar_lea.vmem %s937, 2
      %v2150 = vld [vmem:[%s2149] sm:$0x1]
      %v2152 = vlaneseq
      %v2153 = vshrl.u32 %v2152, 7
      %v2154 = vsub.s32 0, %v2153
      %v2155 = vrot.slane %v2150, %v2154
      %2157 = vmatprep.subr.mxu0 0.0
      %2158 = vmatpush1.msra.mxu0 %v2145
      %2159 = vmatprep.subr.mxu0 0.0
      %2160 = vmatpush1.msra.mxu0 %v2146
      %2161 = vmatprep.subr.mxu0 0.0
      %2162 = vmatpush1.msra.mxu0 %v2147
      %2163 = vmatprep.subr.mxu0 0.0
      %2164 = vmatpush1.msra.mxu0 %v2148
      %2165 = vmatprep.subr.mxu0 0.0
      %2166 = vmatpush1.msra.mxu0 0.0
      %2167 = vmatprep.subr.mxu0 0.0
      %2168 = vmatpush1.msra.mxu0 0.0
      %2169 = vmatprep.subr.mxu0 0.0
      %2170 = vmatpush1.msra.mxu0 0.0
      %2171 = vmatprep.subr.mxu0 0.0
      %2172 = vmatpush1.msra.mxu0 0.0
      %2173 = vmatprep.subr.mxu0 0.0
      %2174 = vmatpush1.msra.mxu0 0.0
      %2175 = vmatprep.subr.mxu0 0.0
      %2176 = vmatpush1.msra.mxu0 0.0
      %2177 = vmatprep.subr.mxu0 0.0
      %2178 = vmatpush1.msra.mxu0 0.0
      %2179 = vmatprep.subr.mxu0 0.0
      %2180 = vmatpush1.msra.mxu0 0.0
      %2181 = vmatprep.subr.mxu0 0.0
      %2182 = vmatpush1.msra.mxu0 0.0
      %2183 = vmatprep.subr.mxu0 0.0
      %2184 = vmatpush1.msra.mxu0 0.0
      %2185 = vmatprep.subr.mxu0 0.0
      %2186 = vmatpush1.msra.mxu0 0.0
      %2187 = vmatprep.subr.mxu0 0.0
      %2188 = vmatpush1.msra.mxu0 0.0
      %2189 = vmatprep.subr.mxu0 0.0
      %2190 = vmatpush1.msra.mxu0 0.0
      %2191 = vmatprep.subr.mxu0 0.0
      %2192 = vmatpush1.msra.mxu0 0.0
      %2193 = vmatprep.subr.mxu0 0.0
      %2194 = vmatpush1.msra.mxu0 0.0
      %2195 = vmatprep.subr.mxu0 0.0
      %2196 = vmatpush1.msra.mxu0 0.0
      %2197 = vmatprep.subr.mxu0 0.0
      %2198 = vmatpush1.msra.mxu0 0.0
      %2199 = vmatprep.subr.mxu0 0.0
      %2200 = vmatpush1.msra.mxu0 0.0
      %2201 = vmatprep.subr.mxu0 0.0
      %2202 = vmatpush1.msra.mxu0 0.0
      %2203 = vmatprep.subr.mxu0 0.0
      %2204 = vmatpush1.msra.mxu0 0.0
      %2205 = vmatprep.subr.mxu0 0.0
      %2206 = vmatpush1.msra.mxu0 0.0
      %2207 = vmatprep.subr.mxu0 0.0
      %2208 = vmatpush1.msra.mxu0 0.0
      %2209 = vmatprep.subr.mxu0 0.0
      %2210 = vmatpush1.msra.mxu0 0.0
      %2211 = vmatprep.subr.mxu0 0.0
      %2212 = vmatpush1.msra.mxu0 0.0
      %2213 = vmatprep.subr.mxu0 0.0
      %2214 = vmatpush1.msra.mxu0 0.0
      %2215 = vmatprep.subr.mxu0 0.0
      %2216 = vmatpush1.msra.mxu0 0.0
      %2217 = vmatprep.subr.mxu0 0.0
      %2218 = vmatpush1.msra.mxu0 0.0
      %2219 = vmatprep.subr.mxu0 0.0
      %2220 = vmatpush1.msra.mxu0 0.0
      %2221 = vmatprep.mubr.f32.mxu0 0.0
      %2222 = vmatmul.mubr.f32.gmra.mrb[0].mxu0 %v1180
      %v2223 = vpop.f32.mrb[0].mxu0
      %v2224 = vadd.f32 %v2155, %v2223
      %v2225 = vpop.f32.mrb[0].mxu0
      %2226 = vdwg.mxu0
      %v2227 = vmul.f32 %v2224, 0.35355338
      %s2228 = scalar_lea.vmem %s942, 64
      %v2229 = vld [vmem:[%s2228] sm:$0xff]
      %v2230 = vld [vmem:[%s2228 + $0x8] sm:$0xff]
      %v2231 = vld [vmem:[%s2228 + $0x10] sm:$0xff]
      %v2232 = vld [vmem:[%s2228 + $0x18] sm:$0xff]
      %s2233 = scalar_lea.vmem %s946, 2
      %v2234 = vld [vmem:[%s2233] sm:$0x1]
      %v2236 = vlaneseq
      %v2237 = vshrl.u32 %v2236, 7
      %v2238 = vsub.s32 0, %v2237
      %v2239 = vrot.slane %v2234, %v2238
      %2241 = vmatprep.subr.mxu0 0.0
      %2242 = vmatpush1.msra.mxu0 %v2229
      %2243 = vmatprep.subr.mxu0 0.0
      %2244 = vmatpush1.msra.mxu0 %v2230
      %2245 = vmatprep.subr.mxu0 0.0
      %2246 = vmatpush1.msra.mxu0 %v2231
      %2247 = vmatprep.subr.mxu0 0.0
      %2248 = vmatpush1.msra.mxu0 %v2232
      %2249 = vmatprep.subr.mxu0 0.0
      %2250 = vmatpush1.msra.mxu0 0.0
      %2251 = vmatprep.subr.mxu0 0.0
      %2252 = vmatpush1.msra.mxu0 0.0
      %2253 = vmatprep.subr.mxu0 0.0
      %2254 = vmatpush1.msra.mxu0 0.0
      %2255 = vmatprep.subr.mxu0 0.0
      %2256 = vmatpush1.msra.mxu0 0.0
      %2257 = vmatprep.subr.mxu0 0.0
      %2258 = vmatpush1.msra.mxu0 0.0
      %2259 = vmatprep.subr.mxu0 0.0
      %2260 = vmatpush1.msra.mxu0 0.0
      %2261 = vmatprep.subr.mxu0 0.0
      %2262 = vmatpush1.msra.mxu0 0.0
      %2263 = vmatprep.subr.mxu0 0.0
      %2264 = vmatpush1.msra.mxu0 0.0
      %2265 = vmatprep.subr.mxu0 0.0
      %2266 = vmatpush1.msra.mxu0 0.0
      %2267 = vmatprep.subr.mxu0 0.0
      %2268 = vmatpush1.msra.mxu0 0.0
      %2269 = vmatprep.subr.mxu0 0.0
      %2270 = vmatpush1.msra.mxu0 0.0
      %2271 = vmatprep.subr.mxu0 0.0
      %2272 = vmatpush1.msra.mxu0 0.0
      %2273 = vmatprep.subr.mxu0 0.0
      %2274 = vmatpush1.msra.mxu0 0.0
      %2275 = vmatprep.subr.mxu0 0.0
      %2276 = vmatpush1.msra.mxu0 0.0
      %2277 = vmatprep.subr.mxu0 0.0
      %2278 = vmatpush1.msra.mxu0 0.0
      %2279 = vmatprep.subr.mxu0 0.0
      %2280 = vmatpush1.msra.mxu0 0.0
      %2281 = vmatprep.subr.mxu0 0.0
      %2282 = vmatpush1.msra.mxu0 0.0
      %2283 = vmatprep.subr.mxu0 0.0
      %2284 = vmatpush1.msra.mxu0 0.0
      %2285 = vmatprep.subr.mxu0 0.0
      %2286 = vmatpush1.msra.mxu0 0.0
      %2287 = vmatprep.subr.mxu0 0.0
      %2288 = vmatpush1.msra.mxu0 0.0
      %2289 = vmatprep.subr.mxu0 0.0
      %2290 = vmatpush1.msra.mxu0 0.0
      %2291 = vmatprep.subr.mxu0 0.0
      %2292 = vmatpush1.msra.mxu0 0.0
      %2293 = vmatprep.subr.mxu0 0.0
      %2294 = vmatpush1.msra.mxu0 0.0
      %2295 = vmatprep.subr.mxu0 0.0
      %2296 = vmatpush1.msra.mxu0 0.0
      %2297 = vmatprep.subr.mxu0 0.0
      %2298 = vmatpush1.msra.mxu0 0.0
      %2299 = vmatprep.subr.mxu0 0.0
      %2300 = vmatpush1.msra.mxu0 0.0
      %2301 = vmatprep.subr.mxu0 0.0
      %2302 = vmatpush1.msra.mxu0 0.0
      %2303 = vmatprep.subr.mxu0 0.0
      %2304 = vmatpush1.msra.mxu0 0.0
      %2305 = vmatprep.mubr.f32.mxu0 0.0
      %2306 = vmatmul.mubr.f32.gmra.mrb[0].mxu0 %v1180
      %v2307 = vpop.f32.mrb[0].mxu0
      %v2308 = vadd.f32 %v2239, %v2307
      %v2309 = vpop.f32.mrb[0].mxu0
      %2310 = vdwg.mxu0
      %s2311 = scalar_lea.vmem %s951, 64
      %v2312 = vld [vmem:[%s2311] sm:$0xff]
      %v2313 = vld [vmem:[%s2311 + $0x8] sm:$0xff]
      %v2314 = vld [vmem:[%s2311 + $0x10] sm:$0xff]
      %v2315 = vld [vmem:[%s2311 + $0x18] sm:$0xff]
      %s2316 = scalar_lea.vmem %s955, 2
      %v2317 = vld [vmem:[%s2316] sm:$0x1]
      %v2319 = vlaneseq
      %v2320 = vshrl.u32 %v2319, 7
      %v2321 = vsub.s32 0, %v2320
      %v2322 = vrot.slane %v2317, %v2321
      %2324 = vmatprep.subr.mxu0 0.0
      %2325 = vmatpush1.msra.mxu0 %v2312
      %2326 = vmatprep.subr.mxu0 0.0
      %2327 = vmatpush1.msra.mxu0 %v2313
      %2328 = vmatprep.subr.mxu0 0.0
      %2329 = vmatpush1.msra.mxu0 %v2314
      %2330 = vmatprep.subr.mxu0 0.0
      %2331 = vmatpush1.msra.mxu0 %v2315
      %2332 = vmatprep.subr.mxu0 0.0
      %2333 = vmatpush1.msra.mxu0 0.0
      %2334 = vmatprep.subr.mxu0 0.0
      %2335 = vmatpush1.msra.mxu0 0.0
      %2336 = vmatprep.subr.mxu0 0.0
      %2337 = vmatpush1.msra.mxu0 0.0
      %2338 = vmatprep.subr.mxu0 0.0
      %2339 = vmatpush1.msra.mxu0 0.0
      %2340 = vmatprep.subr.mxu0 0.0
      %2341 = vmatpush1.msra.mxu0 0.0
      %2342 = vmatprep.subr.mxu0 0.0
      %2343 = vmatpush1.msra.mxu0 0.0
      %2344 = vmatprep.subr.mxu0 0.0
      %2345 = vmatpush1.msra.mxu0 0.0
      %2346 = vmatprep.subr.mxu0 0.0
      %2347 = vmatpush1.msra.mxu0 0.0
      %2348 = vmatprep.subr.mxu0 0.0
      %2349 = vmatpush1.msra.mxu0 0.0
      %2350 = vmatprep.subr.mxu0 0.0
      %2351 = vmatpush1.msra.mxu0 0.0
      %2352 = vmatprep.subr.mxu0 0.0
      %2353 = vmatpush1.msra.mxu0 0.0
      %2354 = vmatprep.subr.mxu0 0.0
      %2355 = vmatpush1.msra.mxu0 0.0
      %2356 = vmatprep.subr.mxu0 0.0
      %2357 = vmatpush1.msra.mxu0 0.0
      %2358 = vmatprep.subr.mxu0 0.0
      %2359 = vmatpush1.msra.mxu0 0.0
      %2360 = vmatprep.subr.mxu0 0.0
      %2361 = vmatpush1.msra.mxu0 0.0
      %2362 = vmatprep.subr.mxu0 0.0
      %2363 = vmatpush1.msra.mxu0 0.0
      %2364 = vmatprep.subr.mxu0 0.0
      %2365 = vmatpush1.msra.mxu0 0.0
      %2366 = vmatprep.subr.mxu0 0.0
      %2367 = vmatpush1.msra.mxu0 0.0
      %2368 = vmatprep.subr.mxu0 0.0
      %2369 = vmatpush1.msra.mxu0 0.0
      %2370 = vmatprep.subr.mxu0 0.0
      %2371 = vmatpush1.msra.mxu0 0.0
      %2372 = vmatprep.subr.mxu0 0.0
      %2373 = vmatpush1.msra.mxu0 0.0
      %2374 = vmatprep.subr.mxu0 0.0
      %2375 = vmatpush1.msra.mxu0 0.0
      %2376 = vmatprep.subr.mxu0 0.0
      %2377 = vmatpush1.msra.mxu0 0.0
      %2378 = vmatprep.subr.mxu0 0.0
      %2379 = vmatpush1.msra.mxu0 0.0
      %2380 = vmatprep.subr.mxu0 0.0
      %2381 = vmatpush1.msra.mxu0 0.0
      %2382 = vmatprep.subr.mxu0 0.0
      %2383 = vmatpush1.msra.mxu0 0.0
      %2384 = vmatprep.subr.mxu0 0.0
      %2385 = vmatpush1.msra.mxu0 0.0
      %2386 = vmatprep.subr.mxu0 0.0
      %2387 = vmatpush1.msra.mxu0 0.0
      %2388 = vmatprep.mubr.f32.mxu0 0.0
      %2389 = vmatmul.mubr.f32.gmra.mrb[0].mxu0 %v1180
      %v2390 = vpop.f32.mrb[0].mxu0
      %v2391 = vadd.f32 %v2322, %v2390
      %v2392 = vpop.f32.mrb[0].mxu0
      %2393 = vdwg.mxu0
      %v2395 = vsel %vm1415, %v2227, 0
      %v2398 = vsel %vm1415, %v2308, 0
      %2400 = vmatprep.subr.mxu0 0.0
      %2401 = vmatpush1.xpose.msra.mxu0 %v2398
      %2402 = vmatprep.subr.mxu0 0.0
      %2403 = vmatpush1.xpose.msra.mxu0 0.0
      %2404 = vmatprep.subr.mxu0 0.0
      %2405 = vmatpush1.xpose.msra.mxu0 0.0
      %2406 = vmatprep.subr.mxu0 0.0
      %2407 = vmatpush1.xpose.msra.mxu0 0.0
      %2408 = vmatprep.subr.mxu0 0.0
      %2409 = vmatpush1.xpose.msra.mxu0 0.0
      %2410 = vmatprep.subr.mxu0 0.0
      %2411 = vmatpush1.xpose.msra.mxu0 0.0
      %2412 = vmatprep.subr.mxu0 0.0
      %2413 = vmatpush1.xpose.msra.mxu0 0.0
      %2414 = vmatprep.subr.mxu0 0.0
      %2415 = vmatpush1.xpose.msra.mxu0 0.0
      %2416 = vmatprep.subr.mxu0 0.0
      %2417 = vmatpush1.xpose.msra.mxu0 0.0
      %2418 = vmatprep.subr.mxu0 0.0
      %2419 = vmatpush1.xpose.msra.mxu0 0.0
      %2420 = vmatprep.subr.mxu0 0.0
      %2421 = vmatpush1.xpose.msra.mxu0 0.0
      %2422 = vmatprep.subr.mxu0 0.0
      %2423 = vmatpush1.xpose.msra.mxu0 0.0
      %2424 = vmatprep.subr.mxu0 0.0
      %2425 = vmatpush1.xpose.msra.mxu0 0.0
      %2426 = vmatprep.subr.mxu0 0.0
      %2427 = vmatpush1.xpose.msra.mxu0 0.0
      %2428 = vmatprep.subr.mxu0 0.0
      %2429 = vmatpush1.xpose.msra.mxu0 0.0
      %2430 = vmatprep.subr.mxu0 0.0
      %2431 = vmatpush1.xpose.msra.mxu0 0.0
      %2432 = vmatprep.subr.mxu0 0.0
      %2433 = vmatpush1.xpose.msra.mxu0 0.0
      %2434 = vmatprep.subr.mxu0 0.0
      %2435 = vmatpush1.xpose.msra.mxu0 0.0
      %2436 = vmatprep.subr.mxu0 0.0
      %2437 = vmatpush1.xpose.msra.mxu0 0.0
      %2438 = vmatprep.subr.mxu0 0.0
      %2439 = vmatpush1.xpose.msra.mxu0 0.0
      %2440 = vmatprep.subr.mxu0 0.0
      %2441 = vmatpush1.xpose.msra.mxu0 0.0
      %2442 = vmatprep.subr.mxu0 0.0
      %2443 = vmatpush1.xpose.msra.mxu0 0.0
      %2444 = vmatprep.subr.mxu0 0.0
      %2445 = vmatpush1.xpose.msra.mxu0 0.0
      %2446 = vmatprep.subr.mxu0 0.0
      %2447 = vmatpush1.xpose.msra.mxu0 0.0
      %2448 = vmatprep.subr.mxu0 0.0
      %2449 = vmatpush1.xpose.msra.mxu0 0.0
      %2450 = vmatprep.subr.mxu0 0.0
      %2451 = vmatpush1.xpose.msra.mxu0 0.0
      %2452 = vmatprep.subr.mxu0 0.0
      %2453 = vmatpush1.xpose.msra.mxu0 0.0
      %2454 = vmatprep.subr.mxu0 0.0
      %2455 = vmatpush1.xpose.msra.mxu0 0.0
      %2456 = vmatprep.subr.mxu0 0.0
      %2457 = vmatpush1.xpose.msra.mxu0 0.0
      %2458 = vmatprep.subr.mxu0 0.0
      %2459 = vmatpush1.xpose.msra.mxu0 0.0
      %2460 = vmatprep.subr.mxu0 0.0
      %2461 = vmatpush1.xpose.msra.mxu0 0.0
      %2462 = vmatprep.subr.mxu0 0.0
      %2463 = vmatpush1.xpose.msra.mxu0 0.0
      %2464 = vmatprep.mubr.f32.mxu0 0.0
      %2465 = vmatmul.mubr.f32.gmra.mrb[0].mxu0 %v2395
      %v2466 = vpop.f32.mrb[0].mxu0
      %v2467 = vadd.f32 0.0, %v2466
      %v2468 = vpop.f32.mrb[0].mxu0
      %2469 = vdwg.mxu0
      %v2470 = vsel %vm1492, %v2467, -inf
      %2471 = vmax.xlane.f32.xlu0 %v2470
      %v2472 = vpop.xlane.xlu0 %2471
      %v2473 = vsub.f32 %v2467, %v2472
      %v2474 = vmul.f32 %v2473, 1.442695
      %v2475 = vpow.pop %v2474
      %v2476 = vsel %vm1492, %v2475, 0.0
      %2477 = vadd.xlane.f32.xlu0 %v2476
      %v2478 = vpop.xlane.xlu0 %2477
      %v2479 = vrcp.pop %v2478
      %v2480 = vmul.f32 %v2475, %v2479
      %v2482 = vsel %vm1504, %v2480, 0
      %v2485 = vsel %vm1508, %v2391, 0
      %2487 = vmatprep.subr.mxu0 0.0
      %2488 = vmatpush1.msra.mxu0 %v2485
      %2489 = vmatprep.subr.mxu0 0.0
      %2490 = vmatpush1.msra.mxu0 0.0
      %2491 = vmatprep.subr.mxu0 0.0
      %2492 = vmatpush1.msra.mxu0 0.0
      %2493 = vmatprep.subr.mxu0 0.0
      %2494 = vmatpush1.msra.mxu0 0.0
      %2495 = vmatprep.subr.mxu0 0.0
      %2496 = vmatpush1.msra.mxu0 0.0
      %2497 = vmatprep.subr.mxu0 0.0
      %2498 = vmatpush1.msra.mxu0 0.0
      %2499 = vmatprep.subr.mxu0 0.0
      %2500 = vmatpush1.msra.mxu0 0.0
      %2501 = vmatprep.subr.mxu0 0.0
      %2502 = vmatpush1.msra.mxu0 0.0
      %2503 = vmatprep.subr.mxu0 0.0
      %2504 = vmatpush1.msra.mxu0 0.0
      %2505 = vmatprep.subr.mxu0 0.0
      %2506 = vmatpush1.msra.mxu0 0.0
      %2507 = vmatprep.subr.mxu0 0.0
      %2508 = vmatpush1.msra.mxu0 0.0
      %2509 = vmatprep.subr.mxu0 0.0
      %2510 = vmatpush1.msra.mxu0 0.0
      %2511 = vmatprep.subr.mxu0 0.0
      %2512 = vmatpush1.msra.mxu0 0.0
      %2513 = vmatprep.subr.mxu0 0.0
      %2514 = vmatpush1.msra.mxu0 0.0
      %2515 = vmatprep.subr.mxu0 0.0
      %2516 = vmatpush1.msra.mxu0 0.0
      %2517 = vmatprep.subr.mxu0 0.0
      %2518 = vmatpush1.msra.mxu0 0.0
      %2519 = vmatprep.subr.mxu0 0.0
      %2520 = vmatpush1.msra.mxu0 0.0
      %2521 = vmatprep.subr.mxu0 0.0
      %2522 = vmatpush1.msra.mxu0 0.0
      %2523 = vmatprep.subr.mxu0 0.0
      %2524 = vmatpush1.msra.mxu0 0.0
      %2525 = vmatprep.subr.mxu0 0.0
      %2526 = vmatpush1.msra.mxu0 0.0
      %2527 = vmatprep.subr.mxu0 0.0
      %2528 = vmatpush1.msra.mxu0 0.0
      %2529 = vmatprep.subr.mxu0 0.0
      %2530 = vmatpush1.msra.mxu0 0.0
      %2531 = vmatprep.subr.mxu0 0.0
      %2532 = vmatpush1.msra.mxu0 0.0
      %2533 = vmatprep.subr.mxu0 0.0
      %2534 = vmatpush1.msra.mxu0 0.0
      %2535 = vmatprep.subr.mxu0 0.0
      %2536 = vmatpush1.msra.mxu0 0.0
      %2537 = vmatprep.subr.mxu0 0.0
      %2538 = vmatpush1.msra.mxu0 0.0
      %2539 = vmatprep.subr.mxu0 0.0
      %2540 = vmatpush1.msra.mxu0 0.0
      %2541 = vmatprep.subr.mxu0 0.0
      %2542 = vmatpush1.msra.mxu0 0.0
      %2543 = vmatprep.subr.mxu0 0.0
      %2544 = vmatpush1.msra.mxu0 0.0
      %2545 = vmatprep.subr.mxu0 0.0
      %2546 = vmatpush1.msra.mxu0 0.0
      %2547 = vmatprep.subr.mxu0 0.0
      %2548 = vmatpush1.msra.mxu0 0.0
      %2549 = vmatprep.subr.mxu0 0.0
      %2550 = vmatpush1.msra.mxu0 0.0
      %2551 = vmatprep.mubr.f32.mxu0 0.0
      %2552 = vmatmul.mubr.f32.gmra.mrb[0].mxu0 %v2482
      %v2553 = vpop.f32.mrb[0].mxu0
      %v2554 = vadd.f32 0.0, %v2553
      %v2555 = vpop.f32.mrb[0].mxu0
      %2556 = vdwg.mxu0
      %s2557 = scalar_lea.vmem %s960, 16
      %v2558 = vld [vmem:[%s2557] sm:$0xff]
      %v2560 = vsel %vm1415, %v2554, 0
      %2562 = vmatprep.subr.mxu0 0.0
      %2563 = vmatpush1.msra.mxu0 %v2558
      %2564 = vmatprep.subr.mxu0 0.0
      %2565 = vmatpush1.msra.mxu0 0.0
      %2566 = vmatprep.subr.mxu0 0.0
      %2567 = vmatpush1.msra.mxu0 0.0
      %2568 = vmatprep.subr.mxu0 0.0
      %2569 = vmatpush1.msra.mxu0 0.0
      %2570 = vmatprep.subr.mxu0 0.0
      %2571 = vmatpush1.msra.mxu0 0.0
      %2572 = vmatprep.subr.mxu0 0.0
      %2573 = vmatpush1.msra.mxu0 0.0
      %2574 = vmatprep.subr.mxu0 0.0
      %2575 = vmatpush1.msra.mxu0 0.0
      %2576 = vmatprep.subr.mxu0 0.0
      %2577 = vmatpush1.msra.mxu0 0.0
      %2578 = vmatprep.subr.mxu0 0.0
      %2579 = vmatpush1.msra.mxu0 0.0
      %2580 = vmatprep.subr.mxu0 0.0
      %2581 = vmatpush1.msra.mxu0 0.0
      %2582 = vmatprep.subr.mxu0 0.0
      %2583 = vmatpush1.msra.mxu0 0.0
      %2584 = vmatprep.subr.mxu0 0.0
      %2585 = vmatpush1.msra.mxu0 0.0
      %2586 = vmatprep.subr.mxu0 0.0
      %2587 = vmatpush1.msra.mxu0 0.0
      %2588 = vmatprep.subr.mxu0 0.0
      %2589 = vmatpush1.msra.mxu0 0.0
      %2590 = vmatprep.subr.mxu0 0.0
      %2591 = vmatpush1.msra.mxu0 0.0
      %2592 = vmatprep.subr.mxu0 0.0
      %2593 = vmatpush1.msra.mxu0 0.0
      %2594 = vmatprep.subr.mxu0 0.0
      %2595 = vmatpush1.msra.mxu0 0.0
      %2596 = vmatprep.subr.mxu0 0.0
      %2597 = vmatpush1.msra.mxu0 0.0
      %2598 = vmatprep.subr.mxu0 0.0
      %2599 = vmatpush1.msra.mxu0 0.0
      %2600 = vmatprep.subr.mxu0 0.0
      %2601 = vmatpush1.msra.mxu0 0.0
      %2602 = vmatprep.subr.mxu0 0.0
      %2603 = vmatpush1.msra.mxu0 0.0
      %2604 = vmatprep.subr.mxu0 0.0
      %2605 = vmatpush1.msra.mxu0 0.0
      %2606 = vmatprep.subr.mxu0 0.0
      %2607 = vmatpush1.msra.mxu0 0.0
      %2608 = vmatprep.subr.mxu0 0.0
      %2609 = vmatpush1.msra.mxu0 0.0
      %2610 = vmatprep.subr.mxu0 0.0
      %2611 = vmatpush1.msra.mxu0 0.0
      %2612 = vmatprep.subr.mxu0 0.0
      %2613 = vmatpush1.msra.mxu0 0.0
      %2614 = vmatprep.subr.mxu0 0.0
      %2615 = vmatpush1.msra.mxu0 0.0
      %2616 = vmatprep.subr.mxu0 0.0
      %2617 = vmatpush1.msra.mxu0 0.0
      %2618 = vmatprep.subr.mxu0 0.0
      %2619 = vmatpush1.msra.mxu0 0.0
      %2620 = vmatprep.subr.mxu0 0.0
      %2621 = vmatpush1.msra.mxu0 0.0
      %2622 = vmatprep.subr.mxu0 0.0
      %2623 = vmatpush1.msra.mxu0 0.0
      %2624 = vmatprep.subr.mxu0 0.0
      %2625 = vmatpush1.msra.mxu0 0.0
      %2626 = vmatprep.mubr.f32.mxu0 0.0
      %2627 = vmatmul.mubr.f32.gmra.mrb[0].mxu0 %v2560
      %v2628 = vpop.f32.mrb[0].mxu0
      %v2629 = vadd.f32 0.0, %v2628
      %v2630 = vpop.f32.mrb[0].mxu0
      %2631 = vdwg.mxu0
      %v2632 = vadd.f32 %v2141, %v2629
      %s2633 = scalar_lea.vmem %s933, 96
      %v2634 = vld [vmem:[%s2633] sm:$0xff]
      %v2635 = vld [vmem:[%s2633 + $0x8] sm:$0xff]
      %v2636 = vld [vmem:[%s2633 + $0x10] sm:$0xff]
      %v2637 = vld [vmem:[%s2633 + $0x18] sm:$0xff]
      %s2638 = scalar_lea.vmem %s937, 3
      %v2639 = vld [vmem:[%s2638] sm:$0x1]
      %v2641 = vlaneseq
      %v2642 = vshrl.u32 %v2641, 7
      %v2643 = vsub.s32 0, %v2642
      %v2644 = vrot.slane %v2639, %v2643
      %2646 = vmatprep.subr.mxu0 0.0
      %2647 = vmatpush1.msra.mxu0 %v2634
      %2648 = vmatprep.subr.mxu0 0.0
      %2649 = vmatpush1.msra.mxu0 %v2635
      %2650 = vmatprep.subr.mxu0 0.0
      %2651 = vmatpush1.msra.mxu0 %v2636
      %2652 = vmatprep.subr.mxu0 0.0
      %2653 = vmatpush1.msra.mxu0 %v2637
      %2654 = vmatprep.subr.mxu0 0.0
      %2655 = vmatpush1.msra.mxu0 0.0
      %2656 = vmatprep.subr.mxu0 0.0
      %2657 = vmatpush1.msra.mxu0 0.0
      %2658 = vmatprep.subr.mxu0 0.0
      %2659 = vmatpush1.msra.mxu0 0.0
      %2660 = vmatprep.subr.mxu0 0.0
      %2661 = vmatpush1.msra.mxu0 0.0
      %2662 = vmatprep.subr.mxu0 0.0
      %2663 = vmatpush1.msra.mxu0 0.0
      %2664 = vmatprep.subr.mxu0 0.0
      %2665 = vmatpush1.msra.mxu0 0.0
      %2666 = vmatprep.subr.mxu0 0.0
      %2667 = vmatpush1.msra.mxu0 0.0
      %2668 = vmatprep.subr.mxu0 0.0
      %2669 = vmatpush1.msra.mxu0 0.0
      %2670 = vmatprep.subr.mxu0 0.0
      %2671 = vmatpush1.msra.mxu0 0.0
      %2672 = vmatprep.subr.mxu0 0.0
      %2673 = vmatpush1.msra.mxu0 0.0
      %2674 = vmatprep.subr.mxu0 0.0
      %2675 = vmatpush1.msra.mxu0 0.0
      %2676 = vmatprep.subr.mxu0 0.0
      %2677 = vmatpush1.msra.mxu0 0.0
      %2678 = vmatprep.subr.mxu0 0.0
      %2679 = vmatpush1.msra.mxu0 0.0
      %2680 = vmatprep.subr.mxu0 0.0
      %2681 = vmatpush1.msra.mxu0 0.0
      %2682 = vmatprep.subr.mxu0 0.0
      %2683 = vmatpush1.msra.mxu0 0.0
      %2684 = vmatprep.subr.mxu0 0.0
      %2685 = vmatpush1.msra.mxu0 0.0
      %2686 = vmatprep.subr.mxu0 0.0
      %2687 = vmatpush1.msra.mxu0 0.0
      %2688 = vmatprep.subr.mxu0 0.0
      %2689 = vmatpush1.msra.mxu0 0.0
      %2690 = vmatprep.subr.mxu0 0.0
      %2691 = vmatpush1.msra.mxu0 0.0
      %2692 = vmatprep.subr.mxu0 0.0
      %2693 = vmatpush1.msra.mxu0 0.0
      %2694 = vmatprep.subr.mxu0 0.0
      %2695 = vmatpush1.msra.mxu0 0.0
      %2696 = vmatprep.subr.mxu0 0.0
      %2697 = vmatpush1.msra.mxu0 0.0
      %2698 = vmatprep.subr.mxu0 0.0
      %2699 = vmatpush1.msra.mxu0 0.0
      %2700 = vmatprep.subr.mxu0 0.0
      %2701 = vmatpush1.msra.mxu0 0.0
      %2702 = vmatprep.subr.mxu0 0.0
      %2703 = vmatpush1.msra.mxu0 0.0
      %2704 = vmatprep.subr.mxu0 0.0
      %2705 = vmatpush1.msra.mxu0 0.0
      %2706 = vmatprep.subr.mxu0 0.0
      %2707 = vmatpush1.msra.mxu0 0.0
      %2708 = vmatprep.subr.mxu0 0.0
      %2709 = vmatpush1.msra.mxu0 0.0
      %2710 = vmatprep.mubr.f32.mxu0 0.0
      %2711 = vmatmul.mubr.f32.gmra.mrb[0].mxu0 %v1180
      %v2712 = vpop.f32.mrb[0].mxu0
      %v2713 = vadd.f32 %v2644, %v2712
      %v2714 = vpop.f32.mrb[0].mxu0
      %2715 = vdwg.mxu0
      %v2716 = vmul.f32 %v2713, 0.35355338
      %s2717 = scalar_lea.vmem %s942, 96
      %v2718 = vld [vmem:[%s2717] sm:$0xff]
      %v2719 = vld [vmem:[%s2717 + $0x8] sm:$0xff]
      %v2720 = vld [vmem:[%s2717 + $0x10] sm:$0xff]
      %v2721 = vld [vmem:[%s2717 + $0x18] sm:$0xff]
      %s2722 = scalar_lea.vmem %s946, 3
      %v2723 = vld [vmem:[%s2722] sm:$0x1]
      %v2725 = vlaneseq
      %v2726 = vshrl.u32 %v2725, 7
      %v2727 = vsub.s32 0, %v2726
      %v2728 = vrot.slane %v2723, %v2727
      %2730 = vmatprep.subr.mxu0 0.0
      %2731 = vmatpush1.msra.mxu0 %v2718
      %2732 = vmatprep.subr.mxu0 0.0
      %2733 = vmatpush1.msra.mxu0 %v2719
      %2734 = vmatprep.subr.mxu0 0.0
      %2735 = vmatpush1.msra.mxu0 %v2720
      %2736 = vmatprep.subr.mxu0 0.0
      %2737 = vmatpush1.msra.mxu0 %v2721
      %2738 = vmatprep.subr.mxu0 0.0
      %2739 = vmatpush1.msra.mxu0 0.0
      %2740 = vmatprep.subr.mxu0 0.0
      %2741 = vmatpush1.msra.mxu0 0.0
      %2742 = vmatprep.subr.mxu0 0.0
      %2743 = vmatpush1.msra.mxu0 0.0
      %2744 = vmatprep.subr.mxu0 0.0
      %2745 = vmatpush1.msra.mxu0 0.0
      %2746 = vmatprep.subr.mxu0 0.0
      %2747 = vmatpush1.msra.mxu0 0.0
      %2748 = vmatprep.subr.mxu0 0.0
      %2749 = vmatpush1.msra.mxu0 0.0
      %2750 = vmatprep.subr.mxu0 0.0
      %2751 = vmatpush1.msra.mxu0 0.0
      %2752 = vmatprep.subr.mxu0 0.0
      %2753 = vmatpush1.msra.mxu0 0.0
      %2754 = vmatprep.subr.mxu0 0.0
      %2755 = vmatpush1.msra.mxu0 0.0
      %2756 = vmatprep.subr.mxu0 0.0
      %2757 = vmatpush1.msra.mxu0 0.0
      %2758 = vmatprep.subr.mxu0 0.0
      %2759 = vmatpush1.msra.mxu0 0.0
      %2760 = vmatprep.subr.mxu0 0.0
      %2761 = vmatpush1.msra.mxu0 0.0
      %2762 = vmatprep.subr.mxu0 0.0
      %2763 = vmatpush1.msra.mxu0 0.0
      %2764 = vmatprep.subr.mxu0 0.0
      %2765 = vmatpush1.msra.mxu0 0.0
      %2766 = vmatprep.subr.mxu0 0.0
      %2767 = vmatpush1.msra.mxu0 0.0
      %2768 = vmatprep.subr.mxu0 0.0
      %2769 = vmatpush1.msra.mxu0 0.0
      %2770 = vmatprep.subr.mxu0 0.0
      %2771 = vmatpush1.msra.mxu0 0.0
      %2772 = vmatprep.subr.mxu0 0.0
      %2773 = vmatpush1.msra.mxu0 0.0
      %2774 = vmatprep.subr.mxu0 0.0
      %2775 = vmatpush1.msra.mxu0 0.0
      %2776 = vmatprep.subr.mxu0 0.0
      %2777 = vmatpush1.msra.mxu0 0.0
      %2778 = vmatprep.subr.mxu0 0.0
      %2779 = vmatpush1.msra.mxu0 0.0
      %2780 = vmatprep.subr.mxu0 0.0
      %2781 = vmatpush1.msra.mxu0 0.0
      %2782 = vmatprep.subr.mxu0 0.0
      %2783 = vmatpush1.msra.mxu0 0.0
      %2784 = vmatprep.subr.mxu0 0.0
      %2785 = vmatpush1.msra.mxu0 0.0
      %2786 = vmatprep.subr.mxu0 0.0
      %2787 = vmatpush1.msra.mxu0 0.0
      %2788 = vmatprep.subr.mxu0 0.0
      %2789 = vmatpush1.msra.mxu0 0.0
      %2790 = vmatprep.subr.mxu0 0.0
      %2791 = vmatpush1.msra.mxu0 0.0
      %2792 = vmatprep.subr.mxu0 0.0
      %2793 = vmatpush1.msra.mxu0 0.0
      %2794 = vmatprep.mubr.f32.mxu0 0.0
      %2795 = vmatmul.mubr.f32.gmra.mrb[0].mxu0 %v1180
      %v2796 = vpop.f32.mrb[0].mxu0
      %v2797 = vadd.f32 %v2728, %v2796
      %v2798 = vpop.f32.mrb[0].mxu0
      %2799 = vdwg.mxu0
      %s2800 = scalar_lea.vmem %s951, 96
      %v2801 = vld [vmem:[%s2800] sm:$0xff]
      %v2802 = vld [vmem:[%s2800 + $0x8] sm:$0xff]
      %v2803 = vld [vmem:[%s2800 + $0x10] sm:$0xff]
      %v2804 = vld [vmem:[%s2800 + $0x18] sm:$0xff]
      %s2805 = scalar_lea.vmem %s955, 3
      %v2806 = vld [vmem:[%s2805] sm:$0x1]
      %v2808 = vlaneseq
      %v2809 = vshrl.u32 %v2808, 7
      %v2810 = vsub.s32 0, %v2809
      %v2811 = vrot.slane %v2806, %v2810
      %2813 = vmatprep.subr.mxu0 0.0
      %2814 = vmatpush1.msra.mxu0 %v2801
      %2815 = vmatprep.subr.mxu0 0.0
      %2816 = vmatpush1.msra.mxu0 %v2802
      %2817 = vmatprep.subr.mxu0 0.0
      %2818 = vmatpush1.msra.mxu0 %v2803
      %2819 = vmatprep.subr.mxu0 0.0
      %2820 = vmatpush1.msra.mxu0 %v2804
      %2821 = vmatprep.subr.mxu0 0.0
      %2822 = vmatpush1.msra.mxu0 0.0
      %2823 = vmatprep.subr.mxu0 0.0
      %2824 = vmatpush1.msra.mxu0 0.0
      %2825 = vmatprep.subr.mxu0 0.0
      %2826 = vmatpush1.msra.mxu0 0.0
      %2827 = vmatprep.subr.mxu0 0.0
      %2828 = vmatpush1.msra.mxu0 0.0
      %2829 = vmatprep.subr.mxu0 0.0
      %2830 = vmatpush1.msra.mxu0 0.0
      %2831 = vmatprep.subr.mxu0 0.0
      %2832 = vmatpush1.msra.mxu0 0.0
      %2833 = vmatprep.subr.mxu0 0.0
      %2834 = vmatpush1.msra.mxu0 0.0
      %2835 = vmatprep.subr.mxu0 0.0
      %2836 = vmatpush1.msra.mxu0 0.0
      %2837 = vmatprep.subr.mxu0 0.0
      %2838 = vmatpush1.msra.mxu0 0.0
      %2839 = vmatprep.subr.mxu0 0.0
      %2840 = vmatpush1.msra.mxu0 0.0
      %2841 = vmatprep.subr.mxu0 0.0
      %2842 = vmatpush1.msra.mxu0 0.0
      %2843 = vmatprep.subr.mxu0 0.0
      %2844 = vmatpush1.msra.mxu0 0.0
      %2845 = vmatprep.subr.mxu0 0.0
      %2846 = vmatpush1.msra.mxu0 0.0
      %2847 = vmatprep.subr.mxu0 0.0
      %2848 = vmatpush1.msra.mxu0 0.0
      %2849 = vmatprep.subr.mxu0 0.0
      %2850 = vmatpush1.msra.mxu0 0.0
      %2851 = vmatprep.subr.mxu0 0.0
      %2852 = vmatpush1.msra.mxu0 0.0
      %2853 = vmatprep.subr.mxu0 0.0
      %2854 = vmatpush1.msra.mxu0 0.0
      %2855 = vmatprep.subr.mxu0 0.0
      %2856 = vmatpush1.msra.mxu0 0.0
      %2857 = vmatprep.subr.mxu0 0.0
      %2858 = vmatpush1.msra.mxu0 0.0
      %2859 = vmatprep.subr.mxu0 0.0
      %2860 = vmatpush1.msra.mxu0 0.0
      %2861 = vmatprep.subr.mxu0 0.0
      %2862 = vmatpush1.msra.mxu0 0.0
      %2863 = vmatprep.subr.mxu0 0.0
      %2864 = vmatpush1.msra.mxu0 0.0
      %2865 = vmatprep.subr.mxu0 0.0
      %2866 = vmatpush1.msra.mxu0 0.0
      %2867 = vmatprep.subr.mxu0 0.0
      %2868 = vmatpush1.msra.mxu0 0.0
      %2869 = vmatprep.subr.mxu0 0.0
      %2870 = vmatpush1.msra.mxu0 0.0
      %2871 = vmatprep.subr.mxu0 0.0
      %2872 = vmatpush1.msra.mxu0 0.0
      %2873 = vmatprep.subr.mxu0 0.0
      %2874 = vmatpush1.msra.mxu0 0.0
      %2875 = vmatprep.subr.mxu0 0.0
      %2876 = vmatpush1.msra.mxu0 0.0
      %2877 = vmatprep.mubr.f32.mxu0 0.0
      %2878 = vmatmul.mubr.f32.gmra.mrb[0].mxu0 %v1180
      %v2879 = vpop.f32.mrb[0].mxu0
      %v2880 = vadd.f32 %v2811, %v2879
      %v2881 = vpop.f32.mrb[0].mxu0
      %2882 = vdwg.mxu0
      %v2884 = vsel %vm1415, %v2716, 0
      %v2887 = vsel %vm1415, %v2797, 0
      %2889 = vmatprep.subr.mxu0 0.0
      %2890 = vmatpush1.xpose.msra.mxu0 %v2887
      %2891 = vmatprep.subr.mxu0 0.0
      %2892 = vmatpush1.xpose.msra.mxu0 0.0
      %2893 = vmatprep.subr.mxu0 0.0
      %2894 = vmatpush1.xpose.msra.mxu0 0.0
      %2895 = vmatprep.subr.mxu0 0.0
      %2896 = vmatpush1.xpose.msra.mxu0 0.0
      %2897 = vmatprep.subr.mxu0 0.0
      %2898 = vmatpush1.xpose.msra.mxu0 0.0
      %2899 = vmatprep.subr.mxu0 0.0
      %2900 = vmatpush1.xpose.msra.mxu0 0.0
      %2901 = vmatprep.subr.mxu0 0.0
      %2902 = vmatpush1.xpose.msra.mxu0 0.0
      %2903 = vmatprep.subr.mxu0 0.0
      %2904 = vmatpush1.xpose.msra.mxu0 0.0
      %2905 = vmatprep.subr.mxu0 0.0
      %2906 = vmatpush1.xpose.msra.mxu0 0.0
      %2907 = vmatprep.subr.mxu0 0.0
      %2908 = vmatpush1.xpose.msra.mxu0 0.0
      %2909 = vmatprep.subr.mxu0 0.0
      %2910 = vmatpush1.xpose.msra.mxu0 0.0
      %2911 = vmatprep.subr.mxu0 0.0
      %2912 = vmatpush1.xpose.msra.mxu0 0.0
      %2913 = vmatprep.subr.mxu0 0.0
      %2914 = vmatpush1.xpose.msra.mxu0 0.0
      %2915 = vmatprep.subr.mxu0 0.0
      %2916 = vmatpush1.xpose.msra.mxu0 0.0
      %2917 = vmatprep.subr.mxu0 0.0
      %2918 = vmatpush1.xpose.msra.mxu0 0.0
      %2919 = vmatprep.subr.mxu0 0.0
      %2920 = vmatpush1.xpose.msra.mxu0 0.0
      %2921 = vmatprep.subr.mxu0 0.0
      %2922 = vmatpush1.xpose.msra.mxu0 0.0
      %2923 = vmatprep.subr.mxu0 0.0
      %2924 = vmatpush1.xpose.msra.mxu0 0.0
      %2925 = vmatprep.subr.mxu0 0.0
      %2926 = vmatpush1.xpose.msra.mxu0 0.0
      %2927 = vmatprep.subr.mxu0 0.0
      %2928 = vmatpush1.xpose.msra.mxu0 0.0
      %2929 = vmatprep.subr.mxu0 0.0
      %2930 = vmatpush1.xpose.msra.mxu0 0.0
      %2931 = vmatprep.subr.mxu0 0.0
      %2932 = vmatpush1.xpose.msra.mxu0 0.0
      %2933 = vmatprep.subr.mxu0 0.0
      %2934 = vmatpush1.xpose.msra.mxu0 0.0
      %2935 = vmatprep.subr.mxu0 0.0
      %2936 = vmatpush1.xpose.msra.mxu0 0.0
      %2937 = vmatprep.subr.mxu0 0.0
      %2938 = vmatpush1.xpose.msra.mxu0 0.0
      %2939 = vmatprep.subr.mxu0 0.0
      %2940 = vmatpush1.xpose.msra.mxu0 0.0
      %2941 = vmatprep.subr.mxu0 0.0
      %2942 = vmatpush1.xpose.msra.mxu0 0.0
      %2943 = vmatprep.subr.mxu0 0.0
      %2944 = vmatpush1.xpose.msra.mxu0 0.0
      %2945 = vmatprep.subr.mxu0 0.0
      %2946 = vmatpush1.xpose.msra.mxu0 0.0
      %2947 = vmatprep.subr.mxu0 0.0
      %2948 = vmatpush1.xpose.msra.mxu0 0.0
      %2949 = vmatprep.subr.mxu0 0.0
      %2950 = vmatpush1.xpose.msra.mxu0 0.0
      %2951 = vmatprep.subr.mxu0 0.0
      %2952 = vmatpush1.xpose.msra.mxu0 0.0
      %2953 = vmatprep.mubr.f32.mxu0 0.0
      %2954 = vmatmul.mubr.f32.gmra.mrb[0].mxu0 %v2884
      %v2955 = vpop.f32.mrb[0].mxu0
      %v2956 = vadd.f32 0.0, %v2955
      %v2957 = vpop.f32.mrb[0].mxu0
      %2958 = vdwg.mxu0
      %v2959 = vsel %vm1492, %v2956, -inf
      %2960 = vmax.xlane.f32.xlu0 %v2959
      %v2961 = vpop.xlane.xlu0 %2960
      %v2962 = vsub.f32 %v2956, %v2961
      %v2963 = vmul.f32 %v2962, 1.442695
      %v2964 = vpow.pop %v2963
      %v2965 = vsel %vm1492, %v2964, 0.0
      %2966 = vadd.xlane.f32.xlu0 %v2965
      %v2967 = vpop.xlane.xlu0 %2966
      %v2968 = vrcp.pop %v2967
      %v2969 = vmul.f32 %v2964, %v2968
      %v2971 = vsel %vm1504, %v2969, 0
      %v2974 = vsel %vm1508, %v2880, 0
      %2976 = vmatprep.subr.mxu0 0.0
      %2977 = vmatpush1.msra.mxu0 %v2974
      %2978 = vmatprep.subr.mxu0 0.0
      %2979 = vmatpush1.msra.mxu0 0.0
      %2980 = vmatprep.subr.mxu0 0.0
      %2981 = vmatpush1.msra.mxu0 0.0
      %2982 = vmatprep.subr.mxu0 0.0
      %2983 = vmatpush1.msra.mxu0 0.0
      %2984 = vmatprep.subr.mxu0 0.0
      %2985 = vmatpush1.msra.mxu0 0.0
      %2986 = vmatprep.subr.mxu0 0.0
      %2987 = vmatpush1.msra.mxu0 0.0
      %2988 = vmatprep.subr.mxu0 0.0
      %2989 = vmatpush1.msra.mxu0 0.0
      %2990 = vmatprep.subr.mxu0 0.0
      %2991 = vmatpush1.msra.mxu0 0.0
      %2992 = vmatprep.subr.mxu0 0.0
      %2993 = vmatpush1.msra.mxu0 0.0
      %2994 = vmatprep.subr.mxu0 0.0
      %2995 = vmatpush1.msra.mxu0 0.0
      %2996 = vmatprep.subr.mxu0 0.0
      %2997 = vmatpush1.msra.mxu0 0.0
      %2998 = vmatprep.subr.mxu0 0.0
      %2999 = vmatpush1.msra.mxu0 0.0
      %3000 = vmatprep.subr.mxu0 0.0
      %3001 = vmatpush1.msra.mxu0 0.0
      %3002 = vmatprep.subr.mxu0 0.0
      %3003 = vmatpush1.msra.mxu0 0.0
      %3004 = vmatprep.subr.mxu0 0.0
      %3005 = vmatpush1.msra.mxu0 0.0
      %3006 = vmatprep.subr.mxu0 0.0
      %3007 = vmatpush1.msra.mxu0 0.0
      %3008 = vmatprep.subr.mxu0 0.0
      %3009 = vmatpush1.msra.mxu0 0.0
      %3010 = vmatprep.subr.mxu0 0.0
      %3011 = vmatpush1.msra.mxu0 0.0
      %3012 = vmatprep.subr.mxu0 0.0
      %3013 = vmatpush1.msra.mxu0 0.0
      %3014 = vmatprep.subr.mxu0 0.0
      %3015 = vmatpush1.msra.mxu0 0.0
      %3016 = vmatprep.subr.mxu0 0.0
      %3017 = vmatpush1.msra.mxu0 0.0
      %3018 = vmatprep.subr.mxu0 0.0
      %3019 = vmatpush1.msra.mxu0 0.0
      %3020 = vmatprep.subr.mxu0 0.0
      %3021 = vmatpush1.msra.mxu0 0.0
      %3022 = vmatprep.subr.mxu0 0.0
      %3023 = vmatpush1.msra.mxu0 0.0
      %3024 = vmatprep.subr.mxu0 0.0
      %3025 = vmatpush1.msra.mxu0 0.0
      %3026 = vmatprep.subr.mxu0 0.0
      %3027 = vmatpush1.msra.mxu0 0.0
      %3028 = vmatprep.subr.mxu0 0.0
      %3029 = vmatpush1.msra.mxu0 0.0
      %3030 = vmatprep.subr.mxu0 0.0
      %3031 = vmatpush1.msra.mxu0 0.0
      %3032 = vmatprep.subr.mxu0 0.0
      %3033 = vmatpush1.msra.mxu0 0.0
      %3034 = vmatprep.subr.mxu0 0.0
      %3035 = vmatpush1.msra.mxu0 0.0
      %3036 = vmatprep.subr.mxu0 0.0
      %3037 = vmatpush1.msra.mxu0 0.0
      %3038 = vmatprep.subr.mxu0 0.0
      %3039 = vmatpush1.msra.mxu0 0.0
      %3040 = vmatprep.mubr.f32.mxu0 0.0
      %3041 = vmatmul.mubr.f32.gmra.mrb[0].mxu0 %v2971
      %v3042 = vpop.f32.mrb[0].mxu0
      %v3043 = vadd.f32 0.0, %v3042
      %v3044 = vpop.f32.mrb[0].mxu0
      %3045 = vdwg.mxu0
      %s3046 = scalar_lea.vmem %s960, 24
      %v3047 = vld [vmem:[%s3046] sm:$0xff]
      %v3049 = vsel %vm1415, %v3043, 0
      %3051 = vmatprep.subr.mxu0 0.0
      %3052 = vmatpush1.msra.mxu0 %v3047
      %3053 = vmatprep.subr.mxu0 0.0
      %3054 = vmatpush1.msra.mxu0 0.0
      %3055 = vmatprep.subr.mxu0 0.0
      %3056 = vmatpush1.msra.mxu0 0.0
      %3057 = vmatprep.subr.mxu0 0.0
      %3058 = vmatpush1.msra.mxu0 0.0
      %3059 = vmatprep.subr.mxu0 0.0
      %3060 = vmatpush1.msra.mxu0 0.0
      %3061 = vmatprep.subr.mxu0 0.0
      %3062 = vmatpush1.msra.mxu0 0.0
      %3063 = vmatprep.subr.mxu0 0.0
      %3064 = vmatpush1.msra.mxu0 0.0
      %3065 = vmatprep.subr.mxu0 0.0
      %3066 = vmatpush1.msra.mxu0 0.0
      %3067 = vmatprep.subr.mxu0 0.0
      %3068 = vmatpush1.msra.mxu0 0.0
      %3069 = vmatprep.subr.mxu0 0.0
      %3070 = vmatpush1.msra.mxu0 0.0
      %3071 = vmatprep.subr.mxu0 0.0
      %3072 = vmatpush1.msra.mxu0 0.0
      %3073 = vmatprep.subr.mxu0 0.0
      %3074 = vmatpush1.msra.mxu0 0.0
      %3075 = vmatprep.subr.mxu0 0.0
      %3076 = vmatpush1.msra.mxu0 0.0
      %3077 = vmatprep.subr.mxu0 0.0
      %3078 = vmatpush1.msra.mxu0 0.0
      %3079 = vmatprep.subr.mxu0 0.0
      %3080 = vmatpush1.msra.mxu0 0.0
      %3081 = vmatprep.subr.mxu0 0.0
      %3082 = vmatpush1.msra.mxu0 0.0
      %3083 = vmatprep.subr.mxu0 0.0
      %3084 = vmatpush1.msra.mxu0 0.0
      %3085 = vmatprep.subr.mxu0 0.0
      %3086 = vmatpush1.msra.mxu0 0.0
      %3087 = vmatprep.subr.mxu0 0.0
      %3088 = vmatpush1.msra.mxu0 0.0
      %3089 = vmatprep.subr.mxu0 0.0
      %3090 = vmatpush1.msra.mxu0 0.0
      %3091 = vmatprep.subr.mxu0 0.0
      %3092 = vmatpush1.msra.mxu0 0.0
      %3093 = vmatprep.subr.mxu0 0.0
      %3094 = vmatpush1.msra.mxu0 0.0
      %3095 = vmatprep.subr.mxu0 0.0
      %3096 = vmatpush1.msra.mxu0 0.0
      %3097 = vmatprep.subr.mxu0 0.0
      %3098 = vmatpush1.msra.mxu0 0.0
      %3099 = vmatprep.subr.mxu0 0.0
      %3100 = vmatpush1.msra.mxu0 0.0
      %3101 = vmatprep.subr.mxu0 0.0
      %3102 = vmatpush1.msra.mxu0 0.0
      %3103 = vmatprep.subr.mxu0 0.0
      %3104 = vmatpush1.msra.mxu0 0.0
      %3105 = vmatprep.subr.mxu0 0.0
      %3106 = vmatpush1.msra.mxu0 0.0
      %3107 = vmatprep.subr.mxu0 0.0
      %3108 = vmatpush1.msra.mxu0 0.0
      %3109 = vmatprep.subr.mxu0 0.0
      %3110 = vmatpush1.msra.mxu0 0.0
      %3111 = vmatprep.subr.mxu0 0.0
      %3112 = vmatpush1.msra.mxu0 0.0
      %3113 = vmatprep.subr.mxu0 0.0
      %3114 = vmatpush1.msra.mxu0 0.0
      %3115 = vmatprep.mubr.f32.mxu0 0.0
      %3116 = vmatmul.mubr.f32.gmra.mrb[0].mxu0 %v3049
      %v3117 = vpop.f32.mrb[0].mxu0
      %v3118 = vadd.f32 0.0, %v3117
      %v3119 = vpop.f32.mrb[0].mxu0
      %3120 = vdwg.mxu0
      %v3121 = vadd.f32 %v2632, %v3118
      %v3122 = vadd.f32 %v1135, %v3121
      %v3123 = vld [vmem:[%s963] sm:$0x1]
      %v3125 = vlaneseq
      %v3126 = vshrl.u32 %v3125, 7
      %v3127 = vsub.s32 0, %v3126
      %v3128 = vrot.slane %v3123, %v3127
      %v3130 = vadd.f32 %v3122, %v3128
      %v3131 = vld [vmem:[%s966] sm:$0x1]
      %v3132 = vld [vmem:[%s969] sm:$0x1]
      %v3133 = vsel %vm1138, %v3130, 0.0
      %3134 = vadd.xlane.f32.xlu0 %v3133
      %v3135 = vpop.xlane.xlu0 %3134
      %v3136 = vmul.f32 %v3135, %v1142
      %v3137 = vsub.f32 %v3130, %v3136
      %v3138 = vmul.f32 %v3137, %v3137
      %v3139 = vsel %vm1138, %v3138, 0.0
      %3140 = vadd.xlane.f32.xlu0 %v3139
      %v3141 = vpop.xlane.xlu0 %3140
      %v3142 = vmul.f32 %v3141, %v1142
      %v3143 = vadd.f32 %v3142, 1e-05
      %v3144 = vrsqrt.pop %v3143
      %v3145 = vmul.f32 %v3137, %v3144
      %v3147 = vlaneseq
      %v3148 = vshrl.u32 %v3147, 7
      %v3149 = vsub.s32 0, %v3148
      %v3150 = vrot.slane %v3131, %v3149
      %v3152 = vmul.f32 %v3145, %v3150
      %v3154 = vlaneseq
      %v3155 = vshrl.u32 %v3154, 7
      %v3156 = vsub.s32 0, %v3155
      %v3157 = vrot.slane %v3132, %v3156
      %v3159 = vadd.f32 %v3152, %v3157
      %v3160 = vld [vmem:[%s974] sm:$0xff]
      %v3161 = vld [vmem:[%s974 + $0x8] sm:$0xff]
      %v3162 = vld [vmem:[%s974 + $0x10] sm:$0xff]
      %v3163 = vld [vmem:[%s974 + $0x18] sm:$0xff]
      %v3164 = vld [vmem:[%s977] sm:$0x1]
      %v3166 = vlaneseq
      %v3167 = vshrl.u32 %v3166, 7
      %v3168 = vsub.s32 0, %v3167
      %v3169 = vrot.slane %v3164, %v3168
      %v3172 = vsel %vm1178, %v3159, 0
      %3174 = vmatprep.subr.mxu0 0.0
      %3175 = vmatpush1.msra.mxu0 %v3160
      %3176 = vmatprep.subr.mxu0 0.0
      %3177 = vmatpush1.msra.mxu0 %v3161
      %3178 = vmatprep.subr.mxu0 0.0
      %3179 = vmatpush1.msra.mxu0 %v3162
      %3180 = vmatprep.subr.mxu0 0.0
      %3181 = vmatpush1.msra.mxu0 %v3163
      %3182 = vmatprep.subr.mxu0 0.0
      %3183 = vmatpush1.msra.mxu0 0.0
      %3184 = vmatprep.subr.mxu0 0.0
      %3185 = vmatpush1.msra.mxu0 0.0
      %3186 = vmatprep.subr.mxu0 0.0
      %3187 = vmatpush1.msra.mxu0 0.0
      %3188 = vmatprep.subr.mxu0 0.0
      %3189 = vmatpush1.msra.mxu0 0.0
      %3190 = vmatprep.subr.mxu0 0.0
      %3191 = vmatpush1.msra.mxu0 0.0
      %3192 = vmatprep.subr.mxu0 0.0
      %3193 = vmatpush1.msra.mxu0 0.0
      %3194 = vmatprep.subr.mxu0 0.0
      %3195 = vmatpush1.msra.mxu0 0.0
      %3196 = vmatprep.subr.mxu0 0.0
      %3197 = vmatpush1.msra.mxu0 0.0
      %3198 = vmatprep.subr.mxu0 0.0
      %3199 = vmatpush1.msra.mxu0 0.0
      %3200 = vmatprep.subr.mxu0 0.0
      %3201 = vmatpush1.msra.mxu0 0.0
      %3202 = vmatprep.subr.mxu0 0.0
      %3203 = vmatpush1.msra.mxu0 0.0
      %3204 = vmatprep.subr.mxu0 0.0
      %3205 = vmatpush1.msra.mxu0 0.0
      %3206 = vmatprep.subr.mxu0 0.0
      %3207 = vmatpush1.msra.mxu0 0.0
      %3208 = vmatprep.subr.mxu0 0.0
      %3209 = vmatpush1.msra.mxu0 0.0
      %3210 = vmatprep.subr.mxu0 0.0
      %3211 = vmatpush1.msra.mxu0 0.0
      %3212 = vmatprep.subr.mxu0 0.0
      %3213 = vmatpush1.msra.mxu0 0.0
      %3214 = vmatprep.subr.mxu0 0.0
      %3215 = vmatpush1.msra.mxu0 0.0
      %3216 = vmatprep.subr.mxu0 0.0
      %3217 = vmatpush1.msra.mxu0 0.0
      %3218 = vmatprep.subr.mxu0 0.0
      %3219 = vmatpush1.msra.mxu0 0.0
      %3220 = vmatprep.subr.mxu0 0.0
      %3221 = vmatpush1.msra.mxu0 0.0
      %3222 = vmatprep.subr.mxu0 0.0
      %3223 = vmatpush1.msra.mxu0 0.0
      %3224 = vmatprep.subr.mxu0 0.0
      %3225 = vmatpush1.msra.mxu0 0.0
      %3226 = vmatprep.subr.mxu0 0.0
      %3227 = vmatpush1.msra.mxu0 0.0
      %3228 = vmatprep.subr.mxu0 0.0
      %3229 = vmatpush1.msra.mxu0 0.0
      %3230 = vmatprep.subr.mxu0 0.0
      %3231 = vmatpush1.msra.mxu0 0.0
      %3232 = vmatprep.subr.mxu0 0.0
      %3233 = vmatpush1.msra.mxu0 0.0
      %3234 = vmatprep.subr.mxu0 0.0
      %3235 = vmatpush1.msra.mxu0 0.0
      %3236 = vmatprep.subr.mxu0 0.0
      %3237 = vmatpush1.msra.mxu0 0.0
      %3238 = vmatprep.mubr.f32.mxu0 0.0
      %3239 = vmatmul.mubr.f32.gmra.mrb[0].mxu0 %v3172
      %v3240 = vpop.f32.mrb[0].mxu0
      %v3241 = vadd.f32 %v3169, %v3240
      %v3242 = vpop.f32.mrb[0].mxu0
      %3243 = vdwg.mxu0
      %v3244 = vmul.f32 %v3241, 1.702
      %v3245 = vxor.u32 %v3244, 2147483648
      %v3246 = vmul.f32 %v3245, 1.442695
      %v3247 = vpow.pop %v3246
      %v3248 = vadd.f32 %v3247, 1.0
      %v3249 = vrcp.pop %v3248
      %v3250 = vmul.f32 1.0, %v3249
      %v3251 = vmul.f32 %v3241, %v3250
      %v3252 = vld [vmem:[%s982] sm:$0xff]
      %v3253 = vld [vmem:[%s982 + $0x8] sm:$0xff]
      %v3254 = vld [vmem:[%s982 + $0x10] sm:$0xff]
      %v3255 = vld [vmem:[%s982 + $0x18] sm:$0xff]
      %v3256 = vld [vmem:[%s982 + $0x20] sm:$0xff]
      %v3257 = vld [vmem:[%s982 + $0x28] sm:$0xff]
      %v3258 = vld [vmem:[%s982 + $0x30] sm:$0xff]
      %v3259 = vld [vmem:[%s982 + $0x38] sm:$0xff]
      %v3260 = vld [vmem:[%s985] sm:$0x1]
      %v3262 = vlaneseq
      %v3263 = vshrl.u32 %v3262, 7
      %v3264 = vsub.s32 0, %v3263
      %v3265 = vrot.slane %v3260, %v3264
      %vm3267 = vcmask 523264
      %v3269 = vsel %vm3267, %v3251, 0
      %3271 = vmatprep.subr.mxu0 0.0
      %3272 = vmatpush1.msra.mxu0 %v3252
      %3273 = vmatprep.subr.mxu0 0.0
      %3274 = vmatpush1.msra.mxu0 %v3253
      %3275 = vmatprep.subr.mxu0 0.0
      %3276 = vmatpush1.msra.mxu0 %v3254
      %3277 = vmatprep.subr.mxu0 0.0
      %3278 = vmatpush1.msra.mxu0 %v3255
      %3279 = vmatprep.subr.mxu0 0.0
      %3280 = vmatpush1.msra.mxu0 %v3256
      %3281 = vmatprep.subr.mxu0 0.0
      %3282 = vmatpush1.msra.mxu0 %v3257
      %3283 = vmatprep.subr.mxu0 0.0
      %3284 = vmatpush1.msra.mxu0 %v3258
      %3285 = vmatprep.subr.mxu0 0.0
      %3286 = vmatpush1.msra.mxu0 %v3259
      %3287 = vmatprep.subr.mxu0 0.0
      %3288 = vmatpush1.msra.mxu0 0.0
      %3289 = vmatprep.subr.mxu0 0.0
      %3290 = vmatpush1.msra.mxu0 0.0
      %3291 = vmatprep.subr.mxu0 0.0
      %3292 = vmatpush1.msra.mxu0 0.0
      %3293 = vmatprep.subr.mxu0 0.0
      %3294 = vmatpush1.msra.mxu0 0.0
      %3295 = vmatprep.subr.mxu0 0.0
      %3296 = vmatpush1.msra.mxu0 0.0
      %3297 = vmatprep.subr.mxu0 0.0
      %3298 = vmatpush1.msra.mxu0 0.0
      %3299 = vmatprep.subr.mxu0 0.0
      %3300 = vmatpush1.msra.mxu0 0.0
      %3301 = vmatprep.subr.mxu0 0.0
      %3302 = vmatpush1.msra.mxu0 0.0
      %3303 = vmatprep.subr.mxu0 0.0
      %3304 = vmatpush1.msra.mxu0 0.0
      %3305 = vmatprep.subr.mxu0 0.0
      %3306 = vmatpush1.msra.mxu0 0.0
      %3307 = vmatprep.subr.mxu0 0.0
      %3308 = vmatpush1.msra.mxu0 0.0
      %3309 = vmatprep.subr.mxu0 0.0
      %3310 = vmatpush1.msra.mxu0 0.0
      %3311 = vmatprep.subr.mxu0 0.0
      %3312 = vmatpush1.msra.mxu0 0.0
      %3313 = vmatprep.subr.mxu0 0.0
      %3314 = vmatpush1.msra.mxu0 0.0
      %3315 = vmatprep.subr.mxu0 0.0
      %3316 = vmatpush1.msra.mxu0 0.0
      %3317 = vmatprep.subr.mxu0 0.0
      %3318 = vmatpush1.msra.mxu0 0.0
      %3319 = vmatprep.subr.mxu0 0.0
      %3320 = vmatpush1.msra.mxu0 0.0
      %3321 = vmatprep.subr.mxu0 0.0
      %3322 = vmatpush1.msra.mxu0 0.0
      %3323 = vmatprep.subr.mxu0 0.0
      %3324 = vmatpush1.msra.mxu0 0.0
      %3325 = vmatprep.subr.mxu0 0.0
      %3326 = vmatpush1.msra.mxu0 0.0
      %3327 = vmatprep.subr.mxu0 0.0
      %3328 = vmatpush1.msra.mxu0 0.0
      %3329 = vmatprep.subr.mxu0 0.0
      %3330 = vmatpush1.msra.mxu0 0.0
      %3331 = vmatprep.subr.mxu0 0.0
      %3332 = vmatpush1.msra.mxu0 0.0
      %3333 = vmatprep.subr.mxu0 0.0
      %3334 = vmatpush1.msra.mxu0 0.0
      %3335 = vmatprep.mubr.f32.mxu0 0.0
      %3336 = vmatmul.mubr.f32.gmra.mrb[0].mxu0 %v3269
      %v3337 = vpop.f32.mrb[0].mxu0
      %v3338 = vadd.f32 %v3265, %v3337
      %v3339 = vpop.f32.mrb[0].mxu0
      %3340 = vdwg.mxu0
      %v3341 = vadd.f32 %v3130, %v3338
      %3342 = vst.msk [vmem:[#allocation2] sm:$0x1f] %vm1138, %v3341
      %p3343 = scmp.eq.s32.totalorder %s39, 1
      // Predicated region
      $region117: #{tpu_custom_call.1} parent=111 // pred_check
        %p3344 = pneg %p3343
      $region118: #{tpu_custom_call.1} parent=111 // pred_check_branch
        %3346 = sbr.rel (%p3344) target = $region120
      $region119: #{tpu_custom_call.1} parent=111 // pred_region
        %3347 = vst.msk [vmem:[%s989] sm:$0x1f] %vm1138, %v3341
      $region120: #{tpu_custom_call.1} parent=111 // pred_fallthru
        _
      %p3348 = scmp.lt.s32.totalorder %s38, 1
      %s3349 = scalar_select %p3348, %s38, 1
      %s3350 = smul.addr %s3349, 8
      %s3351 = scalar_lea.vmem %s23, %s3350
      // Predicated region
      $region121: #{tpu_custom_call.1} parent=111 // pred_check
        %p3352 = pneg %p632
      $region122: #{tpu_custom_call.1} parent=111 // pred_check_branch
        %3354 = sbr.rel (%p3352) target = $region124
      $region123: #{tpu_custom_call.1} parent=111 // pred_region
        _
      $region124: #{tpu_custom_call.1} parent=111 // pred_fallthru
        _
    $region112: #{tpu_custom_call.1} parent=5 // pred_fallthru
      _
    %p3355 = scmp.le.s32.totalorder 2, %s29
    // Predicated region
    $region125: #{tpu_custom_call.1} parent=5 // pred_check
      %p3356 = pneg %p3355
    $region126: #{tpu_custom_call.1} parent=5 // pred_check_branch
      %3358 = sbr.rel (%p3356) target = $region128
    $region127: #{tpu_custom_call.1} parent=5 // pred_region
      %s3359 = ssub.s32 %s29, 2
      // Predicated region
      $region129: #{tpu_custom_call.1} parent=127 // pred_check
        %p3360 = pneg %p638
      $region130: #{tpu_custom_call.1} parent=127 // pred_check_branch
        %3362 = sbr.rel (%p3360) target = $region132
      $region131: #{tpu_custom_call.1} parent=127 // pred_region
        %p3363 = scmp.lt.s32.totalorder %s40, 1
        %s3364 = scalar_select %p3363, %s40, 1
        %s3365 = smul.addr %s3364, 8
        %s3366 = scalar_lea.vmem %s23, %s3365
      $region132: #{tpu_custom_call.1} parent=127 // pred_fallthru
        _
    $region128: #{tpu_custom_call.1} parent=5 // pred_fallthru
      _
  $region6: #{tpu_custom_call.1} parent=0 // loop_footer
    %s33 = sadd.s32 1, %s29
  $region7: #{tpu_custom_call.1} parent=0 // loop_footer_branch
    %28 = sbr.rel target = $region3
  $region8: #{tpu_custom_call.1} parent=0 // loop_exit
    _

</llo_original>
